<compile_context>
chip_gen: v7x
topology: tpu7x:2x2x1
jax: 0.10.0
libtpu: 0.0.40
codegen_flags: <defaults>
</compile_context>

<pallas_src>
import math

import jax
import jax.numpy as jnp
from jax.experimental import pallas as pl
from jax.experimental.pallas import tpu as pltpu


def _pe3d_kernel(coords_ref, g_ref, out_ref):
    """One tile of rows.

    coords_ref : (tile_n, 3)   pre-scaled coords: 2*pi*(2*(idx+0.5)/extent - 1)
    g_ref      : (8, 2F)       rows 0..2 = [G | G]; row 3 = [0...0 | pi/2...pi/2];
                               rows 4..7 zero padding (clean (8,128) sublane tile)
    out_ref    : (tile_n, 2F)  sin(proj + phase) == [sin(proj) | cos(proj)]
    """
    c = coords_ref[...]            # (tile_n, 3)
    g = g_ref[...]                 # (8, 2F)
    # Rank-3 projection + phase bias, lane-dense over the full 2F width.
    # Exact f32 on the VPU; K=3 is far too small to need the MXU and the VPU
    # slots are idle once the single-sin fix removes the EUP over-subscription.
    proj = (c[:, 0:1] * g[0:1, :]
            + c[:, 1:2] * g[1:2, :]
            + c[:, 2:3] * g[2:3, :]
            + g[3:4, :])           # (tile_n, 2F)
    # Single lane-dense transcendental: sin(x + pi/2) == cos(x), so one full
    # width sin replaces the previous half-lane sin + cos + concat.
    out_ref[...] = jnp.sin(proj)


def _pick_tile_n(n, tile_n=None):
    """Row-tile size.

    Large tiles amortize the ~0.35 us/grid-step overhead (default 8192 rows ->
    4 MiB f32 output block, 8 MiB double-buffered).  The 16384 cap keeps the
    double-buffered (out + coords) footprint safely inside v7x's 32 MiB
    scoped-VMEM default (64 MiB physical).  For small N the tile shrinks so the
    grid keeps >= 2 tiles and the "parallel" axis can shard across v7x's two
    TensorCores.
    """
    if tile_n is None:
        if n <= 256:
            return max(1, n)            # single exact block (== full array dims)
        tile_n = 8192
        while tile_n > 256 and n <= tile_n:
            tile_n //= 2
    return max(8, (min(int(tile_n), 16384) // 8) * 8)


def position_embedding_random_3d(gaussian_matrix, size, *, tile_n=None):
    """JAX/Pallas equivalent of PositionEmbeddingRandom3D.forward(size).

    gaussian_matrix : (3, num_pos_feats) float32
    size            : (d, h, w) static ints
    returns         : (d, h, w, 2*num_pos_feats) float32
    """
    d, h, w = (int(s) for s in size)
    num_pos_feats = gaussian_matrix.shape[1]
    two_f = 2 * num_pos_feats
    n = d * h * w
    tile_n = _pick_tile_n(n, tile_n)
    grid_len = pl.cdiv(n, tile_n)
    n_pad = grid_len * tile_n

    two_pi = 2.0 * math.pi
    # (idx + 0.5)/extent -> [-1, 1] -> * 2*pi, folded once per axis on the tiny
    # per-axis vectors (so the kernel never multiplies full tiles by 2*pi).
    zc = two_pi * (2.0 * (jnp.arange(d, dtype=jnp.float32) + 0.5) / d - 1.0)
    yc = two_pi * (2.0 * (jnp.arange(h, dtype=jnp.float32) + 0.5) / h - 1.0)
    xc = two_pi * (2.0 * (jnp.arange(w, dtype=jnp.float32) + 0.5) / w - 1.0)
    coords = jnp.stack(
        [jnp.broadcast_to(zc[:, None, None], (d, h, w)),
         jnp.broadcast_to(yc[None, :, None], (d, h, w)),
         jnp.broadcast_to(xc[None, None, :], (d, h, w))],
        axis=-1,
    ).reshape(n, 3)
    if n_pad != n:
        # Only the small (N, 3) side input is padded to a tile multiple; the
        # (N, 2F) output is emitted at its exact shape and the partial last
        # block's writeback is masked by Pallas, so there is no post-kernel
        # out[:n] slice copy (which re-read + re-wrote the whole output).
        coords = jnp.pad(coords, ((0, n_pad - n), (0, 0)))

    g = gaussian_matrix.astype(jnp.float32)              # (3, F)
    # Duplicate gaussian columns to the full 2F width and add a +pi/2 phase row
    # for the cos half; rows 4..7 are zero padding for a clean (8,128) tile.
    g2 = jnp.concatenate([g, g], axis=-1)                # (3, 2F)
    phase = jnp.concatenate(
        [jnp.zeros((1, num_pos_feats), jnp.float32),
         jnp.full((1, num_pos_feats), 0.5 * math.pi, jnp.float32)], axis=-1)
    g_pad = jnp.concatenate(
        [g2, phase, jnp.zeros((4, two_f), jnp.float32)], axis=0)   # (8, 2F)

    # With the default num_pos_feats=64, 2F=128 keeps the output store
    # lane-dense.  For other F the block stays legal (last dim == full array
    # dim); pad F up to a multiple of 64 if lane-dense stores matter.
    out_flat = pl.pallas_call(
        _pe3d_kernel,
        out_shape=jax.ShapeDtypeStruct((n, two_f), jnp.float32),
        grid_spec=pltpu.PrefetchScalarGridSpec(
            num_scalar_prefetch=0,
            grid=(grid_len,),
            in_specs=[
                pl.BlockSpec((tile_n, 3), lambda i: (i, 0)),
                pl.BlockSpec((8, two_f), lambda i: (0, 0)),
            ],
            out_specs=pl.BlockSpec((tile_n, two_f), lambda i: (i, 0)),
        ),
        compiler_params=pltpu.CompilerParams(
            dimension_semantics=("parallel",),
        ),
    )(coords, g_pad)

    # Row-major (n, 2F) -> (d, h, w, 2F) reshape is a free metadata op.
    return out_flat.reshape(d, h, w, two_f)


def _reference_pe3d(gaussian_matrix, size):
    """Pure-JAX reference mirroring the PyTorch module, for verification."""
    d, h, w = size
    grid = jnp.ones((d, h, w), dtype=jnp.float32)
    z_embed = (jnp.cumsum(grid, axis=0) - 0.5) / d
    y_embed = (jnp.cumsum(grid, axis=1) - 0.5) / h
    x_embed = (jnp.cumsum(grid, axis=2) - 0.5) / w
    coords = jnp.stack([z_embed, y_embed, x_embed], axis=-1)
    coords = 2.0 * coords - 1.0
    gm = gaussian_matrix.astype(jnp.float32)
    # Exact-f32 rank-3 projection (elementwise, so the reference itself is not
    # perturbed by TPU default-precision bf16 matmul passes).
    proj = (coords[..., 0:1] * gm[0]
            + coords[..., 1:2] * gm[1]
            + coords[..., 2:3] * gm[2])
    proj = 2.0 * math.pi * proj
    return jnp.concatenate([jnp.sin(proj), jnp.cos(proj)], axis=-1)


if __name__ == "__main__":
    num_pos_feats = 64
    scale = 1.0

    key = jax.random.PRNGKey(0)
    # Deterministic init of the registered buffer: scale * randn((3, num_pos_feats))
    gaussian_matrix = scale * jax.random.normal(
        key, (3, num_pos_feats), dtype=jnp.float32
    )

    # Tolerance: exact-f32 math everywhere; only the folded 2*pi reassociation
    # and the sin(x + pi/2) == cos(x) phase fold differ from the reference
    # (few-ulp argument error at |arg| up to ~2*pi*sum|g|).
    tol = 2e-4

    # Case 1: tile-aligned grid (N = 512 -> two 256-row tiles, parallel axis).
    d, h, w = 4, 8, 16
    pe = jax.block_until_ready(
        position_embedding_random_3d(gaussian_matrix, (d, h, w)))
    ref = _reference_pe3d(gaussian_matrix, (d, h, w))
    assert pe.shape == (d, h, w, 2 * num_pos_feats)
    assert jnp.max(jnp.abs(pe - ref)) < tol, "mismatch vs reference (case 1)"

    # Case 2: non-divisible grid (N = 273 -> 256-row tile + masked partial
    # last block, no post-kernel slice copy).
    d2, h2, w2 = 3, 7, 13
    pe2 = jax.block_until_ready(
        position_embedding_random_3d(gaussian_matrix, (d2, h2, w2)))
    ref2 = _reference_pe3d(gaussian_matrix, (d2, h2, w2))
    assert pe2.shape == (d2, h2, w2, 2 * num_pos_feats)
    assert jnp.max(jnp.abs(pe2 - ref2)) < tol, "mismatch vs reference (case 2)"

    print("KERNEL_OK")
</pallas_src>

<mosaic_0001>
module attributes {stable_mosaic.version = 11 : i64} {
  func.func @_pe3d_kernel(%arg0: i32, %arg1: memref<256x3xf32, #tpu.memory_space<vmem>>, %arg2: memref<8x128xf32, #tpu.memory_space<vmem>>, %arg3: memref<256x128xf32, #tpu.memory_space<vmem>>) attributes {dimension_semantics = [#tpu.dimension_semantics<parallel>], iteration_bounds = array<i64: 2>, scalar_prefetch = 0 : i64, scratch_operands = 0 : i64, tpu.core_type = #tpu.core_type<tc>, window_params = [{transform_indices = @transform_0, window_bounds = array<i64: 256, 3>}, {pipeline_mode = #tpu.pipeline_mode<synchronous>, transform_indices = @transform_1, window_bounds = array<i64: 8, 128>}, {transform_indices = @transform_2, window_bounds = array<i64: 256, 128>}]} {
    %c0 = arith.constant 0 : index
    %c0_0 = arith.constant 0 : index
    %0 = vector.load %arg1[%c0, %c0_0] : memref<256x3xf32, #tpu.memory_space<vmem>>, vector<256x3xf32>
    %c0_1 = arith.constant 0 : index
    %c0_2 = arith.constant 0 : index
    %1 = vector.load %arg2[%c0_1, %c0_2] : memref<8x128xf32, #tpu.memory_space<vmem>>, vector<8x128xf32>
    %2 = vector.extract_strided_slice %0 {offsets = [0, 0], sizes = [256, 1], strides = [1, 1]} : vector<256x3xf32> to vector<256x1xf32>
    %3 = vector.extract_strided_slice %1 {offsets = [0, 0], sizes = [1, 128], strides = [1, 1]} : vector<8x128xf32> to vector<1x128xf32>
    %4 = vector.broadcast %2 : vector<256x1xf32> to vector<256x128xf32>
    %5 = vector.broadcast %3 : vector<1x128xf32> to vector<256x128xf32>
    %6 = arith.mulf %4, %5 : vector<256x128xf32>
    %7 = vector.extract_strided_slice %0 {offsets = [0, 1], sizes = [256, 1], strides = [1, 1]} : vector<256x3xf32> to vector<256x1xf32>
    %8 = vector.extract_strided_slice %1 {offsets = [1, 0], sizes = [1, 128], strides = [1, 1]} : vector<8x128xf32> to vector<1x128xf32>
    %9 = vector.broadcast %7 : vector<256x1xf32> to vector<256x128xf32>
    %10 = vector.broadcast %8 : vector<1x128xf32> to vector<256x128xf32>
    %11 = arith.mulf %9, %10 : vector<256x128xf32>
    %12 = arith.addf %6, %11 : vector<256x128xf32>
    %13 = vector.extract_strided_slice %0 {offsets = [0, 2], sizes = [256, 1], strides = [1, 1]} : vector<256x3xf32> to vector<256x1xf32>
    %14 = vector.extract_strided_slice %1 {offsets = [2, 0], sizes = [1, 128], strides = [1, 1]} : vector<8x128xf32> to vector<1x128xf32>
    %15 = vector.broadcast %13 : vector<256x1xf32> to vector<256x128xf32>
    %16 = vector.broadcast %14 : vector<1x128xf32> to vector<256x128xf32>
    %17 = arith.mulf %15, %16 : vector<256x128xf32>
    %18 = arith.addf %12, %17 : vector<256x128xf32>
    %19 = vector.extract_strided_slice %1 {offsets = [3, 0], sizes = [1, 128], strides = [1, 1]} : vector<8x128xf32> to vector<1x128xf32>
    %20 = vector.broadcast %19 : vector<1x128xf32> to vector<256x128xf32>
    %21 = arith.addf %18, %20 : vector<256x128xf32>
    %22 = math.sin %21 : vector<256x128xf32>
    %c0_3 = arith.constant 0 : index
    %c0_4 = arith.constant 0 : index
    %23 = vector.load %arg3[%c0_3, %c0_4] : memref<256x128xf32, #tpu.memory_space<vmem>>, vector<256x128xf32>
    tpu.vector_store %arg3[%c0_3, %c0_4], %22 {strides = array<i32>} : memref<256x128xf32, #tpu.memory_space<vmem>>, vector<256x128xf32>,
    return
  }
  func.func @transform_0(%arg0: i32) -> (i32, i32) {
    %c0_i32 = arith.constant 0 : i32
    %c0_i32_0 = arith.constant 0 : i32
    return %arg0, %c0_i32 : i32, i32
  }
  func.func @transform_1(%arg0: i32) -> (i32, i32) {
    %c0_i32 = arith.constant 0 : i32
    %c0_i32_0 = arith.constant 0 : i32
    %c0_i32_1 = arith.constant 0 : i32
    return %c0_i32, %c0_i32_0 : i32, i32
  }
  func.func @transform_2(%arg0: i32) -> (i32, i32) {
    %c0_i32 = arith.constant 0 : i32
    %c0_i32_0 = arith.constant 0 : i32
    return %arg0, %c0_i32 : i32, i32
  }
}

</mosaic_0001>

<llo_original>
// kernel: tpu_custom_call.1
$region0: #{tpu_custom_call.1}
  #allocation0 [shape = 'u32[]', space=smem, size = 0x4, offset = 0x4, fixed_abs, tag = 'smem constant byte address 0x4 - core index']
  #allocation1 [shape = 'u32[144,128]{1,0:T(1,128)}', space=vmem, size = 0x12000, scoped, tag = 'internal scratch']
  %s0 = inlined_call_operand.vmem [shape: f32[512,3], index: 0, kind: input, shape index: {}]
  %s1 = inlined_call_operand.vmem [shape: f32[8,128], index: 1, kind: input, shape index: {}]
  %s2 = inlined_call_operand.hbm [shape: f32[512,128], index: 2, kind: output, shape index: {}]
  %s3 = sld [smem:[#allocation0]]
  $region41: #{tpu_custom_call.1} parent=0
    _
  %s5 = ssub.s32 1, %s3
  %s6 = scalar_select 0, %s5, %s3
  $region1: #{tpu_custom_call.1} parent=0
    #allocation2 [shape = 'u8[262144]{0}', space=vmem, size = 0x40000, scoped, tag = 'output window, operand 0']
    #allocation3 [shape = 's32[2]{0}', space=sflag, size = 0x8, scoped, tag = 'scoped memory for tpu_custom_call.1']
    %7 = vsyncpa [#allocation3], 0
    %s8 = scalar_lea.sflag [#allocation3], 1
    %9 = vsyncpa %s8, 0
    loop: start=0, step=1, limit=4
    $region2: #{tpu_custom_call.1} parent=1 // loop_pre_header
      _
    $region3: #{tpu_custom_call.1} parent=1 // loop_header
      %s11 = sphi 0, %s15
      %p12 = scmp.ge.s32.totalorder %s11, 4
      %s21 = sphi 0, %s23
      %s24 = sphi 0, %s21
      %s25 = sphi 0, %s24
      %s41 = sphi 0, %s25
      %s45 = sphi 0, %s45
      %s47 = sphi 0, %s45
      %s48 = sphi 0, %s47
      %s62 = sphi 0, %s48
      %s68 = sphi 0, %s70
      %s71 = sphi 0, %s68
      %s72 = sphi 0, %s71
      %s88 = sphi 0, %s72
    $region4: #{tpu_custom_call.1} parent=1 // loop_header_branch
      %14 = sbr.rel (%p12) target = $region8
    $region5: #{tpu_custom_call.1} parent=1 // loop_body
      %s16 = ssub.s32 %s11, 1
      %s17 = ssub.s32 %s11, 2
      %s18 = sadd.s32 %s11, 1
      %s19 = ssub.s32 %s11, %s18
      %p20 = scmp.eq.s32.totalorder %s19, 0
      %s22 = sadd.s32 %s21, 1
      %s23 = scalar_select %p20, %s21, %s22
      %p26 = pneg %p20
      %p27 = scmp.eq.s32.totalorder %s11, 1
      %p28 = por %p26, %p27
      %p29 = scmp.ne.s32.totalorder %s21, %s24
      %p30 = scmp.eq.s32.totalorder %s11, 0
      %p31 = por %p29, %p30
      %p32 = scmp.ne.s32.totalorder %s21, %s24
      %p33 = scmp.eq.s32.totalorder %s16, 1
      %p34 = por %p32, %p33
      %p35 = scmp.ne.s32.totalorder %s24, %s25
      %p36 = scmp.eq.s32.totalorder %s16, 0
      %p37 = por %p35, %p36
      %p38 = scmp.ne.s32.totalorder %s24, %s25
      %p39 = scmp.eq.s32.totalorder %s17, 1
      %p40 = por %p38, %p39
      %p42 = scmp.ne.s32.totalorder %s25, %s41
      %p43 = scmp.eq.s32.totalorder %s17, 0
      %p44 = por %p42, %p43
      %s46 = sadd.s32 %s45, 1
      %p49 = scmp.eq.s32.totalorder %s11, 1
      %p50 = scmp.ne.s32.totalorder %s45, %s47
      %p51 = scmp.eq.s32.totalorder %s11, 0
      %p52 = por %p50, %p51
      %p53 = scmp.ne.s32.totalorder %s45, %s47
      %p54 = scmp.eq.s32.totalorder %s16, 1
      %p55 = por %p53, %p54
      %p56 = scmp.ne.s32.totalorder %s47, %s48
      %p57 = scmp.eq.s32.totalorder %s16, 0
      %p58 = por %p56, %p57
      %p59 = scmp.ne.s32.totalorder %s47, %s48
      %p60 = scmp.eq.s32.totalorder %s17, 1
      %p61 = por %p59, %p60
      %p63 = scmp.ne.s32.totalorder %s48, %s62
      %p64 = scmp.eq.s32.totalorder %s17, 0
      %p65 = por %p63, %p64
      %s66 = ssub.s32 %s11, %s18
      %p67 = scmp.eq.s32.totalorder %s66, 0
      %s69 = sadd.s32 %s68, 1
      %s70 = scalar_select %p67, %s68, %s69
      %p73 = pneg %p67
      %p74 = scmp.eq.s32.totalorder %s11, 1
      %p75 = por %p73, %p74
      %p76 = scmp.ne.s32.totalorder %s68, %s71
      %p77 = scmp.eq.s32.totalorder %s11, 0
      %p78 = por %p76, %p77
      %p79 = scmp.ne.s32.totalorder %s68, %s71
      %p80 = scmp.eq.s32.totalorder %s16, 1
      %p81 = por %p79, %p80
      %p82 = scmp.ne.s32.totalorder %s71, %s72
      %p83 = scmp.eq.s32.totalorder %s16, 0
      %p84 = por %p82, %p83
      %p85 = scmp.ne.s32.totalorder %s71, %s72
      %p86 = scmp.eq.s32.totalorder %s17, 1
      %p87 = por %p85, %p86
      %p89 = scmp.ne.s32.totalorder %s72, %s88
      %p90 = scmp.eq.s32.totalorder %s17, 0
      %p91 = por %p89, %p90
      %p92 = scmp.le.s32.totalorder 1, %s11
      %p93 = scmp.lt.s32.totalorder %s11, 3
      %p94 = pnand %p92, %p93
      %p95 = pneg %p94
      // Predicated region
      $region9: #{tpu_custom_call.1} parent=5 // pred_check
        _
      $region10: #{tpu_custom_call.1} parent=5 // pred_check_branch
        %97 = sbr.rel (%p94) target = $region12
      $region11: #{tpu_custom_call.1} parent=5 // pred_region
        %s98 = ssub.s32 %s11, 1
        // Predicated region
        $region13: #{tpu_custom_call.1} parent=11 // pred_check
          %p99 = pneg %p58
        $region14: #{tpu_custom_call.1} parent=11 // pred_check_branch
          %101 = sbr.rel (%p99) target = $region16
        $region15: #{tpu_custom_call.1} parent=11 // pred_region
          _
        $region16: #{tpu_custom_call.1} parent=11 // pred_fallthru
          _
      $region12: #{tpu_custom_call.1} parent=5 // pred_fallthru
        _
      %p102 = scmp.lt.s32.totalorder %s11, 2
      // Predicated region
      $region17: #{tpu_custom_call.1} parent=5 // pred_check
        %p103 = pneg %p102
      $region18: #{tpu_custom_call.1} parent=5 // pred_check_branch
        %105 = sbr.rel (%p103) target = $region20
      $region19: #{tpu_custom_call.1} parent=5 // pred_region
        // Predicated region
        $region21: #{tpu_custom_call.1} parent=19 // pred_check
          %p106 = pneg %p31
        $region22: #{tpu_custom_call.1} parent=19 // pred_check_branch
          %108 = sbr.rel (%p106) target = $region24
        $region23: #{tpu_custom_call.1} parent=19 // pred_region
          %s109 = smul.u32 32, %s11
          %p110 = scmp.lt.s32.totalorder %s109, 63
          %s111 = scalar_select %p110, %s109, 63
          %s112 = smul.addr %s111, 8
          %s113 = scalar_lea.vmem %s0, %s112
          %s114 = smul.u32 32, %s11
        $region24: #{tpu_custom_call.1} parent=19 // pred_fallthru
          _
      $region20: #{tpu_custom_call.1} parent=5 // pred_fallthru
        _
      %p115 = scmp.le.s32.totalorder 1, %s11
      %p116 = scmp.lt.s32.totalorder %s11, 3
      %p117 = pnand %p115, %p116
      %p118 = pneg %p117
      // Predicated region
      $region25: #{tpu_custom_call.1} parent=5 // pred_check
        _
      $region26: #{tpu_custom_call.1} parent=5 // pred_check_branch
        %120 = sbr.rel (%p117) target = $region28
      $region27: #{tpu_custom_call.1} parent=5 // pred_region
        %s121 = ssub.s32 %s11, 1
        %s122 = smul.u32 32, %s16
        %p123 = scmp.lt.s32.totalorder %s122, 63
        %s124 = scalar_select %p123, %s122, 63
        %s125 = smul.addr %s124, 8
        %s126 = scalar_lea.vmem %s0, %s125
        %p127 = pneg %p37
        %p128 = pneg %p34
        %p129 = pneg %p58
        %p130 = pneg %p55
        %p131 = pneg %p84
        %p132 = pneg %p81
        %s133 = sand.u32 %s71, 1
        %s134 = scalar_lea.sflag [#allocation3], %s133
        %s135 = sand.u32 %s71, 1
        %s136 = smul.addr %s135, 256
        %s137 = scalar_lea.vmem [#allocation2], %s136
        %s138 = smul.u32 32, %s16
        %p139 = scmp.lt.s32.totalorder %s138, 63
        %s140 = scalar_select %p139, %s138, 63
        %s141 = smul.addr %s140, 8
        %s142 = scalar_lea.vmem %s0, %s141
        %s143 = smul.u32 32, %s16
        %s144 = smul.u32 32, %s16
        %v145 = vld [vmem:[%s142] sm:$0xff]
        %v146 = vld [vmem:[%s142 + $0x8] sm:$0xff]
        %v147 = vld [vmem:[%s142 + $0x10] sm:$0xff]
        %v148 = vld [vmem:[%s142 + $0x18] sm:$0xff]
        %v149 = vld [vmem:[%s142 + $0x20] sm:$0xff]
        %v150 = vld [vmem:[%s142 + $0x28] sm:$0xff]
        %v151 = vld [vmem:[%s142 + $0x30] sm:$0xff]
        %v152 = vld [vmem:[%s142 + $0x38] sm:$0xff]
        %v153 = vld [vmem:[%s142 + $0x40] sm:$0xff]
        %v154 = vld [vmem:[%s142 + $0x48] sm:$0xff]
        %v155 = vld [vmem:[%s142 + $0x50] sm:$0xff]
        %v156 = vld [vmem:[%s142 + $0x58] sm:$0xff]
        %v157 = vld [vmem:[%s142 + $0x60] sm:$0xff]
        %v158 = vld [vmem:[%s142 + $0x68] sm:$0xff]
        %v159 = vld [vmem:[%s142 + $0x70] sm:$0xff]
        %v160 = vld [vmem:[%s142 + $0x78] sm:$0xff]
        %v161 = vld [vmem:[%s142 + $0x80] sm:$0xff]
        %v162 = vld [vmem:[%s142 + $0x88] sm:$0xff]
        %v163 = vld [vmem:[%s142 + $0x90] sm:$0xff]
        %v164 = vld [vmem:[%s142 + $0x98] sm:$0xff]
        %v165 = vld [vmem:[%s142 + $0xa0] sm:$0xff]
        %v166 = vld [vmem:[%s142 + $0xa8] sm:$0xff]
        %v167 = vld [vmem:[%s142 + $0xb0] sm:$0xff]
        %v168 = vld [vmem:[%s142 + $0xb8] sm:$0xff]
        %v169 = vld [vmem:[%s142 + $0xc0] sm:$0xff]
        %v170 = vld [vmem:[%s142 + $0xc8] sm:$0xff]
        %v171 = vld [vmem:[%s142 + $0xd0] sm:$0xff]
        %v172 = vld [vmem:[%s142 + $0xd8] sm:$0xff]
        %v173 = vld [vmem:[%s142 + $0xe0] sm:$0xff]
        %v174 = vld [vmem:[%s142 + $0xe8] sm:$0xff]
        %v175 = vld [vmem:[%s142 + $0xf0] sm:$0xff]
        %v176 = vld [vmem:[%s142 + $0xf8] sm:$0xff]
        %v177 = vld [vmem:[%s1] sm:$0xff]
        %179 = vset.pattern.permute.xlu0 0
        %180 = vperm.xlu0 %179, %v145
        %v181 = vpop.permute.xlu0 %180
        %184 = vset.pattern.permute.xlu0 0
        %185 = vperm.xlu0 %184, %v146
        %v186 = vpop.permute.xlu0 %185
        %189 = vset.pattern.permute.xlu0 0
        %190 = vperm.xlu0 %189, %v147
        %v191 = vpop.permute.xlu0 %190
        %194 = vset.pattern.permute.xlu0 0
        %195 = vperm.xlu0 %194, %v148
        %v196 = vpop.permute.xlu0 %195
        %199 = vset.pattern.permute.xlu0 0
        %200 = vperm.xlu0 %199, %v149
        %v201 = vpop.permute.xlu0 %200
        %204 = vset.pattern.permute.xlu0 0
        %205 = vperm.xlu0 %204, %v150
        %v206 = vpop.permute.xlu0 %205
        %209 = vset.pattern.permute.xlu0 0
        %210 = vperm.xlu0 %209, %v151
        %v211 = vpop.permute.xlu0 %210
        %214 = vset.pattern.permute.xlu0 0
        %215 = vperm.xlu0 %214, %v152
        %v216 = vpop.permute.xlu0 %215
        %219 = vset.pattern.permute.xlu0 0
        %220 = vperm.xlu0 %219, %v153
        %v221 = vpop.permute.xlu0 %220
        %224 = vset.pattern.permute.xlu0 0
        %225 = vperm.xlu0 %224, %v154
        %v226 = vpop.permute.xlu0 %225
        %229 = vset.pattern.permute.xlu0 0
        %230 = vperm.xlu0 %229, %v155
        %v231 = vpop.permute.xlu0 %230
        %234 = vset.pattern.permute.xlu0 0
        %235 = vperm.xlu0 %234, %v156
        %v236 = vpop.permute.xlu0 %235
        %239 = vset.pattern.permute.xlu0 0
        %240 = vperm.xlu0 %239, %v157
        %v241 = vpop.permute.xlu0 %240
        %244 = vset.pattern.permute.xlu0 0
        %245 = vperm.xlu0 %244, %v158
        %v246 = vpop.permute.xlu0 %245
        %249 = vset.pattern.permute.xlu0 0
        %250 = vperm.xlu0 %249, %v159
        %v251 = vpop.permute.xlu0 %250
        %254 = vset.pattern.permute.xlu0 0
        %255 = vperm.xlu0 %254, %v160
        %v256 = vpop.permute.xlu0 %255
        %259 = vset.pattern.permute.xlu0 0
        %260 = vperm.xlu0 %259, %v161
        %v261 = vpop.permute.xlu0 %260
        %264 = vset.pattern.permute.xlu0 0
        %265 = vperm.xlu0 %264, %v162
        %v266 = vpop.permute.xlu0 %265
        %269 = vset.pattern.permute.xlu0 0
        %270 = vperm.xlu0 %269, %v163
        %v271 = vpop.permute.xlu0 %270
        %274 = vset.pattern.permute.xlu0 0
        %275 = vperm.xlu0 %274, %v164
        %v276 = vpop.permute.xlu0 %275
        %279 = vset.pattern.permute.xlu0 0
        %280 = vperm.xlu0 %279, %v165
        %v281 = vpop.permute.xlu0 %280
        %284 = vset.pattern.permute.xlu0 0
        %285 = vperm.xlu0 %284, %v166
        %v286 = vpop.permute.xlu0 %285
        %289 = vset.pattern.permute.xlu0 0
        %290 = vperm.xlu0 %289, %v167
        %v291 = vpop.permute.xlu0 %290
        %294 = vset.pattern.permute.xlu0 0
        %295 = vperm.xlu0 %294, %v168
        %v296 = vpop.permute.xlu0 %295
        %299 = vset.pattern.permute.xlu0 0
        %300 = vperm.xlu0 %299, %v169
        %v301 = vpop.permute.xlu0 %300
        %304 = vset.pattern.permute.xlu0 0
        %305 = vperm.xlu0 %304, %v170
        %v306 = vpop.permute.xlu0 %305
        %309 = vset.pattern.permute.xlu0 0
        %310 = vperm.xlu0 %309, %v171
        %v311 = vpop.permute.xlu0 %310
        %314 = vset.pattern.permute.xlu0 0
        %315 = vperm.xlu0 %314, %v172
        %v316 = vpop.permute.xlu0 %315
        %319 = vset.pattern.permute.xlu0 0
        %320 = vperm.xlu0 %319, %v173
        %v321 = vpop.permute.xlu0 %320
        %324 = vset.pattern.permute.xlu0 0
        %325 = vperm.xlu0 %324, %v174
        %v326 = vpop.permute.xlu0 %325
        %329 = vset.pattern.permute.xlu0 0
        %330 = vperm.xlu0 %329, %v175
        %v331 = vpop.permute.xlu0 %330
        %334 = vset.pattern.permute.xlu0 0
        %335 = vperm.xlu0 %334, %v176
        %v336 = vpop.permute.xlu0 %335
        %v338 = vlaneseq
        %v339 = vshrl.u32 %v338, 7
        %v340 = vsub.s32 0, %v339
        %v341 = vrot.slane %v177, %v340
        %v342 = vmul.f32 %v181, %v341
        %v343 = vmul.f32 %v186, %v341
        %v344 = vmul.f32 %v191, %v341
        %v345 = vmul.f32 %v196, %v341
        %v346 = vmul.f32 %v201, %v341
        %v347 = vmul.f32 %v206, %v341
        %v348 = vmul.f32 %v211, %v341
        %v349 = vmul.f32 %v216, %v341
        %v350 = vmul.f32 %v221, %v341
        %v351 = vmul.f32 %v226, %v341
        %v352 = vmul.f32 %v231, %v341
        %v353 = vmul.f32 %v236, %v341
        %v354 = vmul.f32 %v241, %v341
        %v355 = vmul.f32 %v246, %v341
        %v356 = vmul.f32 %v251, %v341
        %v357 = vmul.f32 %v256, %v341
        %v358 = vmul.f32 %v261, %v341
        %v359 = vmul.f32 %v266, %v341
        %v360 = vmul.f32 %v271, %v341
        %v361 = vmul.f32 %v276, %v341
        %v362 = vmul.f32 %v281, %v341
        %v363 = vmul.f32 %v286, %v341
        %v364 = vmul.f32 %v291, %v341
        %v365 = vmul.f32 %v296, %v341
        %v366 = vmul.f32 %v301, %v341
        %v367 = vmul.f32 %v306, %v341
        %v368 = vmul.f32 %v311, %v341
        %v369 = vmul.f32 %v316, %v341
        %v370 = vmul.f32 %v321, %v341
        %v371 = vmul.f32 %v326, %v341
        %v372 = vmul.f32 %v331, %v341
        %v373 = vmul.f32 %v336, %v341
        %374 = vset.pattern.permute.xlu0 1
        %375 = vperm.xlu0 %374, %v145
        %v376 = vpop.permute.xlu0 %375
        %378 = vset.pattern.permute.xlu0 1
        %379 = vperm.xlu0 %378, %v146
        %v380 = vpop.permute.xlu0 %379
        %382 = vset.pattern.permute.xlu0 1
        %383 = vperm.xlu0 %382, %v147
        %v384 = vpop.permute.xlu0 %383
        %386 = vset.pattern.permute.xlu0 1
        %387 = vperm.xlu0 %386, %v148
        %v388 = vpop.permute.xlu0 %387
        %390 = vset.pattern.permute.xlu0 1
        %391 = vperm.xlu0 %390, %v149
        %v392 = vpop.permute.xlu0 %391
        %394 = vset.pattern.permute.xlu0 1
        %395 = vperm.xlu0 %394, %v150
        %v396 = vpop.permute.xlu0 %395
        %398 = vset.pattern.permute.xlu0 1
        %399 = vperm.xlu0 %398, %v151
        %v400 = vpop.permute.xlu0 %399
        %402 = vset.pattern.permute.xlu0 1
        %403 = vperm.xlu0 %402, %v152
        %v404 = vpop.permute.xlu0 %403
        %406 = vset.pattern.permute.xlu0 1
        %407 = vperm.xlu0 %406, %v153
        %v408 = vpop.permute.xlu0 %407
        %410 = vset.pattern.permute.xlu0 1
        %411 = vperm.xlu0 %410, %v154
        %v412 = vpop.permute.xlu0 %411
        %414 = vset.pattern.permute.xlu0 1
        %415 = vperm.xlu0 %414, %v155
        %v416 = vpop.permute.xlu0 %415
        %418 = vset.pattern.permute.xlu0 1
        %419 = vperm.xlu0 %418, %v156
        %v420 = vpop.permute.xlu0 %419
        %422 = vset.pattern.permute.xlu0 1
        %423 = vperm.xlu0 %422, %v157
        %v424 = vpop.permute.xlu0 %423
        %426 = vset.pattern.permute.xlu0 1
        %427 = vperm.xlu0 %426, %v158
        %v428 = vpop.permute.xlu0 %427
        %430 = vset.pattern.permute.xlu0 1
        %431 = vperm.xlu0 %430, %v159
        %v432 = vpop.permute.xlu0 %431
        %434 = vset.pattern.permute.xlu0 1
        %435 = vperm.xlu0 %434, %v160
        %v436 = vpop.permute.xlu0 %435
        %438 = vset.pattern.permute.xlu0 1
        %439 = vperm.xlu0 %438, %v161
        %v440 = vpop.permute.xlu0 %439
        %442 = vset.pattern.permute.xlu0 1
        %443 = vperm.xlu0 %442, %v162
        %v444 = vpop.permute.xlu0 %443
        %446 = vset.pattern.permute.xlu0 1
        %447 = vperm.xlu0 %446, %v163
        %v448 = vpop.permute.xlu0 %447
        %450 = vset.pattern.permute.xlu0 1
        %451 = vperm.xlu0 %450, %v164
        %v452 = vpop.permute.xlu0 %451
        %454 = vset.pattern.permute.xlu0 1
        %455 = vperm.xlu0 %454, %v165
        %v456 = vpop.permute.xlu0 %455
        %458 = vset.pattern.permute.xlu0 1
        %459 = vperm.xlu0 %458, %v166
        %v460 = vpop.permute.xlu0 %459
        %462 = vset.pattern.permute.xlu0 1
        %463 = vperm.xlu0 %462, %v167
        %v464 = vpop.permute.xlu0 %463
        %466 = vset.pattern.permute.xlu0 1
        %467 = vperm.xlu0 %466, %v168
        %v468 = vpop.permute.xlu0 %467
        %470 = vset.pattern.permute.xlu0 1
        %471 = vperm.xlu0 %470, %v169
        %v472 = vpop.permute.xlu0 %471
        %474 = vset.pattern.permute.xlu0 1
        %475 = vperm.xlu0 %474, %v170
        %v476 = vpop.permute.xlu0 %475
        %478 = vset.pattern.permute.xlu0 1
        %479 = vperm.xlu0 %478, %v171
        %v480 = vpop.permute.xlu0 %479
        %482 = vset.pattern.permute.xlu0 1
        %483 = vperm.xlu0 %482, %v172
        %v484 = vpop.permute.xlu0 %483
        %486 = vset.pattern.permute.xlu0 1
        %487 = vperm.xlu0 %486, %v173
        %v488 = vpop.permute.xlu0 %487
        %490 = vset.pattern.permute.xlu0 1
        %491 = vperm.xlu0 %490, %v174
        %v492 = vpop.permute.xlu0 %491
        %494 = vset.pattern.permute.xlu0 1
        %495 = vperm.xlu0 %494, %v175
        %v496 = vpop.permute.xlu0 %495
        %498 = vset.pattern.permute.xlu0 1
        %499 = vperm.xlu0 %498, %v176
        %v500 = vpop.permute.xlu0 %499
        %v502 = vlaneseq
        %v503 = vshrl.u32 %v502, 7
        %v504 = vsub.s32 1, %v503
        %v505 = vrot.slane %v177, %v504
        %v506 = vmul.f32 %v376, %v505
        %v507 = vmul.f32 %v380, %v505
        %v508 = vmul.f32 %v384, %v505
        %v509 = vmul.f32 %v388, %v505
        %v510 = vmul.f32 %v392, %v505
        %v511 = vmul.f32 %v396, %v505
        %v512 = vmul.f32 %v400, %v505
        %v513 = vmul.f32 %v404, %v505
        %v514 = vmul.f32 %v408, %v505
        %v515 = vmul.f32 %v412, %v505
        %v516 = vmul.f32 %v416, %v505
        %v517 = vmul.f32 %v420, %v505
        %v518 = vmul.f32 %v424, %v505
        %v519 = vmul.f32 %v428, %v505
        %v520 = vmul.f32 %v432, %v505
        %v521 = vmul.f32 %v436, %v505
        %v522 = vmul.f32 %v440, %v505
        %v523 = vmul.f32 %v444, %v505
        %v524 = vmul.f32 %v448, %v505
        %v525 = vmul.f32 %v452, %v505
        %v526 = vmul.f32 %v456, %v505
        %v527 = vmul.f32 %v460, %v505
        %v528 = vmul.f32 %v464, %v505
        %v529 = vmul.f32 %v468, %v505
        %v530 = vmul.f32 %v472, %v505
        %v531 = vmul.f32 %v476, %v505
        %v532 = vmul.f32 %v480, %v505
        %v533 = vmul.f32 %v484, %v505
        %v534 = vmul.f32 %v488, %v505
        %v535 = vmul.f32 %v492, %v505
        %v536 = vmul.f32 %v496, %v505
        %v537 = vmul.f32 %v500, %v505
        %v538 = vadd.f32 %v342, %v506
        %v539 = vadd.f32 %v343, %v507
        %v540 = vadd.f32 %v344, %v508
        %v541 = vadd.f32 %v345, %v509
        %v542 = vadd.f32 %v346, %v510
        %v543 = vadd.f32 %v347, %v511
        %v544 = vadd.f32 %v348, %v512
        %v545 = vadd.f32 %v349, %v513
        %v546 = vadd.f32 %v350, %v514
        %v547 = vadd.f32 %v351, %v515
        %v548 = vadd.f32 %v352, %v516
        %v549 = vadd.f32 %v353, %v517
        %v550 = vadd.f32 %v354, %v518
        %v551 = vadd.f32 %v355, %v519
        %v552 = vadd.f32 %v356, %v520
        %v553 = vadd.f32 %v357, %v521
        %v554 = vadd.f32 %v358, %v522
        %v555 = vadd.f32 %v359, %v523
        %v556 = vadd.f32 %v360, %v524
        %v557 = vadd.f32 %v361, %v525
        %v558 = vadd.f32 %v362, %v526
        %v559 = vadd.f32 %v363, %v527
        %v560 = vadd.f32 %v364, %v528
        %v561 = vadd.f32 %v365, %v529
        %v562 = vadd.f32 %v366, %v530
        %v563 = vadd.f32 %v367, %v531
        %v564 = vadd.f32 %v368, %v532
        %v565 = vadd.f32 %v369, %v533
        %v566 = vadd.f32 %v370, %v534
        %v567 = vadd.f32 %v371, %v535
        %v568 = vadd.f32 %v372, %v536
        %v569 = vadd.f32 %v373, %v537
        %570 = vset.pattern.permute.xlu0 2
        %571 = vperm.xlu0 %570, %v145
        %v572 = vpop.permute.xlu0 %571
        %574 = vset.pattern.permute.xlu0 2
        %575 = vperm.xlu0 %574, %v146
        %v576 = vpop.permute.xlu0 %575
        %578 = vset.pattern.permute.xlu0 2
        %579 = vperm.xlu0 %578, %v147
        %v580 = vpop.permute.xlu0 %579
        %582 = vset.pattern.permute.xlu0 2
        %583 = vperm.xlu0 %582, %v148
        %v584 = vpop.permute.xlu0 %583
        %586 = vset.pattern.permute.xlu0 2
        %587 = vperm.xlu0 %586, %v149
        %v588 = vpop.permute.xlu0 %587
        %590 = vset.pattern.permute.xlu0 2
        %591 = vperm.xlu0 %590, %v150
        %v592 = vpop.permute.xlu0 %591
        %594 = vset.pattern.permute.xlu0 2
        %595 = vperm.xlu0 %594, %v151
        %v596 = vpop.permute.xlu0 %595
        %598 = vset.pattern.permute.xlu0 2
        %599 = vperm.xlu0 %598, %v152
        %v600 = vpop.permute.xlu0 %599
        %602 = vset.pattern.permute.xlu0 2
        %603 = vperm.xlu0 %602, %v153
        %v604 = vpop.permute.xlu0 %603
        %606 = vset.pattern.permute.xlu0 2
        %607 = vperm.xlu0 %606, %v154
        %v608 = vpop.permute.xlu0 %607
        %610 = vset.pattern.permute.xlu0 2
        %611 = vperm.xlu0 %610, %v155
        %v612 = vpop.permute.xlu0 %611
        %614 = vset.pattern.permute.xlu0 2
        %615 = vperm.xlu0 %614, %v156
        %v616 = vpop.permute.xlu0 %615
        %618 = vset.pattern.permute.xlu0 2
        %619 = vperm.xlu0 %618, %v157
        %v620 = vpop.permute.xlu0 %619
        %622 = vset.pattern.permute.xlu0 2
        %623 = vperm.xlu0 %622, %v158
        %v624 = vpop.permute.xlu0 %623
        %626 = vset.pattern.permute.xlu0 2
        %627 = vperm.xlu0 %626, %v159
        %v628 = vpop.permute.xlu0 %627
        %630 = vset.pattern.permute.xlu0 2
        %631 = vperm.xlu0 %630, %v160
        %v632 = vpop.permute.xlu0 %631
        %634 = vset.pattern.permute.xlu0 2
        %635 = vperm.xlu0 %634, %v161
        %v636 = vpop.permute.xlu0 %635
        %638 = vset.pattern.permute.xlu0 2
        %639 = vperm.xlu0 %638, %v162
        %v640 = vpop.permute.xlu0 %639
        %642 = vset.pattern.permute.xlu0 2
        %643 = vperm.xlu0 %642, %v163
        %v644 = vpop.permute.xlu0 %643
        %646 = vset.pattern.permute.xlu0 2
        %647 = vperm.xlu0 %646, %v164
        %v648 = vpop.permute.xlu0 %647
        %650 = vset.pattern.permute.xlu0 2
        %651 = vperm.xlu0 %650, %v165
        %v652 = vpop.permute.xlu0 %651
        %654 = vset.pattern.permute.xlu0 2
        %655 = vperm.xlu0 %654, %v166
        %v656 = vpop.permute.xlu0 %655
        %658 = vset.pattern.permute.xlu0 2
        %659 = vperm.xlu0 %658, %v167
        %v660 = vpop.permute.xlu0 %659
        %662 = vset.pattern.permute.xlu0 2
        %663 = vperm.xlu0 %662, %v168
        %v664 = vpop.permute.xlu0 %663
        %666 = vset.pattern.permute.xlu0 2
        %667 = vperm.xlu0 %666, %v169
        %v668 = vpop.permute.xlu0 %667
        %670 = vset.pattern.permute.xlu0 2
        %671 = vperm.xlu0 %670, %v170
        %v672 = vpop.permute.xlu0 %671
        %674 = vset.pattern.permute.xlu0 2
        %675 = vperm.xlu0 %674, %v171
        %v676 = vpop.permute.xlu0 %675
        %678 = vset.pattern.permute.xlu0 2
        %679 = vperm.xlu0 %678, %v172
        %v680 = vpop.permute.xlu0 %679
        %682 = vset.pattern.permute.xlu0 2
        %683 = vperm.xlu0 %682, %v173
        %v684 = vpop.permute.xlu0 %683
        %686 = vset.pattern.permute.xlu0 2
        %687 = vperm.xlu0 %686, %v174
        %v688 = vpop.permute.xlu0 %687
        %690 = vset.pattern.permute.xlu0 2
        %691 = vperm.xlu0 %690, %v175
        %v692 = vpop.permute.xlu0 %691
        %694 = vset.pattern.permute.xlu0 2
        %695 = vperm.xlu0 %694, %v176
        %v696 = vpop.permute.xlu0 %695
        %v698 = vlaneseq
        %v699 = vshrl.u32 %v698, 7
        %v700 = vsub.s32 2, %v699
        %v701 = vrot.slane %v177, %v700
        %v702 = vmul.f32 %v572, %v701
        %v703 = vmul.f32 %v576, %v701
        %v704 = vmul.f32 %v580, %v701
        %v705 = vmul.f32 %v584, %v701
        %v706 = vmul.f32 %v588, %v701
        %v707 = vmul.f32 %v592, %v701
        %v708 = vmul.f32 %v596, %v701
        %v709 = vmul.f32 %v600, %v701
        %v710 = vmul.f32 %v604, %v701
        %v711 = vmul.f32 %v608, %v701
        %v712 = vmul.f32 %v612, %v701
        %v713 = vmul.f32 %v616, %v701
        %v714 = vmul.f32 %v620, %v701
        %v715 = vmul.f32 %v624, %v701
        %v716 = vmul.f32 %v628, %v701
        %v717 = vmul.f32 %v632, %v701
        %v718 = vmul.f32 %v636, %v701
        %v719 = vmul.f32 %v640, %v701
        %v720 = vmul.f32 %v644, %v701
        %v721 = vmul.f32 %v648, %v701
        %v722 = vmul.f32 %v652, %v701
        %v723 = vmul.f32 %v656, %v701
        %v724 = vmul.f32 %v660, %v701
        %v725 = vmul.f32 %v664, %v701
        %v726 = vmul.f32 %v668, %v701
        %v727 = vmul.f32 %v672, %v701
        %v728 = vmul.f32 %v676, %v701
        %v729 = vmul.f32 %v680, %v701
        %v730 = vmul.f32 %v684, %v701
        %v731 = vmul.f32 %v688, %v701
        %v732 = vmul.f32 %v692, %v701
        %v733 = vmul.f32 %v696, %v701
        %v734 = vadd.f32 %v538, %v702
        %v735 = vadd.f32 %v539, %v703
        %v736 = vadd.f32 %v540, %v704
        %v737 = vadd.f32 %v541, %v705
        %v738 = vadd.f32 %v542, %v706
        %v739 = vadd.f32 %v543, %v707
        %v740 = vadd.f32 %v544, %v708
        %v741 = vadd.f32 %v545, %v709
        %v742 = vadd.f32 %v546, %v710
        %v743 = vadd.f32 %v547, %v711
        %v744 = vadd.f32 %v548, %v712
        %v745 = vadd.f32 %v549, %v713
        %v746 = vadd.f32 %v550, %v714
        %v747 = vadd.f32 %v551, %v715
        %v748 = vadd.f32 %v552, %v716
        %v749 = vadd.f32 %v553, %v717
        %v750 = vadd.f32 %v554, %v718
        %v751 = vadd.f32 %v555, %v719
        %v752 = vadd.f32 %v556, %v720
        %v753 = vadd.f32 %v557, %v721
        %v754 = vadd.f32 %v558, %v722
        %v755 = vadd.f32 %v559, %v723
        %v756 = vadd.f32 %v560, %v724
        %v757 = vadd.f32 %v561, %v725
        %v758 = vadd.f32 %v562, %v726
        %v759 = vadd.f32 %v563, %v727
        %v760 = vadd.f32 %v564, %v728
        %v761 = vadd.f32 %v565, %v729
        %v762 = vadd.f32 %v566, %v730
        %v763 = vadd.f32 %v567, %v731
        %v764 = vadd.f32 %v568, %v732
        %v765 = vadd.f32 %v569, %v733
        %v766 = vlaneseq
        %v767 = vshrl.u32 %v766, 7
        %v768 = vsub.s32 3, %v767
        %v769 = vrot.slane %v177, %v768
        %v770 = vadd.f32 %v734, %v769
        %v771 = vadd.f32 %v735, %v769
        %v772 = vadd.f32 %v736, %v769
        %v773 = vadd.f32 %v737, %v769
        %v774 = vadd.f32 %v738, %v769
        %v775 = vadd.f32 %v739, %v769
        %v776 = vadd.f32 %v740, %v769
        %v777 = vadd.f32 %v741, %v769
        %v778 = vadd.f32 %v742, %v769
        %v779 = vadd.f32 %v743, %v769
        %v780 = vadd.f32 %v744, %v769
        %v781 = vadd.f32 %v745, %v769
        %v782 = vadd.f32 %v746, %v769
        %v783 = vadd.f32 %v747, %v769
        %v784 = vadd.f32 %v748, %v769
        %v785 = vadd.f32 %v749, %v769
        %v786 = vadd.f32 %v750, %v769
        %v787 = vadd.f32 %v751, %v769
        %v788 = vadd.f32 %v752, %v769
        %v789 = vadd.f32 %v753, %v769
        %v790 = vadd.f32 %v754, %v769
        %v791 = vadd.f32 %v755, %v769
        %v792 = vadd.f32 %v756, %v769
        %v793 = vadd.f32 %v757, %v769
        %v794 = vadd.f32 %v758, %v769
        %v795 = vadd.f32 %v759, %v769
        %v796 = vadd.f32 %v760, %v769
        %v797 = vadd.f32 %v761, %v769
        %v798 = vadd.f32 %v762, %v769
        %v799 = vadd.f32 %v763, %v769
        %v800 = vadd.f32 %v764, %v769
        %v801 = vadd.f32 %v765, %v769
        %v802 = vand.u32 2147483647, %v770
        %vm803 = vcmp.le.f32.partialorder %v802, 0.7853982
        %vm804 = vcmp.lt.s32.totalorder %v770, 0
        %v805 = vand.u32 %v770, 2139095040
        %v806 = vshrl.u32 %v805, 23
        %v807 = vsub.s32 %v806, 127
        %v808 = vand.u32 2147483647, %v770
        %v809 = vand.u32 %v808, 8388607
        %v810 = vor.u32 %v809, 8388608
        %v811 = vsub.s32 0, %v810
        %v812 = vadd.s32 %v807, 1
        %vm813 = vcmp.gt.s32.totalorder %v812, 0
        %v814 = vsel %vm813, %v812, 0
        %v815 = vshrl.u32 %v814, 5
        %v816 = vand.u32 %v814, 31
        %v817 = vsub.s32 32, %v816
        %v818 = vshrl.u32 683565275, %v817
        %v819 = vshll.u32 683565275, %v816
        %v820 = vshrl.u32 2475754826, %v817
        %v821 = vor.u32 %v819, %v820
        %v822 = vshll.u32 2475754826, %v816
        %v823 = vshrl.u32 2131351028, %v817
        %v824 = vor.u32 %v822, %v823
        %v825 = vshll.u32 2131351028, %v816
        %v826 = vshrl.u32 2102212464, %v817
        %v827 = vor.u32 %v825, %v826
        %v828 = vshll.u32 2102212464, %v816
        %v829 = vshrl.u32 920167782, %v817
        %v830 = vor.u32 %v828, %v829
        %v831 = vshll.u32 920167782, %v816
        %v832 = vshrl.u32 1326507024, %v817
        %v833 = vor.u32 %v831, %v832
        %vm834 = vcmp.lt.s32.totalorder %v815, 1
        %vm835 = vcmp.lt.s32.totalorder %v815, 2
        %vm836 = vcmp.lt.s32.totalorder %v815, 3
        %vm837 = vcmp.lt.s32.totalorder %v815, 4
        %v838 = vsel %vm834, %v818, %v821
        %v839 = vsel %vm837, %v827, 2102212464
        %v840 = vsel %vm836, %v824, %v839
        %v841 = vsel %vm835, %v838, %v840
        %v842 = vsel %vm834, %v821, %v824
        %v843 = vsel %vm837, %v830, 920167782
        %v844 = vsel %vm836, %v827, %v843
        %v845 = vsel %vm835, %v842, %v844
        %v846 = vsel %vm834, %v824, %v827
        %v847 = vsel %vm837, %v833, 1326507024
        %v848 = vsel %vm836, %v830, %v847
        %v849 = vsel %vm835, %v846, %v848
        %v850 = vshll.u32 %v810, 8
        %v851 = vmul.u32.u64.compose %v850, %v849
        %v852 = vextract.low.u32 %v851
        %v853 = vextract.high.u32 %v851
        %v854 = vmul.u32.u64.compose %v850, %v845
        %v855 = vextract.low.u32 %v854
        %v856 = vextract.high.u32 %v854
        %v857 = vmul.u32 %v850, %v841
        %v858 = vadd.s32 %v853, %v855
        %vm859 = vc.u32 %v853, %v855
        %v860 = vadd.s32 %v856, 1
        %v861 = vsel %vm859, %v860, %v856
        %v862 = vadd.s32 %v857, %v861
        %v863 = vadd.s32 %v862, 536870912
        %v864 = vshrl.u32 %v863, 30
        %v865 = vshll.u32 %v864, 30
        %v866 = vsub.s32 %v862, %v865
        %vm867 = vcmp.lt.s32.totalorder %v866, 0
        %v868 = vsub.s32 0, %v866
        %v869 = vsel %vm867, %v868, %v866
        %v870 = vclz %v869
        %v871 = vsub.s32 %v870, 2
        %vm872 = vcmp.gt.s32.totalorder 0, %v871
        %v873 = vsel %vm872, 0, %v871
        %v874 = vsub.s32 32, %v873
        %v875 = vshll.u32 %v866, %v873
        %v876 = vshrl.u32 %v858, %v874
        %v877 = vor.u32 %v875, %v876
        %v878 = vsub.s32 4294967266, %v873
        %v879 = vadd.s32 %v878, 127
        %v880 = vshll.u32 %v879, 23
        %v881 = vor.u32 4788187, %v880
        %v882 = vand.u32 2147483647, %v881
        %v884 = vcvt.s32.f32 %v877
        %v885 = vmul.f32 %v884, %v882
        %v886 = vxor.u32 %v885, 2147483648
        %v887 = vsel %vm804, %v886, %v885
        %v888 = vsub.s32 4, %v864
        %v889 = vsel %vm804, %v888, %v864
        %v890 = vsel %vm803, %v770, %v887
        %v891 = vsel %vm803, 0, %v889
        %v892 = vcosq.f32.pop %v890
        %v893 = vsinq.f32.pop %v890
        %vm894 = vweird.f32 %v770
        %v895 = vadd.s32 %v891, 3
        %v896 = vand.u32 %v895, 3
        %vm897 = vcmp.lt.s32.totalorder %v896, 2
        %vm898 = vcmp.eq.s32.totalorder %v896, 0
        %v899 = vxor.u32 %v893, 2147483648
        %v900 = vsel %vm898, %v892, %v899
        %vm901 = vcmp.eq.s32.totalorder %v896, 2
        %v902 = vxor.u32 %v892, 2147483648
        %v903 = vsel %vm901, %v902, %v893
        %v904 = vsel %vm897, %v900, %v903
        %v905 = vsel %vm894, nan, %v904
        %v906 = vand.u32 2147483647, %v771
        %vm907 = vcmp.le.f32.partialorder %v906, 0.7853982
        %vm908 = vcmp.lt.s32.totalorder %v771, 0
        %v909 = vand.u32 %v771, 2139095040
        %v910 = vshrl.u32 %v909, 23
        %v911 = vsub.s32 %v910, 127
        %v912 = vand.u32 2147483647, %v771
        %v913 = vand.u32 %v912, 8388607
        %v914 = vor.u32 %v913, 8388608
        %v915 = vsub.s32 0, %v914
        %v916 = vadd.s32 %v911, 1
        %vm917 = vcmp.gt.s32.totalorder %v916, 0
        %v918 = vsel %vm917, %v916, 0
        %v919 = vshrl.u32 %v918, 5
        %v920 = vand.u32 %v918, 31
        %v921 = vsub.s32 32, %v920
        %v922 = vshrl.u32 683565275, %v921
        %v923 = vshll.u32 683565275, %v920
        %v924 = vshrl.u32 2475754826, %v921
        %v925 = vor.u32 %v923, %v924
        %v926 = vshll.u32 2475754826, %v920
        %v927 = vshrl.u32 2131351028, %v921
        %v928 = vor.u32 %v926, %v927
        %v929 = vshll.u32 2131351028, %v920
        %v930 = vshrl.u32 2102212464, %v921
        %v931 = vor.u32 %v929, %v930
        %v932 = vshll.u32 2102212464, %v920
        %v933 = vshrl.u32 920167782, %v921
        %v934 = vor.u32 %v932, %v933
        %v935 = vshll.u32 920167782, %v920
        %v936 = vshrl.u32 1326507024, %v921
        %v937 = vor.u32 %v935, %v936
        %vm938 = vcmp.lt.s32.totalorder %v919, 1
        %vm939 = vcmp.lt.s32.totalorder %v919, 2
        %vm940 = vcmp.lt.s32.totalorder %v919, 3
        %vm941 = vcmp.lt.s32.totalorder %v919, 4
        %v942 = vsel %vm938, %v922, %v925
        %v943 = vsel %vm941, %v931, 2102212464
        %v944 = vsel %vm940, %v928, %v943
        %v945 = vsel %vm939, %v942, %v944
        %v946 = vsel %vm938, %v925, %v928
        %v947 = vsel %vm941, %v934, 920167782
        %v948 = vsel %vm940, %v931, %v947
        %v949 = vsel %vm939, %v946, %v948
        %v950 = vsel %vm938, %v928, %v931
        %v951 = vsel %vm941, %v937, 1326507024
        %v952 = vsel %vm940, %v934, %v951
        %v953 = vsel %vm939, %v950, %v952
        %v954 = vshll.u32 %v914, 8
        %v955 = vmul.u32.u64.compose %v954, %v953
        %v956 = vextract.low.u32 %v955
        %v957 = vextract.high.u32 %v955
        %v958 = vmul.u32.u64.compose %v954, %v949
        %v959 = vextract.low.u32 %v958
        %v960 = vextract.high.u32 %v958
        %v961 = vmul.u32 %v954, %v945
        %v962 = vadd.s32 %v957, %v959
        %vm963 = vc.u32 %v957, %v959
        %v964 = vadd.s32 %v960, 1
        %v965 = vsel %vm963, %v964, %v960
        %v966 = vadd.s32 %v961, %v965
        %v967 = vadd.s32 %v966, 536870912
        %v968 = vshrl.u32 %v967, 30
        %v969 = vshll.u32 %v968, 30
        %v970 = vsub.s32 %v966, %v969
        %vm971 = vcmp.lt.s32.totalorder %v970, 0
        %v972 = vsub.s32 0, %v970
        %v973 = vsel %vm971, %v972, %v970
        %v974 = vclz %v973
        %v975 = vsub.s32 %v974, 2
        %vm976 = vcmp.gt.s32.totalorder 0, %v975
        %v977 = vsel %vm976, 0, %v975
        %v978 = vsub.s32 32, %v977
        %v979 = vshll.u32 %v970, %v977
        %v980 = vshrl.u32 %v962, %v978
        %v981 = vor.u32 %v979, %v980
        %v982 = vsub.s32 4294967266, %v977
        %v983 = vadd.s32 %v982, 127
        %v984 = vshll.u32 %v983, 23
        %v985 = vor.u32 4788187, %v984
        %v986 = vand.u32 2147483647, %v985
        %v988 = vcvt.s32.f32 %v981
        %v989 = vmul.f32 %v988, %v986
        %v990 = vxor.u32 %v989, 2147483648
        %v991 = vsel %vm908, %v990, %v989
        %v992 = vsub.s32 4, %v968
        %v993 = vsel %vm908, %v992, %v968
        %v994 = vsel %vm907, %v771, %v991
        %v995 = vsel %vm907, 0, %v993
        %v996 = vcosq.f32.pop %v994
        %v997 = vsinq.f32.pop %v994
        %vm998 = vweird.f32 %v771
        %v999 = vadd.s32 %v995, 3
        %v1000 = vand.u32 %v999, 3
        %vm1001 = vcmp.lt.s32.totalorder %v1000, 2
        %vm1002 = vcmp.eq.s32.totalorder %v1000, 0
        %v1003 = vxor.u32 %v997, 2147483648
        %v1004 = vsel %vm1002, %v996, %v1003
        %vm1005 = vcmp.eq.s32.totalorder %v1000, 2
        %v1006 = vxor.u32 %v996, 2147483648
        %v1007 = vsel %vm1005, %v1006, %v997
        %v1008 = vsel %vm1001, %v1004, %v1007
        %v1009 = vsel %vm998, nan, %v1008
        %v1010 = vand.u32 2147483647, %v772
        %vm1011 = vcmp.le.f32.partialorder %v1010, 0.7853982
        %vm1012 = vcmp.lt.s32.totalorder %v772, 0
        %v1013 = vand.u32 %v772, 2139095040
        %v1014 = vshrl.u32 %v1013, 23
        %v1015 = vsub.s32 %v1014, 127
        %v1016 = vand.u32 2147483647, %v772
        %v1017 = vand.u32 %v1016, 8388607
        %v1018 = vor.u32 %v1017, 8388608
        %v1019 = vsub.s32 0, %v1018
        %v1020 = vadd.s32 %v1015, 1
        %vm1021 = vcmp.gt.s32.totalorder %v1020, 0
        %v1022 = vsel %vm1021, %v1020, 0
        %v1023 = vshrl.u32 %v1022, 5
        %v1024 = vand.u32 %v1022, 31
        %v1025 = vsub.s32 32, %v1024
        %v1026 = vshrl.u32 683565275, %v1025
        %v1027 = vshll.u32 683565275, %v1024
        %v1028 = vshrl.u32 2475754826, %v1025
        %v1029 = vor.u32 %v1027, %v1028
        %v1030 = vshll.u32 2475754826, %v1024
        %v1031 = vshrl.u32 2131351028, %v1025
        %v1032 = vor.u32 %v1030, %v1031
        %v1033 = vshll.u32 2131351028, %v1024
        %v1034 = vshrl.u32 2102212464, %v1025
        %v1035 = vor.u32 %v1033, %v1034
        %v1036 = vshll.u32 2102212464, %v1024
        %v1037 = vshrl.u32 920167782, %v1025
        %v1038 = vor.u32 %v1036, %v1037
        %v1039 = vshll.u32 920167782, %v1024
        %v1040 = vshrl.u32 1326507024, %v1025
        %v1041 = vor.u32 %v1039, %v1040
        %vm1042 = vcmp.lt.s32.totalorder %v1023, 1
        %vm1043 = vcmp.lt.s32.totalorder %v1023, 2
        %vm1044 = vcmp.lt.s32.totalorder %v1023, 3
        %vm1045 = vcmp.lt.s32.totalorder %v1023, 4
        %v1046 = vsel %vm1042, %v1026, %v1029
        %v1047 = vsel %vm1045, %v1035, 2102212464
        %v1048 = vsel %vm1044, %v1032, %v1047
        %v1049 = vsel %vm1043, %v1046, %v1048
        %v1050 = vsel %vm1042, %v1029, %v1032
        %v1051 = vsel %vm1045, %v1038, 920167782
        %v1052 = vsel %vm1044, %v1035, %v1051
        %v1053 = vsel %vm1043, %v1050, %v1052
        %v1054 = vsel %vm1042, %v1032, %v1035
        %v1055 = vsel %vm1045, %v1041, 1326507024
        %v1056 = vsel %vm1044, %v1038, %v1055
        %v1057 = vsel %vm1043, %v1054, %v1056
        %v1058 = vshll.u32 %v1018, 8
        %v1059 = vmul.u32.u64.compose %v1058, %v1057
        %v1060 = vextract.low.u32 %v1059
        %v1061 = vextract.high.u32 %v1059
        %v1062 = vmul.u32.u64.compose %v1058, %v1053
        %v1063 = vextract.low.u32 %v1062
        %v1064 = vextract.high.u32 %v1062
        %v1065 = vmul.u32 %v1058, %v1049
        %v1066 = vadd.s32 %v1061, %v1063
        %vm1067 = vc.u32 %v1061, %v1063
        %v1068 = vadd.s32 %v1064, 1
        %v1069 = vsel %vm1067, %v1068, %v1064
        %v1070 = vadd.s32 %v1065, %v1069
        %v1071 = vadd.s32 %v1070, 536870912
        %v1072 = vshrl.u32 %v1071, 30
        %v1073 = vshll.u32 %v1072, 30
        %v1074 = vsub.s32 %v1070, %v1073
        %vm1075 = vcmp.lt.s32.totalorder %v1074, 0
        %v1076 = vsub.s32 0, %v1074
        %v1077 = vsel %vm1075, %v1076, %v1074
        %v1078 = vclz %v1077
        %v1079 = vsub.s32 %v1078, 2
        %vm1080 = vcmp.gt.s32.totalorder 0, %v1079
        %v1081 = vsel %vm1080, 0, %v1079
        %v1082 = vsub.s32 32, %v1081
        %v1083 = vshll.u32 %v1074, %v1081
        %v1084 = vshrl.u32 %v1066, %v1082
        %v1085 = vor.u32 %v1083, %v1084
        %v1086 = vsub.s32 4294967266, %v1081
        %v1087 = vadd.s32 %v1086, 127
        %v1088 = vshll.u32 %v1087, 23
        %v1089 = vor.u32 4788187, %v1088
        %v1090 = vand.u32 2147483647, %v1089
        %v1092 = vcvt.s32.f32 %v1085
        %v1093 = vmul.f32 %v1092, %v1090
        %v1094 = vxor.u32 %v1093, 2147483648
        %v1095 = vsel %vm1012, %v1094, %v1093
        %v1096 = vsub.s32 4, %v1072
        %v1097 = vsel %vm1012, %v1096, %v1072
        %v1098 = vsel %vm1011, %v772, %v1095
        %v1099 = vsel %vm1011, 0, %v1097
        %v1100 = vcosq.f32.pop %v1098
        %v1101 = vsinq.f32.pop %v1098
        %vm1102 = vweird.f32 %v772
        %v1103 = vadd.s32 %v1099, 3
        %v1104 = vand.u32 %v1103, 3
        %vm1105 = vcmp.lt.s32.totalorder %v1104, 2
        %vm1106 = vcmp.eq.s32.totalorder %v1104, 0
        %v1107 = vxor.u32 %v1101, 2147483648
        %v1108 = vsel %vm1106, %v1100, %v1107
        %vm1109 = vcmp.eq.s32.totalorder %v1104, 2
        %v1110 = vxor.u32 %v1100, 2147483648
        %v1111 = vsel %vm1109, %v1110, %v1101
        %v1112 = vsel %vm1105, %v1108, %v1111
        %v1113 = vsel %vm1102, nan, %v1112
        %v1114 = vand.u32 2147483647, %v773
        %vm1115 = vcmp.le.f32.partialorder %v1114, 0.7853982
        %vm1116 = vcmp.lt.s32.totalorder %v773, 0
        %v1117 = vand.u32 %v773, 2139095040
        %v1118 = vshrl.u32 %v1117, 23
        %v1119 = vsub.s32 %v1118, 127
        %v1120 = vand.u32 2147483647, %v773
        %v1121 = vand.u32 %v1120, 8388607
        %v1122 = vor.u32 %v1121, 8388608
        %v1123 = vsub.s32 0, %v1122
        %v1124 = vadd.s32 %v1119, 1
        %vm1125 = vcmp.gt.s32.totalorder %v1124, 0
        %v1126 = vsel %vm1125, %v1124, 0
        %v1127 = vshrl.u32 %v1126, 5
        %v1128 = vand.u32 %v1126, 31
        %v1129 = vsub.s32 32, %v1128
        %v1130 = vshrl.u32 683565275, %v1129
        %v1131 = vshll.u32 683565275, %v1128
        %v1132 = vshrl.u32 2475754826, %v1129
        %v1133 = vor.u32 %v1131, %v1132
        %v1134 = vshll.u32 2475754826, %v1128
        %v1135 = vshrl.u32 2131351028, %v1129
        %v1136 = vor.u32 %v1134, %v1135
        %v1137 = vshll.u32 2131351028, %v1128
        %v1138 = vshrl.u32 2102212464, %v1129
        %v1139 = vor.u32 %v1137, %v1138
        %v1140 = vshll.u32 2102212464, %v1128
        %v1141 = vshrl.u32 920167782, %v1129
        %v1142 = vor.u32 %v1140, %v1141
        %v1143 = vshll.u32 920167782, %v1128
        %v1144 = vshrl.u32 1326507024, %v1129
        %v1145 = vor.u32 %v1143, %v1144
        %vm1146 = vcmp.lt.s32.totalorder %v1127, 1
        %vm1147 = vcmp.lt.s32.totalorder %v1127, 2
        %vm1148 = vcmp.lt.s32.totalorder %v1127, 3
        %vm1149 = vcmp.lt.s32.totalorder %v1127, 4
        %v1150 = vsel %vm1146, %v1130, %v1133
        %v1151 = vsel %vm1149, %v1139, 2102212464
        %v1152 = vsel %vm1148, %v1136, %v1151
        %v1153 = vsel %vm1147, %v1150, %v1152
        %v1154 = vsel %vm1146, %v1133, %v1136
        %v1155 = vsel %vm1149, %v1142, 920167782
        %v1156 = vsel %vm1148, %v1139, %v1155
        %v1157 = vsel %vm1147, %v1154, %v1156
        %v1158 = vsel %vm1146, %v1136, %v1139
        %v1159 = vsel %vm1149, %v1145, 1326507024
        %v1160 = vsel %vm1148, %v1142, %v1159
        %v1161 = vsel %vm1147, %v1158, %v1160
        %v1162 = vshll.u32 %v1122, 8
        %v1163 = vmul.u32.u64.compose %v1162, %v1161
        %v1164 = vextract.low.u32 %v1163
        %v1165 = vextract.high.u32 %v1163
        %v1166 = vmul.u32.u64.compose %v1162, %v1157
        %v1167 = vextract.low.u32 %v1166
        %v1168 = vextract.high.u32 %v1166
        %v1169 = vmul.u32 %v1162, %v1153
        %v1170 = vadd.s32 %v1165, %v1167
        %vm1171 = vc.u32 %v1165, %v1167
        %v1172 = vadd.s32 %v1168, 1
        %v1173 = vsel %vm1171, %v1172, %v1168
        %v1174 = vadd.s32 %v1169, %v1173
        %v1175 = vadd.s32 %v1174, 536870912
        %v1176 = vshrl.u32 %v1175, 30
        %v1177 = vshll.u32 %v1176, 30
        %v1178 = vsub.s32 %v1174, %v1177
        %vm1179 = vcmp.lt.s32.totalorder %v1178, 0
        %v1180 = vsub.s32 0, %v1178
        %v1181 = vsel %vm1179, %v1180, %v1178
        %v1182 = vclz %v1181
        %v1183 = vsub.s32 %v1182, 2
        %vm1184 = vcmp.gt.s32.totalorder 0, %v1183
        %v1185 = vsel %vm1184, 0, %v1183
        %v1186 = vsub.s32 32, %v1185
        %v1187 = vshll.u32 %v1178, %v1185
        %v1188 = vshrl.u32 %v1170, %v1186
        %v1189 = vor.u32 %v1187, %v1188
        %v1190 = vsub.s32 4294967266, %v1185
        %v1191 = vadd.s32 %v1190, 127
        %v1192 = vshll.u32 %v1191, 23
        %v1193 = vor.u32 4788187, %v1192
        %v1194 = vand.u32 2147483647, %v1193
        %v1196 = vcvt.s32.f32 %v1189
        %v1197 = vmul.f32 %v1196, %v1194
        %v1198 = vxor.u32 %v1197, 2147483648
        %v1199 = vsel %vm1116, %v1198, %v1197
        %v1200 = vsub.s32 4, %v1176
        %v1201 = vsel %vm1116, %v1200, %v1176
        %v1202 = vsel %vm1115, %v773, %v1199
        %v1203 = vsel %vm1115, 0, %v1201
        %v1204 = vcosq.f32.pop %v1202
        %v1205 = vsinq.f32.pop %v1202
        %vm1206 = vweird.f32 %v773
        %v1207 = vadd.s32 %v1203, 3
        %v1208 = vand.u32 %v1207, 3
        %vm1209 = vcmp.lt.s32.totalorder %v1208, 2
        %vm1210 = vcmp.eq.s32.totalorder %v1208, 0
        %v1211 = vxor.u32 %v1205, 2147483648
        %v1212 = vsel %vm1210, %v1204, %v1211
        %vm1213 = vcmp.eq.s32.totalorder %v1208, 2
        %v1214 = vxor.u32 %v1204, 2147483648
        %v1215 = vsel %vm1213, %v1214, %v1205
        %v1216 = vsel %vm1209, %v1212, %v1215
        %v1217 = vsel %vm1206, nan, %v1216
        %v1218 = vand.u32 2147483647, %v774
        %vm1219 = vcmp.le.f32.partialorder %v1218, 0.7853982
        %vm1220 = vcmp.lt.s32.totalorder %v774, 0
        %v1221 = vand.u32 %v774, 2139095040
        %v1222 = vshrl.u32 %v1221, 23
        %v1223 = vsub.s32 %v1222, 127
        %v1224 = vand.u32 2147483647, %v774
        %v1225 = vand.u32 %v1224, 8388607
        %v1226 = vor.u32 %v1225, 8388608
        %v1227 = vsub.s32 0, %v1226
        %v1228 = vadd.s32 %v1223, 1
        %vm1229 = vcmp.gt.s32.totalorder %v1228, 0
        %v1230 = vsel %vm1229, %v1228, 0
        %v1231 = vshrl.u32 %v1230, 5
        %v1232 = vand.u32 %v1230, 31
        %v1233 = vsub.s32 32, %v1232
        %v1234 = vshrl.u32 683565275, %v1233
        %v1235 = vshll.u32 683565275, %v1232
        %v1236 = vshrl.u32 2475754826, %v1233
        %v1237 = vor.u32 %v1235, %v1236
        %v1238 = vshll.u32 2475754826, %v1232
        %v1239 = vshrl.u32 2131351028, %v1233
        %v1240 = vor.u32 %v1238, %v1239
        %v1241 = vshll.u32 2131351028, %v1232
        %v1242 = vshrl.u32 2102212464, %v1233
        %v1243 = vor.u32 %v1241, %v1242
        %v1244 = vshll.u32 2102212464, %v1232
        %v1245 = vshrl.u32 920167782, %v1233
        %v1246 = vor.u32 %v1244, %v1245
        %v1247 = vshll.u32 920167782, %v1232
        %v1248 = vshrl.u32 1326507024, %v1233
        %v1249 = vor.u32 %v1247, %v1248
        %vm1250 = vcmp.lt.s32.totalorder %v1231, 1
        %vm1251 = vcmp.lt.s32.totalorder %v1231, 2
        %vm1252 = vcmp.lt.s32.totalorder %v1231, 3
        %vm1253 = vcmp.lt.s32.totalorder %v1231, 4
        %v1254 = vsel %vm1250, %v1234, %v1237
        %v1255 = vsel %vm1253, %v1243, 2102212464
        %v1256 = vsel %vm1252, %v1240, %v1255
        %v1257 = vsel %vm1251, %v1254, %v1256
        %v1258 = vsel %vm1250, %v1237, %v1240
        %v1259 = vsel %vm1253, %v1246, 920167782
        %v1260 = vsel %vm1252, %v1243, %v1259
        %v1261 = vsel %vm1251, %v1258, %v1260
        %v1262 = vsel %vm1250, %v1240, %v1243
        %v1263 = vsel %vm1253, %v1249, 1326507024
        %v1264 = vsel %vm1252, %v1246, %v1263
        %v1265 = vsel %vm1251, %v1262, %v1264
        %v1266 = vshll.u32 %v1226, 8
        %v1267 = vmul.u32.u64.compose %v1266, %v1265
        %v1268 = vextract.low.u32 %v1267
        %v1269 = vextract.high.u32 %v1267
        %v1270 = vmul.u32.u64.compose %v1266, %v1261
        %v1271 = vextract.low.u32 %v1270
        %v1272 = vextract.high.u32 %v1270
        %v1273 = vmul.u32 %v1266, %v1257
        %v1274 = vadd.s32 %v1269, %v1271
        %vm1275 = vc.u32 %v1269, %v1271
        %v1276 = vadd.s32 %v1272, 1
        %v1277 = vsel %vm1275, %v1276, %v1272
        %v1278 = vadd.s32 %v1273, %v1277
        %v1279 = vadd.s32 %v1278, 536870912
        %v1280 = vshrl.u32 %v1279, 30
        %v1281 = vshll.u32 %v1280, 30
        %v1282 = vsub.s32 %v1278, %v1281
        %vm1283 = vcmp.lt.s32.totalorder %v1282, 0
        %v1284 = vsub.s32 0, %v1282
        %v1285 = vsel %vm1283, %v1284, %v1282
        %v1286 = vclz %v1285
        %v1287 = vsub.s32 %v1286, 2
        %vm1288 = vcmp.gt.s32.totalorder 0, %v1287
        %v1289 = vsel %vm1288, 0, %v1287
        %v1290 = vsub.s32 32, %v1289
        %v1291 = vshll.u32 %v1282, %v1289
        %v1292 = vshrl.u32 %v1274, %v1290
        %v1293 = vor.u32 %v1291, %v1292
        %v1294 = vsub.s32 4294967266, %v1289
        %v1295 = vadd.s32 %v1294, 127
        %v1296 = vshll.u32 %v1295, 23
        %v1297 = vor.u32 4788187, %v1296
        %v1298 = vand.u32 2147483647, %v1297
        %v1300 = vcvt.s32.f32 %v1293
        %v1301 = vmul.f32 %v1300, %v1298
        %v1302 = vxor.u32 %v1301, 2147483648
        %v1303 = vsel %vm1220, %v1302, %v1301
        %v1304 = vsub.s32 4, %v1280
        %v1305 = vsel %vm1220, %v1304, %v1280
        %v1306 = vsel %vm1219, %v774, %v1303
        %v1307 = vsel %vm1219, 0, %v1305
        %v1308 = vcosq.f32.pop %v1306
        %v1309 = vsinq.f32.pop %v1306
        %vm1310 = vweird.f32 %v774
        %v1311 = vadd.s32 %v1307, 3
        %v1312 = vand.u32 %v1311, 3
        %vm1313 = vcmp.lt.s32.totalorder %v1312, 2
        %vm1314 = vcmp.eq.s32.totalorder %v1312, 0
        %v1315 = vxor.u32 %v1309, 2147483648
        %v1316 = vsel %vm1314, %v1308, %v1315
        %vm1317 = vcmp.eq.s32.totalorder %v1312, 2
        %v1318 = vxor.u32 %v1308, 2147483648
        %v1319 = vsel %vm1317, %v1318, %v1309
        %v1320 = vsel %vm1313, %v1316, %v1319
        %v1321 = vsel %vm1310, nan, %v1320
        %v1322 = vand.u32 2147483647, %v775
        %vm1323 = vcmp.le.f32.partialorder %v1322, 0.7853982
        %vm1324 = vcmp.lt.s32.totalorder %v775, 0
        %v1325 = vand.u32 %v775, 2139095040
        %v1326 = vshrl.u32 %v1325, 23
        %v1327 = vsub.s32 %v1326, 127
        %v1328 = vand.u32 2147483647, %v775
        %v1329 = vand.u32 %v1328, 8388607
        %v1330 = vor.u32 %v1329, 8388608
        %v1331 = vsub.s32 0, %v1330
        %v1332 = vadd.s32 %v1327, 1
        %vm1333 = vcmp.gt.s32.totalorder %v1332, 0
        %v1334 = vsel %vm1333, %v1332, 0
        %v1335 = vshrl.u32 %v1334, 5
        %v1336 = vand.u32 %v1334, 31
        %v1337 = vsub.s32 32, %v1336
        %v1338 = vshrl.u32 683565275, %v1337
        %v1339 = vshll.u32 683565275, %v1336
        %v1340 = vshrl.u32 2475754826, %v1337
        %v1341 = vor.u32 %v1339, %v1340
        %v1342 = vshll.u32 2475754826, %v1336
        %v1343 = vshrl.u32 2131351028, %v1337
        %v1344 = vor.u32 %v1342, %v1343
        %v1345 = vshll.u32 2131351028, %v1336
        %v1346 = vshrl.u32 2102212464, %v1337
        %v1347 = vor.u32 %v1345, %v1346
        %v1348 = vshll.u32 2102212464, %v1336
        %v1349 = vshrl.u32 920167782, %v1337
        %v1350 = vor.u32 %v1348, %v1349
        %v1351 = vshll.u32 920167782, %v1336
        %v1352 = vshrl.u32 1326507024, %v1337
        %v1353 = vor.u32 %v1351, %v1352
        %vm1354 = vcmp.lt.s32.totalorder %v1335, 1
        %vm1355 = vcmp.lt.s32.totalorder %v1335, 2
        %vm1356 = vcmp.lt.s32.totalorder %v1335, 3
        %vm1357 = vcmp.lt.s32.totalorder %v1335, 4
        %v1358 = vsel %vm1354, %v1338, %v1341
        %v1359 = vsel %vm1357, %v1347, 2102212464
        %v1360 = vsel %vm1356, %v1344, %v1359
        %v1361 = vsel %vm1355, %v1358, %v1360
        %v1362 = vsel %vm1354, %v1341, %v1344
        %v1363 = vsel %vm1357, %v1350, 920167782
        %v1364 = vsel %vm1356, %v1347, %v1363
        %v1365 = vsel %vm1355, %v1362, %v1364
        %v1366 = vsel %vm1354, %v1344, %v1347
        %v1367 = vsel %vm1357, %v1353, 1326507024
        %v1368 = vsel %vm1356, %v1350, %v1367
        %v1369 = vsel %vm1355, %v1366, %v1368
        %v1370 = vshll.u32 %v1330, 8
        %v1371 = vmul.u32.u64.compose %v1370, %v1369
        %v1372 = vextract.low.u32 %v1371
        %v1373 = vextract.high.u32 %v1371
        %v1374 = vmul.u32.u64.compose %v1370, %v1365
        %v1375 = vextract.low.u32 %v1374
        %v1376 = vextract.high.u32 %v1374
        %v1377 = vmul.u32 %v1370, %v1361
        %v1378 = vadd.s32 %v1373, %v1375
        %vm1379 = vc.u32 %v1373, %v1375
        %v1380 = vadd.s32 %v1376, 1
        %v1381 = vsel %vm1379, %v1380, %v1376
        %v1382 = vadd.s32 %v1377, %v1381
        %v1383 = vadd.s32 %v1382, 536870912
        %v1384 = vshrl.u32 %v1383, 30
        %v1385 = vshll.u32 %v1384, 30
        %v1386 = vsub.s32 %v1382, %v1385
        %vm1387 = vcmp.lt.s32.totalorder %v1386, 0
        %v1388 = vsub.s32 0, %v1386
        %v1389 = vsel %vm1387, %v1388, %v1386
        %v1390 = vclz %v1389
        %v1391 = vsub.s32 %v1390, 2
        %vm1392 = vcmp.gt.s32.totalorder 0, %v1391
        %v1393 = vsel %vm1392, 0, %v1391
        %v1394 = vsub.s32 32, %v1393
        %v1395 = vshll.u32 %v1386, %v1393
        %v1396 = vshrl.u32 %v1378, %v1394
        %v1397 = vor.u32 %v1395, %v1396
        %v1398 = vsub.s32 4294967266, %v1393
        %v1399 = vadd.s32 %v1398, 127
        %v1400 = vshll.u32 %v1399, 23
        %v1401 = vor.u32 4788187, %v1400
        %v1402 = vand.u32 2147483647, %v1401
        %v1404 = vcvt.s32.f32 %v1397
        %v1405 = vmul.f32 %v1404, %v1402
        %v1406 = vxor.u32 %v1405, 2147483648
        %v1407 = vsel %vm1324, %v1406, %v1405
        %v1408 = vsub.s32 4, %v1384
        %v1409 = vsel %vm1324, %v1408, %v1384
        %v1410 = vsel %vm1323, %v775, %v1407
        %v1411 = vsel %vm1323, 0, %v1409
        %v1412 = vcosq.f32.pop %v1410
        %v1413 = vsinq.f32.pop %v1410
        %vm1414 = vweird.f32 %v775
        %v1415 = vadd.s32 %v1411, 3
        %v1416 = vand.u32 %v1415, 3
        %vm1417 = vcmp.lt.s32.totalorder %v1416, 2
        %vm1418 = vcmp.eq.s32.totalorder %v1416, 0
        %v1419 = vxor.u32 %v1413, 2147483648
        %v1420 = vsel %vm1418, %v1412, %v1419
        %vm1421 = vcmp.eq.s32.totalorder %v1416, 2
        %v1422 = vxor.u32 %v1412, 2147483648
        %v1423 = vsel %vm1421, %v1422, %v1413
        %v1424 = vsel %vm1417, %v1420, %v1423
        %v1425 = vsel %vm1414, nan, %v1424
        %v1426 = vand.u32 2147483647, %v776
        %vm1427 = vcmp.le.f32.partialorder %v1426, 0.7853982
        %vm1428 = vcmp.lt.s32.totalorder %v776, 0
        %v1429 = vand.u32 %v776, 2139095040
        %v1430 = vshrl.u32 %v1429, 23
        %v1431 = vsub.s32 %v1430, 127
        %v1432 = vand.u32 2147483647, %v776
        %v1433 = vand.u32 %v1432, 8388607
        %v1434 = vor.u32 %v1433, 8388608
        %v1435 = vsub.s32 0, %v1434
        %v1436 = vadd.s32 %v1431, 1
        %vm1437 = vcmp.gt.s32.totalorder %v1436, 0
        %v1438 = vsel %vm1437, %v1436, 0
        %v1439 = vshrl.u32 %v1438, 5
        %v1440 = vand.u32 %v1438, 31
        %v1441 = vsub.s32 32, %v1440
        %v1442 = vshrl.u32 683565275, %v1441
        %v1443 = vshll.u32 683565275, %v1440
        %v1444 = vshrl.u32 2475754826, %v1441
        %v1445 = vor.u32 %v1443, %v1444
        %v1446 = vshll.u32 2475754826, %v1440
        %v1447 = vshrl.u32 2131351028, %v1441
        %v1448 = vor.u32 %v1446, %v1447
        %v1449 = vshll.u32 2131351028, %v1440
        %v1450 = vshrl.u32 2102212464, %v1441
        %v1451 = vor.u32 %v1449, %v1450
        %v1452 = vshll.u32 2102212464, %v1440
        %v1453 = vshrl.u32 920167782, %v1441
        %v1454 = vor.u32 %v1452, %v1453
        %v1455 = vshll.u32 920167782, %v1440
        %v1456 = vshrl.u32 1326507024, %v1441
        %v1457 = vor.u32 %v1455, %v1456
        %vm1458 = vcmp.lt.s32.totalorder %v1439, 1
        %vm1459 = vcmp.lt.s32.totalorder %v1439, 2
        %vm1460 = vcmp.lt.s32.totalorder %v1439, 3
        %vm1461 = vcmp.lt.s32.totalorder %v1439, 4
        %v1462 = vsel %vm1458, %v1442, %v1445
        %v1463 = vsel %vm1461, %v1451, 2102212464
        %v1464 = vsel %vm1460, %v1448, %v1463
        %v1465 = vsel %vm1459, %v1462, %v1464
        %v1466 = vsel %vm1458, %v1445, %v1448
        %v1467 = vsel %vm1461, %v1454, 920167782
        %v1468 = vsel %vm1460, %v1451, %v1467
        %v1469 = vsel %vm1459, %v1466, %v1468
        %v1470 = vsel %vm1458, %v1448, %v1451
        %v1471 = vsel %vm1461, %v1457, 1326507024
        %v1472 = vsel %vm1460, %v1454, %v1471
        %v1473 = vsel %vm1459, %v1470, %v1472
        %v1474 = vshll.u32 %v1434, 8
        %v1475 = vmul.u32.u64.compose %v1474, %v1473
        %v1476 = vextract.low.u32 %v1475
        %v1477 = vextract.high.u32 %v1475
        %v1478 = vmul.u32.u64.compose %v1474, %v1469
        %v1479 = vextract.low.u32 %v1478
        %v1480 = vextract.high.u32 %v1478
        %v1481 = vmul.u32 %v1474, %v1465
        %v1482 = vadd.s32 %v1477, %v1479
        %vm1483 = vc.u32 %v1477, %v1479
        %v1484 = vadd.s32 %v1480, 1
        %v1485 = vsel %vm1483, %v1484, %v1480
        %v1486 = vadd.s32 %v1481, %v1485
        %v1487 = vadd.s32 %v1486, 536870912
        %v1488 = vshrl.u32 %v1487, 30
        %v1489 = vshll.u32 %v1488, 30
        %v1490 = vsub.s32 %v1486, %v1489
        %vm1491 = vcmp.lt.s32.totalorder %v1490, 0
        %v1492 = vsub.s32 0, %v1490
        %v1493 = vsel %vm1491, %v1492, %v1490
        %v1494 = vclz %v1493
        %v1495 = vsub.s32 %v1494, 2
        %vm1496 = vcmp.gt.s32.totalorder 0, %v1495
        %v1497 = vsel %vm1496, 0, %v1495
        %v1498 = vsub.s32 32, %v1497
        %v1499 = vshll.u32 %v1490, %v1497
        %v1500 = vshrl.u32 %v1482, %v1498
        %v1501 = vor.u32 %v1499, %v1500
        %v1502 = vsub.s32 4294967266, %v1497
        %v1503 = vadd.s32 %v1502, 127
        %v1504 = vshll.u32 %v1503, 23
        %v1505 = vor.u32 4788187, %v1504
        %v1506 = vand.u32 2147483647, %v1505
        %v1508 = vcvt.s32.f32 %v1501
        %v1509 = vmul.f32 %v1508, %v1506
        %v1510 = vxor.u32 %v1509, 2147483648
        %v1511 = vsel %vm1428, %v1510, %v1509
        %v1512 = vsub.s32 4, %v1488
        %v1513 = vsel %vm1428, %v1512, %v1488
        %v1514 = vsel %vm1427, %v776, %v1511
        %v1515 = vsel %vm1427, 0, %v1513
        %v1516 = vcosq.f32.pop %v1514
        %v1517 = vsinq.f32.pop %v1514
        %vm1518 = vweird.f32 %v776
        %v1519 = vadd.s32 %v1515, 3
        %v1520 = vand.u32 %v1519, 3
        %vm1521 = vcmp.lt.s32.totalorder %v1520, 2
        %vm1522 = vcmp.eq.s32.totalorder %v1520, 0
        %v1523 = vxor.u32 %v1517, 2147483648
        %v1524 = vsel %vm1522, %v1516, %v1523
        %vm1525 = vcmp.eq.s32.totalorder %v1520, 2
        %v1526 = vxor.u32 %v1516, 2147483648
        %v1527 = vsel %vm1525, %v1526, %v1517
        %v1528 = vsel %vm1521, %v1524, %v1527
        %v1529 = vsel %vm1518, nan, %v1528
        %v1530 = vand.u32 2147483647, %v777
        %vm1531 = vcmp.le.f32.partialorder %v1530, 0.7853982
        %vm1532 = vcmp.lt.s32.totalorder %v777, 0
        %v1533 = vand.u32 %v777, 2139095040
        %v1534 = vshrl.u32 %v1533, 23
        %v1535 = vsub.s32 %v1534, 127
        %v1536 = vand.u32 2147483647, %v777
        %v1537 = vand.u32 %v1536, 8388607
        %v1538 = vor.u32 %v1537, 8388608
        %v1539 = vsub.s32 0, %v1538
        %v1540 = vadd.s32 %v1535, 1
        %vm1541 = vcmp.gt.s32.totalorder %v1540, 0
        %v1542 = vsel %vm1541, %v1540, 0
        %v1543 = vshrl.u32 %v1542, 5
        %v1544 = vand.u32 %v1542, 31
        %v1545 = vsub.s32 32, %v1544
        %v1546 = vshrl.u32 683565275, %v1545
        %v1547 = vshll.u32 683565275, %v1544
        %v1548 = vshrl.u32 2475754826, %v1545
        %v1549 = vor.u32 %v1547, %v1548
        %v1550 = vshll.u32 2475754826, %v1544
        %v1551 = vshrl.u32 2131351028, %v1545
        %v1552 = vor.u32 %v1550, %v1551
        %v1553 = vshll.u32 2131351028, %v1544
        %v1554 = vshrl.u32 2102212464, %v1545
        %v1555 = vor.u32 %v1553, %v1554
        %v1556 = vshll.u32 2102212464, %v1544
        %v1557 = vshrl.u32 920167782, %v1545
        %v1558 = vor.u32 %v1556, %v1557
        %v1559 = vshll.u32 920167782, %v1544
        %v1560 = vshrl.u32 1326507024, %v1545
        %v1561 = vor.u32 %v1559, %v1560
        %vm1562 = vcmp.lt.s32.totalorder %v1543, 1
        %vm1563 = vcmp.lt.s32.totalorder %v1543, 2
        %vm1564 = vcmp.lt.s32.totalorder %v1543, 3
        %vm1565 = vcmp.lt.s32.totalorder %v1543, 4
        %v1566 = vsel %vm1562, %v1546, %v1549
        %v1567 = vsel %vm1565, %v1555, 2102212464
        %v1568 = vsel %vm1564, %v1552, %v1567
        %v1569 = vsel %vm1563, %v1566, %v1568
        %v1570 = vsel %vm1562, %v1549, %v1552
        %v1571 = vsel %vm1565, %v1558, 920167782
        %v1572 = vsel %vm1564, %v1555, %v1571
        %v1573 = vsel %vm1563, %v1570, %v1572
        %v1574 = vsel %vm1562, %v1552, %v1555
        %v1575 = vsel %vm1565, %v1561, 1326507024
        %v1576 = vsel %vm1564, %v1558, %v1575
        %v1577 = vsel %vm1563, %v1574, %v1576
        %v1578 = vshll.u32 %v1538, 8
        %v1579 = vmul.u32.u64.compose %v1578, %v1577
        %v1580 = vextract.low.u32 %v1579
        %v1581 = vextract.high.u32 %v1579
        %v1582 = vmul.u32.u64.compose %v1578, %v1573
        %v1583 = vextract.low.u32 %v1582
        %v1584 = vextract.high.u32 %v1582
        %v1585 = vmul.u32 %v1578, %v1569
        %v1586 = vadd.s32 %v1581, %v1583
        %vm1587 = vc.u32 %v1581, %v1583
        %v1588 = vadd.s32 %v1584, 1
        %v1589 = vsel %vm1587, %v1588, %v1584
        %v1590 = vadd.s32 %v1585, %v1589
        %v1591 = vadd.s32 %v1590, 536870912
        %v1592 = vshrl.u32 %v1591, 30
        %v1593 = vshll.u32 %v1592, 30
        %v1594 = vsub.s32 %v1590, %v1593
        %vm1595 = vcmp.lt.s32.totalorder %v1594, 0
        %v1596 = vsub.s32 0, %v1594
        %v1597 = vsel %vm1595, %v1596, %v1594
        %v1598 = vclz %v1597
        %v1599 = vsub.s32 %v1598, 2
        %vm1600 = vcmp.gt.s32.totalorder 0, %v1599
        %v1601 = vsel %vm1600, 0, %v1599
        %v1602 = vsub.s32 32, %v1601
        %v1603 = vshll.u32 %v1594, %v1601
        %v1604 = vshrl.u32 %v1586, %v1602
        %v1605 = vor.u32 %v1603, %v1604
        %v1606 = vsub.s32 4294967266, %v1601
        %v1607 = vadd.s32 %v1606, 127
        %v1608 = vshll.u32 %v1607, 23
        %v1609 = vor.u32 4788187, %v1608
        %v1610 = vand.u32 2147483647, %v1609
        %v1612 = vcvt.s32.f32 %v1605
        %v1613 = vmul.f32 %v1612, %v1610
        %v1614 = vxor.u32 %v1613, 2147483648
        %v1615 = vsel %vm1532, %v1614, %v1613
        %v1616 = vsub.s32 4, %v1592
        %v1617 = vsel %vm1532, %v1616, %v1592
        %v1618 = vsel %vm1531, %v777, %v1615
        %v1619 = vsel %vm1531, 0, %v1617
        %v1620 = vcosq.f32.pop %v1618
        %v1621 = vsinq.f32.pop %v1618
        %vm1622 = vweird.f32 %v777
        %v1623 = vadd.s32 %v1619, 3
        %v1624 = vand.u32 %v1623, 3
        %vm1625 = vcmp.lt.s32.totalorder %v1624, 2
        %vm1626 = vcmp.eq.s32.totalorder %v1624, 0
        %v1627 = vxor.u32 %v1621, 2147483648
        %v1628 = vsel %vm1626, %v1620, %v1627
        %vm1629 = vcmp.eq.s32.totalorder %v1624, 2
        %v1630 = vxor.u32 %v1620, 2147483648
        %v1631 = vsel %vm1629, %v1630, %v1621
        %v1632 = vsel %vm1625, %v1628, %v1631
        %v1633 = vsel %vm1622, nan, %v1632
        %v1634 = vand.u32 2147483647, %v778
        %vm1635 = vcmp.le.f32.partialorder %v1634, 0.7853982
        %vm1636 = vcmp.lt.s32.totalorder %v778, 0
        %v1637 = vand.u32 %v778, 2139095040
        %v1638 = vshrl.u32 %v1637, 23
        %v1639 = vsub.s32 %v1638, 127
        %v1640 = vand.u32 2147483647, %v778
        %v1641 = vand.u32 %v1640, 8388607
        %v1642 = vor.u32 %v1641, 8388608
        %v1643 = vsub.s32 0, %v1642
        %v1644 = vadd.s32 %v1639, 1
        %vm1645 = vcmp.gt.s32.totalorder %v1644, 0
        %v1646 = vsel %vm1645, %v1644, 0
        %v1647 = vshrl.u32 %v1646, 5
        %v1648 = vand.u32 %v1646, 31
        %v1649 = vsub.s32 32, %v1648
        %v1650 = vshrl.u32 683565275, %v1649
        %v1651 = vshll.u32 683565275, %v1648
        %v1652 = vshrl.u32 2475754826, %v1649
        %v1653 = vor.u32 %v1651, %v1652
        %v1654 = vshll.u32 2475754826, %v1648
        %v1655 = vshrl.u32 2131351028, %v1649
        %v1656 = vor.u32 %v1654, %v1655
        %v1657 = vshll.u32 2131351028, %v1648
        %v1658 = vshrl.u32 2102212464, %v1649
        %v1659 = vor.u32 %v1657, %v1658
        %v1660 = vshll.u32 2102212464, %v1648
        %v1661 = vshrl.u32 920167782, %v1649
        %v1662 = vor.u32 %v1660, %v1661
        %v1663 = vshll.u32 920167782, %v1648
        %v1664 = vshrl.u32 1326507024, %v1649
        %v1665 = vor.u32 %v1663, %v1664
        %vm1666 = vcmp.lt.s32.totalorder %v1647, 1
        %vm1667 = vcmp.lt.s32.totalorder %v1647, 2
        %vm1668 = vcmp.lt.s32.totalorder %v1647, 3
        %vm1669 = vcmp.lt.s32.totalorder %v1647, 4
        %v1670 = vsel %vm1666, %v1650, %v1653
        %v1671 = vsel %vm1669, %v1659, 2102212464
        %v1672 = vsel %vm1668, %v1656, %v1671
        %v1673 = vsel %vm1667, %v1670, %v1672
        %v1674 = vsel %vm1666, %v1653, %v1656
        %v1675 = vsel %vm1669, %v1662, 920167782
        %v1676 = vsel %vm1668, %v1659, %v1675
        %v1677 = vsel %vm1667, %v1674, %v1676
        %v1678 = vsel %vm1666, %v1656, %v1659
        %v1679 = vsel %vm1669, %v1665, 1326507024
        %v1680 = vsel %vm1668, %v1662, %v1679
        %v1681 = vsel %vm1667, %v1678, %v1680
        %v1682 = vshll.u32 %v1642, 8
        %v1683 = vmul.u32.u64.compose %v1682, %v1681
        %v1684 = vextract.low.u32 %v1683
        %v1685 = vextract.high.u32 %v1683
        %v1686 = vmul.u32.u64.compose %v1682, %v1677
        %v1687 = vextract.low.u32 %v1686
        %v1688 = vextract.high.u32 %v1686
        %v1689 = vmul.u32 %v1682, %v1673
        %v1690 = vadd.s32 %v1685, %v1687
        %vm1691 = vc.u32 %v1685, %v1687
        %v1692 = vadd.s32 %v1688, 1
        %v1693 = vsel %vm1691, %v1692, %v1688
        %v1694 = vadd.s32 %v1689, %v1693
        %v1695 = vadd.s32 %v1694, 536870912
        %v1696 = vshrl.u32 %v1695, 30
        %v1697 = vshll.u32 %v1696, 30
        %v1698 = vsub.s32 %v1694, %v1697
        %vm1699 = vcmp.lt.s32.totalorder %v1698, 0
        %v1700 = vsub.s32 0, %v1698
        %v1701 = vsel %vm1699, %v1700, %v1698
        %v1702 = vclz %v1701
        %v1703 = vsub.s32 %v1702, 2
        %vm1704 = vcmp.gt.s32.totalorder 0, %v1703
        %v1705 = vsel %vm1704, 0, %v1703
        %v1706 = vsub.s32 32, %v1705
        %v1707 = vshll.u32 %v1698, %v1705
        %v1708 = vshrl.u32 %v1690, %v1706
        %v1709 = vor.u32 %v1707, %v1708
        %v1710 = vsub.s32 4294967266, %v1705
        %v1711 = vadd.s32 %v1710, 127
        %v1712 = vshll.u32 %v1711, 23
        %v1713 = vor.u32 4788187, %v1712
        %v1714 = vand.u32 2147483647, %v1713
        %v1716 = vcvt.s32.f32 %v1709
        %v1717 = vmul.f32 %v1716, %v1714
        %v1718 = vxor.u32 %v1717, 2147483648
        %v1719 = vsel %vm1636, %v1718, %v1717
        %v1720 = vsub.s32 4, %v1696
        %v1721 = vsel %vm1636, %v1720, %v1696
        %v1722 = vsel %vm1635, %v778, %v1719
        %v1723 = vsel %vm1635, 0, %v1721
        %v1724 = vcosq.f32.pop %v1722
        %v1725 = vsinq.f32.pop %v1722
        %vm1726 = vweird.f32 %v778
        %v1727 = vadd.s32 %v1723, 3
        %v1728 = vand.u32 %v1727, 3
        %vm1729 = vcmp.lt.s32.totalorder %v1728, 2
        %vm1730 = vcmp.eq.s32.totalorder %v1728, 0
        %v1731 = vxor.u32 %v1725, 2147483648
        %v1732 = vsel %vm1730, %v1724, %v1731
        %vm1733 = vcmp.eq.s32.totalorder %v1728, 2
        %v1734 = vxor.u32 %v1724, 2147483648
        %v1735 = vsel %vm1733, %v1734, %v1725
        %v1736 = vsel %vm1729, %v1732, %v1735
        %v1737 = vsel %vm1726, nan, %v1736
        %v1738 = vand.u32 2147483647, %v779
        %vm1739 = vcmp.le.f32.partialorder %v1738, 0.7853982
        %vm1740 = vcmp.lt.s32.totalorder %v779, 0
        %v1741 = vand.u32 %v779, 2139095040
        %v1742 = vshrl.u32 %v1741, 23
        %v1743 = vsub.s32 %v1742, 127
        %v1744 = vand.u32 2147483647, %v779
        %v1745 = vand.u32 %v1744, 8388607
        %v1746 = vor.u32 %v1745, 8388608
        %v1747 = vsub.s32 0, %v1746
        %v1748 = vadd.s32 %v1743, 1
        %vm1749 = vcmp.gt.s32.totalorder %v1748, 0
        %v1750 = vsel %vm1749, %v1748, 0
        %v1751 = vshrl.u32 %v1750, 5
        %v1752 = vand.u32 %v1750, 31
        %v1753 = vsub.s32 32, %v1752
        %v1754 = vshrl.u32 683565275, %v1753
        %v1755 = vshll.u32 683565275, %v1752
        %v1756 = vshrl.u32 2475754826, %v1753
        %v1757 = vor.u32 %v1755, %v1756
        %v1758 = vshll.u32 2475754826, %v1752
        %v1759 = vshrl.u32 2131351028, %v1753
        %v1760 = vor.u32 %v1758, %v1759
        %v1761 = vshll.u32 2131351028, %v1752
        %v1762 = vshrl.u32 2102212464, %v1753
        %v1763 = vor.u32 %v1761, %v1762
        %v1764 = vshll.u32 2102212464, %v1752
        %v1765 = vshrl.u32 920167782, %v1753
        %v1766 = vor.u32 %v1764, %v1765
        %v1767 = vshll.u32 920167782, %v1752
        %v1768 = vshrl.u32 1326507024, %v1753
        %v1769 = vor.u32 %v1767, %v1768
        %vm1770 = vcmp.lt.s32.totalorder %v1751, 1
        %vm1771 = vcmp.lt.s32.totalorder %v1751, 2
        %vm1772 = vcmp.lt.s32.totalorder %v1751, 3
        %vm1773 = vcmp.lt.s32.totalorder %v1751, 4
        %v1774 = vsel %vm1770, %v1754, %v1757
        %v1775 = vsel %vm1773, %v1763, 2102212464
        %v1776 = vsel %vm1772, %v1760, %v1775
        %v1777 = vsel %vm1771, %v1774, %v1776
        %v1778 = vsel %vm1770, %v1757, %v1760
        %v1779 = vsel %vm1773, %v1766, 920167782
        %v1780 = vsel %vm1772, %v1763, %v1779
        %v1781 = vsel %vm1771, %v1778, %v1780
        %v1782 = vsel %vm1770, %v1760, %v1763
        %v1783 = vsel %vm1773, %v1769, 1326507024
        %v1784 = vsel %vm1772, %v1766, %v1783
        %v1785 = vsel %vm1771, %v1782, %v1784
        %v1786 = vshll.u32 %v1746, 8
        %v1787 = vmul.u32.u64.compose %v1786, %v1785
        %v1788 = vextract.low.u32 %v1787
        %v1789 = vextract.high.u32 %v1787
        %v1790 = vmul.u32.u64.compose %v1786, %v1781
        %v1791 = vextract.low.u32 %v1790
        %v1792 = vextract.high.u32 %v1790
        %v1793 = vmul.u32 %v1786, %v1777
        %v1794 = vadd.s32 %v1789, %v1791
        %vm1795 = vc.u32 %v1789, %v1791
        %v1796 = vadd.s32 %v1792, 1
        %v1797 = vsel %vm1795, %v1796, %v1792
        %v1798 = vadd.s32 %v1793, %v1797
        %v1799 = vadd.s32 %v1798, 536870912
        %v1800 = vshrl.u32 %v1799, 30
        %v1801 = vshll.u32 %v1800, 30
        %v1802 = vsub.s32 %v1798, %v1801
        %vm1803 = vcmp.lt.s32.totalorder %v1802, 0
        %v1804 = vsub.s32 0, %v1802
        %v1805 = vsel %vm1803, %v1804, %v1802
        %v1806 = vclz %v1805
        %v1807 = vsub.s32 %v1806, 2
        %vm1808 = vcmp.gt.s32.totalorder 0, %v1807
        %v1809 = vsel %vm1808, 0, %v1807
        %v1810 = vsub.s32 32, %v1809
        %v1811 = vshll.u32 %v1802, %v1809
        %v1812 = vshrl.u32 %v1794, %v1810
        %v1813 = vor.u32 %v1811, %v1812
        %v1814 = vsub.s32 4294967266, %v1809
        %v1815 = vadd.s32 %v1814, 127
        %v1816 = vshll.u32 %v1815, 23
        %v1817 = vor.u32 4788187, %v1816
        %v1818 = vand.u32 2147483647, %v1817
        %v1820 = vcvt.s32.f32 %v1813
        %v1821 = vmul.f32 %v1820, %v1818
        %v1822 = vxor.u32 %v1821, 2147483648
        %v1823 = vsel %vm1740, %v1822, %v1821
        %v1824 = vsub.s32 4, %v1800
        %v1825 = vsel %vm1740, %v1824, %v1800
        %v1826 = vsel %vm1739, %v779, %v1823
        %v1827 = vsel %vm1739, 0, %v1825
        %v1828 = vcosq.f32.pop %v1826
        %v1829 = vsinq.f32.pop %v1826
        %vm1830 = vweird.f32 %v779
        %v1831 = vadd.s32 %v1827, 3
        %v1832 = vand.u32 %v1831, 3
        %vm1833 = vcmp.lt.s32.totalorder %v1832, 2
        %vm1834 = vcmp.eq.s32.totalorder %v1832, 0
        %v1835 = vxor.u32 %v1829, 2147483648
        %v1836 = vsel %vm1834, %v1828, %v1835
        %vm1837 = vcmp.eq.s32.totalorder %v1832, 2
        %v1838 = vxor.u32 %v1828, 2147483648
        %v1839 = vsel %vm1837, %v1838, %v1829
        %v1840 = vsel %vm1833, %v1836, %v1839
        %v1841 = vsel %vm1830, nan, %v1840
        %v1842 = vand.u32 2147483647, %v780
        %vm1843 = vcmp.le.f32.partialorder %v1842, 0.7853982
        %vm1844 = vcmp.lt.s32.totalorder %v780, 0
        %v1845 = vand.u32 %v780, 2139095040
        %v1846 = vshrl.u32 %v1845, 23
        %v1847 = vsub.s32 %v1846, 127
        %v1848 = vand.u32 2147483647, %v780
        %v1849 = vand.u32 %v1848, 8388607
        %v1850 = vor.u32 %v1849, 8388608
        %v1851 = vsub.s32 0, %v1850
        %v1852 = vadd.s32 %v1847, 1
        %vm1853 = vcmp.gt.s32.totalorder %v1852, 0
        %v1854 = vsel %vm1853, %v1852, 0
        %v1855 = vshrl.u32 %v1854, 5
        %v1856 = vand.u32 %v1854, 31
        %v1857 = vsub.s32 32, %v1856
        %v1858 = vshrl.u32 683565275, %v1857
        %v1859 = vshll.u32 683565275, %v1856
        %v1860 = vshrl.u32 2475754826, %v1857
        %v1861 = vor.u32 %v1859, %v1860
        %v1862 = vshll.u32 2475754826, %v1856
        %v1863 = vshrl.u32 2131351028, %v1857
        %v1864 = vor.u32 %v1862, %v1863
        %v1865 = vshll.u32 2131351028, %v1856
        %v1866 = vshrl.u32 2102212464, %v1857
        %v1867 = vor.u32 %v1865, %v1866
        %v1868 = vshll.u32 2102212464, %v1856
        %v1869 = vshrl.u32 920167782, %v1857
        %v1870 = vor.u32 %v1868, %v1869
        %v1871 = vshll.u32 920167782, %v1856
        %v1872 = vshrl.u32 1326507024, %v1857
        %v1873 = vor.u32 %v1871, %v1872
        %vm1874 = vcmp.lt.s32.totalorder %v1855, 1
        %vm1875 = vcmp.lt.s32.totalorder %v1855, 2
        %vm1876 = vcmp.lt.s32.totalorder %v1855, 3
        %vm1877 = vcmp.lt.s32.totalorder %v1855, 4
        %v1878 = vsel %vm1874, %v1858, %v1861
        %v1879 = vsel %vm1877, %v1867, 2102212464
        %v1880 = vsel %vm1876, %v1864, %v1879
        %v1881 = vsel %vm1875, %v1878, %v1880
        %v1882 = vsel %vm1874, %v1861, %v1864
        %v1883 = vsel %vm1877, %v1870, 920167782
        %v1884 = vsel %vm1876, %v1867, %v1883
        %v1885 = vsel %vm1875, %v1882, %v1884
        %v1886 = vsel %vm1874, %v1864, %v1867
        %v1887 = vsel %vm1877, %v1873, 1326507024
        %v1888 = vsel %vm1876, %v1870, %v1887
        %v1889 = vsel %vm1875, %v1886, %v1888
        %v1890 = vshll.u32 %v1850, 8
        %v1891 = vmul.u32.u64.compose %v1890, %v1889
        %v1892 = vextract.low.u32 %v1891
        %v1893 = vextract.high.u32 %v1891
        %v1894 = vmul.u32.u64.compose %v1890, %v1885
        %v1895 = vextract.low.u32 %v1894
        %v1896 = vextract.high.u32 %v1894
        %v1897 = vmul.u32 %v1890, %v1881
        %v1898 = vadd.s32 %v1893, %v1895
        %vm1899 = vc.u32 %v1893, %v1895
        %v1900 = vadd.s32 %v1896, 1
        %v1901 = vsel %vm1899, %v1900, %v1896
        %v1902 = vadd.s32 %v1897, %v1901
        %v1903 = vadd.s32 %v1902, 536870912
        %v1904 = vshrl.u32 %v1903, 30
        %v1905 = vshll.u32 %v1904, 30
        %v1906 = vsub.s32 %v1902, %v1905
        %vm1907 = vcmp.lt.s32.totalorder %v1906, 0
        %v1908 = vsub.s32 0, %v1906
        %v1909 = vsel %vm1907, %v1908, %v1906
        %v1910 = vclz %v1909
        %v1911 = vsub.s32 %v1910, 2
        %vm1912 = vcmp.gt.s32.totalorder 0, %v1911
        %v1913 = vsel %vm1912, 0, %v1911
        %v1914 = vsub.s32 32, %v1913
        %v1915 = vshll.u32 %v1906, %v1913
        %v1916 = vshrl.u32 %v1898, %v1914
        %v1917 = vor.u32 %v1915, %v1916
        %v1918 = vsub.s32 4294967266, %v1913
        %v1919 = vadd.s32 %v1918, 127
        %v1920 = vshll.u32 %v1919, 23
        %v1921 = vor.u32 4788187, %v1920
        %v1922 = vand.u32 2147483647, %v1921
        %v1924 = vcvt.s32.f32 %v1917
        %v1925 = vmul.f32 %v1924, %v1922
        %v1926 = vxor.u32 %v1925, 2147483648
        %v1927 = vsel %vm1844, %v1926, %v1925
        %v1928 = vsub.s32 4, %v1904
        %v1929 = vsel %vm1844, %v1928, %v1904
        %v1930 = vsel %vm1843, %v780, %v1927
        %v1931 = vsel %vm1843, 0, %v1929
        %v1932 = vcosq.f32.pop %v1930
        %v1933 = vsinq.f32.pop %v1930
        %vm1934 = vweird.f32 %v780
        %v1935 = vadd.s32 %v1931, 3
        %v1936 = vand.u32 %v1935, 3
        %vm1937 = vcmp.lt.s32.totalorder %v1936, 2
        %vm1938 = vcmp.eq.s32.totalorder %v1936, 0
        %v1939 = vxor.u32 %v1933, 2147483648
        %v1940 = vsel %vm1938, %v1932, %v1939
        %vm1941 = vcmp.eq.s32.totalorder %v1936, 2
        %v1942 = vxor.u32 %v1932, 2147483648
        %v1943 = vsel %vm1941, %v1942, %v1933
        %v1944 = vsel %vm1937, %v1940, %v1943
        %v1945 = vsel %vm1934, nan, %v1944
        %v1946 = vand.u32 2147483647, %v781
        %vm1947 = vcmp.le.f32.partialorder %v1946, 0.7853982
        %vm1948 = vcmp.lt.s32.totalorder %v781, 0
        %v1949 = vand.u32 %v781, 2139095040
        %v1950 = vshrl.u32 %v1949, 23
        %v1951 = vsub.s32 %v1950, 127
        %v1952 = vand.u32 2147483647, %v781
        %v1953 = vand.u32 %v1952, 8388607
        %v1954 = vor.u32 %v1953, 8388608
        %v1955 = vsub.s32 0, %v1954
        %v1956 = vadd.s32 %v1951, 1
        %vm1957 = vcmp.gt.s32.totalorder %v1956, 0
        %v1958 = vsel %vm1957, %v1956, 0
        %v1959 = vshrl.u32 %v1958, 5
        %v1960 = vand.u32 %v1958, 31
        %v1961 = vsub.s32 32, %v1960
        %v1962 = vshrl.u32 683565275, %v1961
        %v1963 = vshll.u32 683565275, %v1960
        %v1964 = vshrl.u32 2475754826, %v1961
        %v1965 = vor.u32 %v1963, %v1964
        %v1966 = vshll.u32 2475754826, %v1960
        %v1967 = vshrl.u32 2131351028, %v1961
        %v1968 = vor.u32 %v1966, %v1967
        %v1969 = vshll.u32 2131351028, %v1960
        %v1970 = vshrl.u32 2102212464, %v1961
        %v1971 = vor.u32 %v1969, %v1970
        %v1972 = vshll.u32 2102212464, %v1960
        %v1973 = vshrl.u32 920167782, %v1961
        %v1974 = vor.u32 %v1972, %v1973
        %v1975 = vshll.u32 920167782, %v1960
        %v1976 = vshrl.u32 1326507024, %v1961
        %v1977 = vor.u32 %v1975, %v1976
        %vm1978 = vcmp.lt.s32.totalorder %v1959, 1
        %vm1979 = vcmp.lt.s32.totalorder %v1959, 2
        %vm1980 = vcmp.lt.s32.totalorder %v1959, 3
        %vm1981 = vcmp.lt.s32.totalorder %v1959, 4
        %v1982 = vsel %vm1978, %v1962, %v1965
        %v1983 = vsel %vm1981, %v1971, 2102212464
        %v1984 = vsel %vm1980, %v1968, %v1983
        %v1985 = vsel %vm1979, %v1982, %v1984
        %v1986 = vsel %vm1978, %v1965, %v1968
        %v1987 = vsel %vm1981, %v1974, 920167782
        %v1988 = vsel %vm1980, %v1971, %v1987
        %v1989 = vsel %vm1979, %v1986, %v1988
        %v1990 = vsel %vm1978, %v1968, %v1971
        %v1991 = vsel %vm1981, %v1977, 1326507024
        %v1992 = vsel %vm1980, %v1974, %v1991
        %v1993 = vsel %vm1979, %v1990, %v1992
        %v1994 = vshll.u32 %v1954, 8
        %v1995 = vmul.u32.u64.compose %v1994, %v1993
        %v1996 = vextract.low.u32 %v1995
        %v1997 = vextract.high.u32 %v1995
        %v1998 = vmul.u32.u64.compose %v1994, %v1989
        %v1999 = vextract.low.u32 %v1998
        %v2000 = vextract.high.u32 %v1998
        %v2001 = vmul.u32 %v1994, %v1985
        %v2002 = vadd.s32 %v1997, %v1999
        %vm2003 = vc.u32 %v1997, %v1999
        %v2004 = vadd.s32 %v2000, 1
        %v2005 = vsel %vm2003, %v2004, %v2000
        %v2006 = vadd.s32 %v2001, %v2005
        %v2007 = vadd.s32 %v2006, 536870912
        %v2008 = vshrl.u32 %v2007, 30
        %v2009 = vshll.u32 %v2008, 30
        %v2010 = vsub.s32 %v2006, %v2009
        %vm2011 = vcmp.lt.s32.totalorder %v2010, 0
        %v2012 = vsub.s32 0, %v2010
        %v2013 = vsel %vm2011, %v2012, %v2010
        %v2014 = vclz %v2013
        %v2015 = vsub.s32 %v2014, 2
        %vm2016 = vcmp.gt.s32.totalorder 0, %v2015
        %v2017 = vsel %vm2016, 0, %v2015
        %v2018 = vsub.s32 32, %v2017
        %v2019 = vshll.u32 %v2010, %v2017
        %v2020 = vshrl.u32 %v2002, %v2018
        %v2021 = vor.u32 %v2019, %v2020
        %v2022 = vsub.s32 4294967266, %v2017
        %v2023 = vadd.s32 %v2022, 127
        %v2024 = vshll.u32 %v2023, 23
        %v2025 = vor.u32 4788187, %v2024
        %v2026 = vand.u32 2147483647, %v2025
        %v2028 = vcvt.s32.f32 %v2021
        %v2029 = vmul.f32 %v2028, %v2026
        %v2030 = vxor.u32 %v2029, 2147483648
        %v2031 = vsel %vm1948, %v2030, %v2029
        %v2032 = vsub.s32 4, %v2008
        %v2033 = vsel %vm1948, %v2032, %v2008
        %v2034 = vsel %vm1947, %v781, %v2031
        %v2035 = vsel %vm1947, 0, %v2033
        %v2036 = vcosq.f32.pop %v2034
        %v2037 = vsinq.f32.pop %v2034
        %vm2038 = vweird.f32 %v781
        %v2039 = vadd.s32 %v2035, 3
        %v2040 = vand.u32 %v2039, 3
        %vm2041 = vcmp.lt.s32.totalorder %v2040, 2
        %vm2042 = vcmp.eq.s32.totalorder %v2040, 0
        %v2043 = vxor.u32 %v2037, 2147483648
        %v2044 = vsel %vm2042, %v2036, %v2043
        %vm2045 = vcmp.eq.s32.totalorder %v2040, 2
        %v2046 = vxor.u32 %v2036, 2147483648
        %v2047 = vsel %vm2045, %v2046, %v2037
        %v2048 = vsel %vm2041, %v2044, %v2047
        %v2049 = vsel %vm2038, nan, %v2048
        %v2050 = vand.u32 2147483647, %v782
        %vm2051 = vcmp.le.f32.partialorder %v2050, 0.7853982
        %vm2052 = vcmp.lt.s32.totalorder %v782, 0
        %v2053 = vand.u32 %v782, 2139095040
        %v2054 = vshrl.u32 %v2053, 23
        %v2055 = vsub.s32 %v2054, 127
        %v2056 = vand.u32 2147483647, %v782
        %v2057 = vand.u32 %v2056, 8388607
        %v2058 = vor.u32 %v2057, 8388608
        %v2059 = vsub.s32 0, %v2058
        %v2060 = vadd.s32 %v2055, 1
        %vm2061 = vcmp.gt.s32.totalorder %v2060, 0
        %v2062 = vsel %vm2061, %v2060, 0
        %v2063 = vshrl.u32 %v2062, 5
        %v2064 = vand.u32 %v2062, 31
        %v2065 = vsub.s32 32, %v2064
        %v2066 = vshrl.u32 683565275, %v2065
        %v2067 = vshll.u32 683565275, %v2064
        %v2068 = vshrl.u32 2475754826, %v2065
        %v2069 = vor.u32 %v2067, %v2068
        %v2070 = vshll.u32 2475754826, %v2064
        %v2071 = vshrl.u32 2131351028, %v2065
        %v2072 = vor.u32 %v2070, %v2071
        %v2073 = vshll.u32 2131351028, %v2064
        %v2074 = vshrl.u32 2102212464, %v2065
        %v2075 = vor.u32 %v2073, %v2074
        %v2076 = vshll.u32 2102212464, %v2064
        %v2077 = vshrl.u32 920167782, %v2065
        %v2078 = vor.u32 %v2076, %v2077
        %v2079 = vshll.u32 920167782, %v2064
        %v2080 = vshrl.u32 1326507024, %v2065
        %v2081 = vor.u32 %v2079, %v2080
        %vm2082 = vcmp.lt.s32.totalorder %v2063, 1
        %vm2083 = vcmp.lt.s32.totalorder %v2063, 2
        %vm2084 = vcmp.lt.s32.totalorder %v2063, 3
        %vm2085 = vcmp.lt.s32.totalorder %v2063, 4
        %v2086 = vsel %vm2082, %v2066, %v2069
        %v2087 = vsel %vm2085, %v2075, 2102212464
        %v2088 = vsel %vm2084, %v2072, %v2087
        %v2089 = vsel %vm2083, %v2086, %v2088
        %v2090 = vsel %vm2082, %v2069, %v2072
        %v2091 = vsel %vm2085, %v2078, 920167782
        %v2092 = vsel %vm2084, %v2075, %v2091
        %v2093 = vsel %vm2083, %v2090, %v2092
        %v2094 = vsel %vm2082, %v2072, %v2075
        %v2095 = vsel %vm2085, %v2081, 1326507024
        %v2096 = vsel %vm2084, %v2078, %v2095
        %v2097 = vsel %vm2083, %v2094, %v2096
        %v2098 = vshll.u32 %v2058, 8
        %v2099 = vmul.u32.u64.compose %v2098, %v2097
        %v2100 = vextract.low.u32 %v2099
        %v2101 = vextract.high.u32 %v2099
        %v2102 = vmul.u32.u64.compose %v2098, %v2093
        %v2103 = vextract.low.u32 %v2102
        %v2104 = vextract.high.u32 %v2102
        %v2105 = vmul.u32 %v2098, %v2089
        %v2106 = vadd.s32 %v2101, %v2103
        %vm2107 = vc.u32 %v2101, %v2103
        %v2108 = vadd.s32 %v2104, 1
        %v2109 = vsel %vm2107, %v2108, %v2104
        %v2110 = vadd.s32 %v2105, %v2109
        %v2111 = vadd.s32 %v2110, 536870912
        %v2112 = vshrl.u32 %v2111, 30
        %v2113 = vshll.u32 %v2112, 30
        %v2114 = vsub.s32 %v2110, %v2113
        %vm2115 = vcmp.lt.s32.totalorder %v2114, 0
        %v2116 = vsub.s32 0, %v2114
        %v2117 = vsel %vm2115, %v2116, %v2114
        %v2118 = vclz %v2117
        %v2119 = vsub.s32 %v2118, 2
        %vm2120 = vcmp.gt.s32.totalorder 0, %v2119
        %v2121 = vsel %vm2120, 0, %v2119
        %v2122 = vsub.s32 32, %v2121
        %v2123 = vshll.u32 %v2114, %v2121
        %v2124 = vshrl.u32 %v2106, %v2122
        %v2125 = vor.u32 %v2123, %v2124
        %v2126 = vsub.s32 4294967266, %v2121
        %v2127 = vadd.s32 %v2126, 127
        %v2128 = vshll.u32 %v2127, 23
        %v2129 = vor.u32 4788187, %v2128
        %v2130 = vand.u32 2147483647, %v2129
        %v2132 = vcvt.s32.f32 %v2125
        %v2133 = vmul.f32 %v2132, %v2130
        %v2134 = vxor.u32 %v2133, 2147483648
        %v2135 = vsel %vm2052, %v2134, %v2133
        %v2136 = vsub.s32 4, %v2112
        %v2137 = vsel %vm2052, %v2136, %v2112
        %v2138 = vsel %vm2051, %v782, %v2135
        %v2139 = vsel %vm2051, 0, %v2137
        %v2140 = vcosq.f32.pop %v2138
        %v2141 = vsinq.f32.pop %v2138
        %vm2142 = vweird.f32 %v782
        %v2143 = vadd.s32 %v2139, 3
        %v2144 = vand.u32 %v2143, 3
        %vm2145 = vcmp.lt.s32.totalorder %v2144, 2
        %vm2146 = vcmp.eq.s32.totalorder %v2144, 0
        %v2147 = vxor.u32 %v2141, 2147483648
        %v2148 = vsel %vm2146, %v2140, %v2147
        %vm2149 = vcmp.eq.s32.totalorder %v2144, 2
        %v2150 = vxor.u32 %v2140, 2147483648
        %v2151 = vsel %vm2149, %v2150, %v2141
        %v2152 = vsel %vm2145, %v2148, %v2151
        %v2153 = vsel %vm2142, nan, %v2152
        %v2154 = vand.u32 2147483647, %v783
        %vm2155 = vcmp.le.f32.partialorder %v2154, 0.7853982
        %vm2156 = vcmp.lt.s32.totalorder %v783, 0
        %v2157 = vand.u32 %v783, 2139095040
        %v2158 = vshrl.u32 %v2157, 23
        %v2159 = vsub.s32 %v2158, 127
        %v2160 = vand.u32 2147483647, %v783
        %v2161 = vand.u32 %v2160, 8388607
        %v2162 = vor.u32 %v2161, 8388608
        %v2163 = vsub.s32 0, %v2162
        %v2164 = vadd.s32 %v2159, 1
        %vm2165 = vcmp.gt.s32.totalorder %v2164, 0
        %v2166 = vsel %vm2165, %v2164, 0
        %v2167 = vshrl.u32 %v2166, 5
        %v2168 = vand.u32 %v2166, 31
        %v2169 = vsub.s32 32, %v2168
        %v2170 = vshrl.u32 683565275, %v2169
        %v2171 = vshll.u32 683565275, %v2168
        %v2172 = vshrl.u32 2475754826, %v2169
        %v2173 = vor.u32 %v2171, %v2172
        %v2174 = vshll.u32 2475754826, %v2168
        %v2175 = vshrl.u32 2131351028, %v2169
        %v2176 = vor.u32 %v2174, %v2175
        %v2177 = vshll.u32 2131351028, %v2168
        %v2178 = vshrl.u32 2102212464, %v2169
        %v2179 = vor.u32 %v2177, %v2178
        %v2180 = vshll.u32 2102212464, %v2168
        %v2181 = vshrl.u32 920167782, %v2169
        %v2182 = vor.u32 %v2180, %v2181
        %v2183 = vshll.u32 920167782, %v2168
        %v2184 = vshrl.u32 1326507024, %v2169
        %v2185 = vor.u32 %v2183, %v2184
        %vm2186 = vcmp.lt.s32.totalorder %v2167, 1
        %vm2187 = vcmp.lt.s32.totalorder %v2167, 2
        %vm2188 = vcmp.lt.s32.totalorder %v2167, 3
        %vm2189 = vcmp.lt.s32.totalorder %v2167, 4
        %v2190 = vsel %vm2186, %v2170, %v2173
        %v2191 = vsel %vm2189, %v2179, 2102212464
        %v2192 = vsel %vm2188, %v2176, %v2191
        %v2193 = vsel %vm2187, %v2190, %v2192
        %v2194 = vsel %vm2186, %v2173, %v2176
        %v2195 = vsel %vm2189, %v2182, 920167782
        %v2196 = vsel %vm2188, %v2179, %v2195
        %v2197 = vsel %vm2187, %v2194, %v2196
        %v2198 = vsel %vm2186, %v2176, %v2179
        %v2199 = vsel %vm2189, %v2185, 1326507024
        %v2200 = vsel %vm2188, %v2182, %v2199
        %v2201 = vsel %vm2187, %v2198, %v2200
        %v2202 = vshll.u32 %v2162, 8
        %v2203 = vmul.u32.u64.compose %v2202, %v2201
        %v2204 = vextract.low.u32 %v2203
        %v2205 = vextract.high.u32 %v2203
        %v2206 = vmul.u32.u64.compose %v2202, %v2197
        %v2207 = vextract.low.u32 %v2206
        %v2208 = vextract.high.u32 %v2206
        %v2209 = vmul.u32 %v2202, %v2193
        %v2210 = vadd.s32 %v2205, %v2207
        %vm2211 = vc.u32 %v2205, %v2207
        %v2212 = vadd.s32 %v2208, 1
        %v2213 = vsel %vm2211, %v2212, %v2208
        %v2214 = vadd.s32 %v2209, %v2213
        %v2215 = vadd.s32 %v2214, 536870912
        %v2216 = vshrl.u32 %v2215, 30
        %v2217 = vshll.u32 %v2216, 30
        %v2218 = vsub.s32 %v2214, %v2217
        %vm2219 = vcmp.lt.s32.totalorder %v2218, 0
        %v2220 = vsub.s32 0, %v2218
        %v2221 = vsel %vm2219, %v2220, %v2218
        %v2222 = vclz %v2221
        %v2223 = vsub.s32 %v2222, 2
        %vm2224 = vcmp.gt.s32.totalorder 0, %v2223
        %v2225 = vsel %vm2224, 0, %v2223
        %v2226 = vsub.s32 32, %v2225
        %v2227 = vshll.u32 %v2218, %v2225
        %v2228 = vshrl.u32 %v2210, %v2226
        %v2229 = vor.u32 %v2227, %v2228
        %v2230 = vsub.s32 4294967266, %v2225
        %v2231 = vadd.s32 %v2230, 127
        %v2232 = vshll.u32 %v2231, 23
        %v2233 = vor.u32 4788187, %v2232
        %v2234 = vand.u32 2147483647, %v2233
        %v2236 = vcvt.s32.f32 %v2229
        %v2237 = vmul.f32 %v2236, %v2234
        %v2238 = vxor.u32 %v2237, 2147483648
        %v2239 = vsel %vm2156, %v2238, %v2237
        %v2240 = vsub.s32 4, %v2216
        %v2241 = vsel %vm2156, %v2240, %v2216
        %v2242 = vsel %vm2155, %v783, %v2239
        %v2243 = vsel %vm2155, 0, %v2241
        %v2244 = vcosq.f32.pop %v2242
        %v2245 = vsinq.f32.pop %v2242
        %vm2246 = vweird.f32 %v783
        %v2247 = vadd.s32 %v2243, 3
        %v2248 = vand.u32 %v2247, 3
        %vm2249 = vcmp.lt.s32.totalorder %v2248, 2
        %vm2250 = vcmp.eq.s32.totalorder %v2248, 0
        %v2251 = vxor.u32 %v2245, 2147483648
        %v2252 = vsel %vm2250, %v2244, %v2251
        %vm2253 = vcmp.eq.s32.totalorder %v2248, 2
        %v2254 = vxor.u32 %v2244, 2147483648
        %v2255 = vsel %vm2253, %v2254, %v2245
        %v2256 = vsel %vm2249, %v2252, %v2255
        %v2257 = vsel %vm2246, nan, %v2256
        %v2258 = vand.u32 2147483647, %v784
        %vm2259 = vcmp.le.f32.partialorder %v2258, 0.7853982
        %vm2260 = vcmp.lt.s32.totalorder %v784, 0
        %v2261 = vand.u32 %v784, 2139095040
        %v2262 = vshrl.u32 %v2261, 23
        %v2263 = vsub.s32 %v2262, 127
        %v2264 = vand.u32 2147483647, %v784
        %v2265 = vand.u32 %v2264, 8388607
        %v2266 = vor.u32 %v2265, 8388608
        %v2267 = vsub.s32 0, %v2266
        %v2268 = vadd.s32 %v2263, 1
        %vm2269 = vcmp.gt.s32.totalorder %v2268, 0
        %v2270 = vsel %vm2269, %v2268, 0
        %v2271 = vshrl.u32 %v2270, 5
        %v2272 = vand.u32 %v2270, 31
        %v2273 = vsub.s32 32, %v2272
        %v2274 = vshrl.u32 683565275, %v2273
        %v2275 = vshll.u32 683565275, %v2272
        %v2276 = vshrl.u32 2475754826, %v2273
        %v2277 = vor.u32 %v2275, %v2276
        %v2278 = vshll.u32 2475754826, %v2272
        %v2279 = vshrl.u32 2131351028, %v2273
        %v2280 = vor.u32 %v2278, %v2279
        %v2281 = vshll.u32 2131351028, %v2272
        %v2282 = vshrl.u32 2102212464, %v2273
        %v2283 = vor.u32 %v2281, %v2282
        %v2284 = vshll.u32 2102212464, %v2272
        %v2285 = vshrl.u32 920167782, %v2273
        %v2286 = vor.u32 %v2284, %v2285
        %v2287 = vshll.u32 920167782, %v2272
        %v2288 = vshrl.u32 1326507024, %v2273
        %v2289 = vor.u32 %v2287, %v2288
        %vm2290 = vcmp.lt.s32.totalorder %v2271, 1
        %vm2291 = vcmp.lt.s32.totalorder %v2271, 2
        %vm2292 = vcmp.lt.s32.totalorder %v2271, 3
        %vm2293 = vcmp.lt.s32.totalorder %v2271, 4
        %v2294 = vsel %vm2290, %v2274, %v2277
        %v2295 = vsel %vm2293, %v2283, 2102212464
        %v2296 = vsel %vm2292, %v2280, %v2295
        %v2297 = vsel %vm2291, %v2294, %v2296
        %v2298 = vsel %vm2290, %v2277, %v2280
        %v2299 = vsel %vm2293, %v2286, 920167782
        %v2300 = vsel %vm2292, %v2283, %v2299
        %v2301 = vsel %vm2291, %v2298, %v2300
        %v2302 = vsel %vm2290, %v2280, %v2283
        %v2303 = vsel %vm2293, %v2289, 1326507024
        %v2304 = vsel %vm2292, %v2286, %v2303
        %v2305 = vsel %vm2291, %v2302, %v2304
        %v2306 = vshll.u32 %v2266, 8
        %v2307 = vmul.u32.u64.compose %v2306, %v2305
        %v2308 = vextract.low.u32 %v2307
        %v2309 = vextract.high.u32 %v2307
        %v2310 = vmul.u32.u64.compose %v2306, %v2301
        %v2311 = vextract.low.u32 %v2310
        %v2312 = vextract.high.u32 %v2310
        %v2313 = vmul.u32 %v2306, %v2297
        %v2314 = vadd.s32 %v2309, %v2311
        %vm2315 = vc.u32 %v2309, %v2311
        %v2316 = vadd.s32 %v2312, 1
        %v2317 = vsel %vm2315, %v2316, %v2312
        %v2318 = vadd.s32 %v2313, %v2317
        %v2319 = vadd.s32 %v2318, 536870912
        %v2320 = vshrl.u32 %v2319, 30
        %v2321 = vshll.u32 %v2320, 30
        %v2322 = vsub.s32 %v2318, %v2321
        %vm2323 = vcmp.lt.s32.totalorder %v2322, 0
        %v2324 = vsub.s32 0, %v2322
        %v2325 = vsel %vm2323, %v2324, %v2322
        %v2326 = vclz %v2325
        %v2327 = vsub.s32 %v2326, 2
        %vm2328 = vcmp.gt.s32.totalorder 0, %v2327
        %v2329 = vsel %vm2328, 0, %v2327
        %v2330 = vsub.s32 32, %v2329
        %v2331 = vshll.u32 %v2322, %v2329
        %v2332 = vshrl.u32 %v2314, %v2330
        %v2333 = vor.u32 %v2331, %v2332
        %v2334 = vsub.s32 4294967266, %v2329
        %v2335 = vadd.s32 %v2334, 127
        %v2336 = vshll.u32 %v2335, 23
        %v2337 = vor.u32 4788187, %v2336
        %v2338 = vand.u32 2147483647, %v2337
        %v2340 = vcvt.s32.f32 %v2333
        %v2341 = vmul.f32 %v2340, %v2338
        %v2342 = vxor.u32 %v2341, 2147483648
        %v2343 = vsel %vm2260, %v2342, %v2341
        %v2344 = vsub.s32 4, %v2320
        %v2345 = vsel %vm2260, %v2344, %v2320
        %v2346 = vsel %vm2259, %v784, %v2343
        %v2347 = vsel %vm2259, 0, %v2345
        %v2348 = vcosq.f32.pop %v2346
        %v2349 = vsinq.f32.pop %v2346
        %vm2350 = vweird.f32 %v784
        %v2351 = vadd.s32 %v2347, 3
        %v2352 = vand.u32 %v2351, 3
        %vm2353 = vcmp.lt.s32.totalorder %v2352, 2
        %vm2354 = vcmp.eq.s32.totalorder %v2352, 0
        %v2355 = vxor.u32 %v2349, 2147483648
        %v2356 = vsel %vm2354, %v2348, %v2355
        %vm2357 = vcmp.eq.s32.totalorder %v2352, 2
        %v2358 = vxor.u32 %v2348, 2147483648
        %v2359 = vsel %vm2357, %v2358, %v2349
        %v2360 = vsel %vm2353, %v2356, %v2359
        %v2361 = vsel %vm2350, nan, %v2360
        %v2362 = vand.u32 2147483647, %v785
        %vm2363 = vcmp.le.f32.partialorder %v2362, 0.7853982
        %vm2364 = vcmp.lt.s32.totalorder %v785, 0
        %v2365 = vand.u32 %v785, 2139095040
        %v2366 = vshrl.u32 %v2365, 23
        %v2367 = vsub.s32 %v2366, 127
        %v2368 = vand.u32 2147483647, %v785
        %v2369 = vand.u32 %v2368, 8388607
        %v2370 = vor.u32 %v2369, 8388608
        %v2371 = vsub.s32 0, %v2370
        %v2372 = vadd.s32 %v2367, 1
        %vm2373 = vcmp.gt.s32.totalorder %v2372, 0
        %v2374 = vsel %vm2373, %v2372, 0
        %v2375 = vshrl.u32 %v2374, 5
        %v2376 = vand.u32 %v2374, 31
        %v2377 = vsub.s32 32, %v2376
        %v2378 = vshrl.u32 683565275, %v2377
        %v2379 = vshll.u32 683565275, %v2376
        %v2380 = vshrl.u32 2475754826, %v2377
        %v2381 = vor.u32 %v2379, %v2380
        %v2382 = vshll.u32 2475754826, %v2376
        %v2383 = vshrl.u32 2131351028, %v2377
        %v2384 = vor.u32 %v2382, %v2383
        %v2385 = vshll.u32 2131351028, %v2376
        %v2386 = vshrl.u32 2102212464, %v2377
        %v2387 = vor.u32 %v2385, %v2386
        %v2388 = vshll.u32 2102212464, %v2376
        %v2389 = vshrl.u32 920167782, %v2377
        %v2390 = vor.u32 %v2388, %v2389
        %v2391 = vshll.u32 920167782, %v2376
        %v2392 = vshrl.u32 1326507024, %v2377
        %v2393 = vor.u32 %v2391, %v2392
        %vm2394 = vcmp.lt.s32.totalorder %v2375, 1
        %vm2395 = vcmp.lt.s32.totalorder %v2375, 2
        %vm2396 = vcmp.lt.s32.totalorder %v2375, 3
        %vm2397 = vcmp.lt.s32.totalorder %v2375, 4
        %v2398 = vsel %vm2394, %v2378, %v2381
        %v2399 = vsel %vm2397, %v2387, 2102212464
        %v2400 = vsel %vm2396, %v2384, %v2399
        %v2401 = vsel %vm2395, %v2398, %v2400
        %v2402 = vsel %vm2394, %v2381, %v2384
        %v2403 = vsel %vm2397, %v2390, 920167782
        %v2404 = vsel %vm2396, %v2387, %v2403
        %v2405 = vsel %vm2395, %v2402, %v2404
        %v2406 = vsel %vm2394, %v2384, %v2387
        %v2407 = vsel %vm2397, %v2393, 1326507024
        %v2408 = vsel %vm2396, %v2390, %v2407
        %v2409 = vsel %vm2395, %v2406, %v2408
        %v2410 = vshll.u32 %v2370, 8
        %v2411 = vmul.u32.u64.compose %v2410, %v2409
        %v2412 = vextract.low.u32 %v2411
        %v2413 = vextract.high.u32 %v2411
        %v2414 = vmul.u32.u64.compose %v2410, %v2405
        %v2415 = vextract.low.u32 %v2414
        %v2416 = vextract.high.u32 %v2414
        %v2417 = vmul.u32 %v2410, %v2401
        %v2418 = vadd.s32 %v2413, %v2415
        %vm2419 = vc.u32 %v2413, %v2415
        %v2420 = vadd.s32 %v2416, 1
        %v2421 = vsel %vm2419, %v2420, %v2416
        %v2422 = vadd.s32 %v2417, %v2421
        %v2423 = vadd.s32 %v2422, 536870912
        %v2424 = vshrl.u32 %v2423, 30
        %v2425 = vshll.u32 %v2424, 30
        %v2426 = vsub.s32 %v2422, %v2425
        %vm2427 = vcmp.lt.s32.totalorder %v2426, 0
        %v2428 = vsub.s32 0, %v2426
        %v2429 = vsel %vm2427, %v2428, %v2426
        %v2430 = vclz %v2429
        %v2431 = vsub.s32 %v2430, 2
        %vm2432 = vcmp.gt.s32.totalorder 0, %v2431
        %v2433 = vsel %vm2432, 0, %v2431
        %v2434 = vsub.s32 32, %v2433
        %v2435 = vshll.u32 %v2426, %v2433
        %v2436 = vshrl.u32 %v2418, %v2434
        %v2437 = vor.u32 %v2435, %v2436
        %v2438 = vsub.s32 4294967266, %v2433
        %v2439 = vadd.s32 %v2438, 127
        %v2440 = vshll.u32 %v2439, 23
        %v2441 = vor.u32 4788187, %v2440
        %v2442 = vand.u32 2147483647, %v2441
        %v2444 = vcvt.s32.f32 %v2437
        %v2445 = vmul.f32 %v2444, %v2442
        %v2446 = vxor.u32 %v2445, 2147483648
        %v2447 = vsel %vm2364, %v2446, %v2445
        %v2448 = vsub.s32 4, %v2424
        %v2449 = vsel %vm2364, %v2448, %v2424
        %v2450 = vsel %vm2363, %v785, %v2447
        %v2451 = vsel %vm2363, 0, %v2449
        %v2452 = vcosq.f32.pop %v2450
        %v2453 = vsinq.f32.pop %v2450
        %vm2454 = vweird.f32 %v785
        %v2455 = vadd.s32 %v2451, 3
        %v2456 = vand.u32 %v2455, 3
        %vm2457 = vcmp.lt.s32.totalorder %v2456, 2
        %vm2458 = vcmp.eq.s32.totalorder %v2456, 0
        %v2459 = vxor.u32 %v2453, 2147483648
        %v2460 = vsel %vm2458, %v2452, %v2459
        %vm2461 = vcmp.eq.s32.totalorder %v2456, 2
        %v2462 = vxor.u32 %v2452, 2147483648
        %v2463 = vsel %vm2461, %v2462, %v2453
        %v2464 = vsel %vm2457, %v2460, %v2463
        %v2465 = vsel %vm2454, nan, %v2464
        %v2466 = vand.u32 2147483647, %v786
        %vm2467 = vcmp.le.f32.partialorder %v2466, 0.7853982
        %vm2468 = vcmp.lt.s32.totalorder %v786, 0
        %v2469 = vand.u32 %v786, 2139095040
        %v2470 = vshrl.u32 %v2469, 23
        %v2471 = vsub.s32 %v2470, 127
        %v2472 = vand.u32 2147483647, %v786
        %v2473 = vand.u32 %v2472, 8388607
        %v2474 = vor.u32 %v2473, 8388608
        %v2475 = vsub.s32 0, %v2474
        %v2476 = vadd.s32 %v2471, 1
        %vm2477 = vcmp.gt.s32.totalorder %v2476, 0
        %v2478 = vsel %vm2477, %v2476, 0
        %v2479 = vshrl.u32 %v2478, 5
        %v2480 = vand.u32 %v2478, 31
        %v2481 = vsub.s32 32, %v2480
        %v2482 = vshrl.u32 683565275, %v2481
        %v2483 = vshll.u32 683565275, %v2480
        %v2484 = vshrl.u32 2475754826, %v2481
        %v2485 = vor.u32 %v2483, %v2484
        %v2486 = vshll.u32 2475754826, %v2480
        %v2487 = vshrl.u32 2131351028, %v2481
        %v2488 = vor.u32 %v2486, %v2487
        %v2489 = vshll.u32 2131351028, %v2480
        %v2490 = vshrl.u32 2102212464, %v2481
        %v2491 = vor.u32 %v2489, %v2490
        %v2492 = vshll.u32 2102212464, %v2480
        %v2493 = vshrl.u32 920167782, %v2481
        %v2494 = vor.u32 %v2492, %v2493
        %v2495 = vshll.u32 920167782, %v2480
        %v2496 = vshrl.u32 1326507024, %v2481
        %v2497 = vor.u32 %v2495, %v2496
        %vm2498 = vcmp.lt.s32.totalorder %v2479, 1
        %vm2499 = vcmp.lt.s32.totalorder %v2479, 2
        %vm2500 = vcmp.lt.s32.totalorder %v2479, 3
        %vm2501 = vcmp.lt.s32.totalorder %v2479, 4
        %v2502 = vsel %vm2498, %v2482, %v2485
        %v2503 = vsel %vm2501, %v2491, 2102212464
        %v2504 = vsel %vm2500, %v2488, %v2503
        %v2505 = vsel %vm2499, %v2502, %v2504
        %v2506 = vsel %vm2498, %v2485, %v2488
        %v2507 = vsel %vm2501, %v2494, 920167782
        %v2508 = vsel %vm2500, %v2491, %v2507
        %v2509 = vsel %vm2499, %v2506, %v2508
        %v2510 = vsel %vm2498, %v2488, %v2491
        %v2511 = vsel %vm2501, %v2497, 1326507024
        %v2512 = vsel %vm2500, %v2494, %v2511
        %v2513 = vsel %vm2499, %v2510, %v2512
        %v2514 = vshll.u32 %v2474, 8
        %v2515 = vmul.u32.u64.compose %v2514, %v2513
        %v2516 = vextract.low.u32 %v2515
        %v2517 = vextract.high.u32 %v2515
        %v2518 = vmul.u32.u64.compose %v2514, %v2509
        %v2519 = vextract.low.u32 %v2518
        %v2520 = vextract.high.u32 %v2518
        %v2521 = vmul.u32 %v2514, %v2505
        %v2522 = vadd.s32 %v2517, %v2519
        %vm2523 = vc.u32 %v2517, %v2519
        %v2524 = vadd.s32 %v2520, 1
        %v2525 = vsel %vm2523, %v2524, %v2520
        %v2526 = vadd.s32 %v2521, %v2525
        %v2527 = vadd.s32 %v2526, 536870912
        %v2528 = vshrl.u32 %v2527, 30
        %v2529 = vshll.u32 %v2528, 30
        %v2530 = vsub.s32 %v2526, %v2529
        %vm2531 = vcmp.lt.s32.totalorder %v2530, 0
        %v2532 = vsub.s32 0, %v2530
        %v2533 = vsel %vm2531, %v2532, %v2530
        %v2534 = vclz %v2533
        %v2535 = vsub.s32 %v2534, 2
        %vm2536 = vcmp.gt.s32.totalorder 0, %v2535
        %v2537 = vsel %vm2536, 0, %v2535
        %v2538 = vsub.s32 32, %v2537
        %v2539 = vshll.u32 %v2530, %v2537
        %v2540 = vshrl.u32 %v2522, %v2538
        %v2541 = vor.u32 %v2539, %v2540
        %v2542 = vsub.s32 4294967266, %v2537
        %v2543 = vadd.s32 %v2542, 127
        %v2544 = vshll.u32 %v2543, 23
        %v2545 = vor.u32 4788187, %v2544
        %v2546 = vand.u32 2147483647, %v2545
        %v2548 = vcvt.s32.f32 %v2541
        %v2549 = vmul.f32 %v2548, %v2546
        %v2550 = vxor.u32 %v2549, 2147483648
        %v2551 = vsel %vm2468, %v2550, %v2549
        %v2552 = vsub.s32 4, %v2528
        %v2553 = vsel %vm2468, %v2552, %v2528
        %v2554 = vsel %vm2467, %v786, %v2551
        %v2555 = vsel %vm2467, 0, %v2553
        %v2556 = vcosq.f32.pop %v2554
        %v2557 = vsinq.f32.pop %v2554
        %vm2558 = vweird.f32 %v786
        %v2559 = vadd.s32 %v2555, 3
        %v2560 = vand.u32 %v2559, 3
        %vm2561 = vcmp.lt.s32.totalorder %v2560, 2
        %vm2562 = vcmp.eq.s32.totalorder %v2560, 0
        %v2563 = vxor.u32 %v2557, 2147483648
        %v2564 = vsel %vm2562, %v2556, %v2563
        %vm2565 = vcmp.eq.s32.totalorder %v2560, 2
        %v2566 = vxor.u32 %v2556, 2147483648
        %v2567 = vsel %vm2565, %v2566, %v2557
        %v2568 = vsel %vm2561, %v2564, %v2567
        %v2569 = vsel %vm2558, nan, %v2568
        %v2570 = vand.u32 2147483647, %v787
        %vm2571 = vcmp.le.f32.partialorder %v2570, 0.7853982
        %vm2572 = vcmp.lt.s32.totalorder %v787, 0
        %v2573 = vand.u32 %v787, 2139095040
        %v2574 = vshrl.u32 %v2573, 23
        %v2575 = vsub.s32 %v2574, 127
        %v2576 = vand.u32 2147483647, %v787
        %v2577 = vand.u32 %v2576, 8388607
        %v2578 = vor.u32 %v2577, 8388608
        %v2579 = vsub.s32 0, %v2578
        %v2580 = vadd.s32 %v2575, 1
        %vm2581 = vcmp.gt.s32.totalorder %v2580, 0
        %v2582 = vsel %vm2581, %v2580, 0
        %v2583 = vshrl.u32 %v2582, 5
        %v2584 = vand.u32 %v2582, 31
        %v2585 = vsub.s32 32, %v2584
        %v2586 = vshrl.u32 683565275, %v2585
        %v2587 = vshll.u32 683565275, %v2584
        %v2588 = vshrl.u32 2475754826, %v2585
        %v2589 = vor.u32 %v2587, %v2588
        %v2590 = vshll.u32 2475754826, %v2584
        %v2591 = vshrl.u32 2131351028, %v2585
        %v2592 = vor.u32 %v2590, %v2591
        %v2593 = vshll.u32 2131351028, %v2584
        %v2594 = vshrl.u32 2102212464, %v2585
        %v2595 = vor.u32 %v2593, %v2594
        %v2596 = vshll.u32 2102212464, %v2584
        %v2597 = vshrl.u32 920167782, %v2585
        %v2598 = vor.u32 %v2596, %v2597
        %v2599 = vshll.u32 920167782, %v2584
        %v2600 = vshrl.u32 1326507024, %v2585
        %v2601 = vor.u32 %v2599, %v2600
        %vm2602 = vcmp.lt.s32.totalorder %v2583, 1
        %vm2603 = vcmp.lt.s32.totalorder %v2583, 2
        %vm2604 = vcmp.lt.s32.totalorder %v2583, 3
        %vm2605 = vcmp.lt.s32.totalorder %v2583, 4
        %v2606 = vsel %vm2602, %v2586, %v2589
        %v2607 = vsel %vm2605, %v2595, 2102212464
        %v2608 = vsel %vm2604, %v2592, %v2607
        %v2609 = vsel %vm2603, %v2606, %v2608
        %v2610 = vsel %vm2602, %v2589, %v2592
        %v2611 = vsel %vm2605, %v2598, 920167782
        %v2612 = vsel %vm2604, %v2595, %v2611
        %v2613 = vsel %vm2603, %v2610, %v2612
        %v2614 = vsel %vm2602, %v2592, %v2595
        %v2615 = vsel %vm2605, %v2601, 1326507024
        %v2616 = vsel %vm2604, %v2598, %v2615
        %v2617 = vsel %vm2603, %v2614, %v2616
        %v2618 = vshll.u32 %v2578, 8
        %v2619 = vmul.u32.u64.compose %v2618, %v2617
        %v2620 = vextract.low.u32 %v2619
        %v2621 = vextract.high.u32 %v2619
        %v2622 = vmul.u32.u64.compose %v2618, %v2613
        %v2623 = vextract.low.u32 %v2622
        %v2624 = vextract.high.u32 %v2622
        %v2625 = vmul.u32 %v2618, %v2609
        %v2626 = vadd.s32 %v2621, %v2623
        %vm2627 = vc.u32 %v2621, %v2623
        %v2628 = vadd.s32 %v2624, 1
        %v2629 = vsel %vm2627, %v2628, %v2624
        %v2630 = vadd.s32 %v2625, %v2629
        %v2631 = vadd.s32 %v2630, 536870912
        %v2632 = vshrl.u32 %v2631, 30
        %v2633 = vshll.u32 %v2632, 30
        %v2634 = vsub.s32 %v2630, %v2633
        %vm2635 = vcmp.lt.s32.totalorder %v2634, 0
        %v2636 = vsub.s32 0, %v2634
        %v2637 = vsel %vm2635, %v2636, %v2634
        %v2638 = vclz %v2637
        %v2639 = vsub.s32 %v2638, 2
        %vm2640 = vcmp.gt.s32.totalorder 0, %v2639
        %v2641 = vsel %vm2640, 0, %v2639
        %v2642 = vsub.s32 32, %v2641
        %v2643 = vshll.u32 %v2634, %v2641
        %v2644 = vshrl.u32 %v2626, %v2642
        %v2645 = vor.u32 %v2643, %v2644
        %v2646 = vsub.s32 4294967266, %v2641
        %v2647 = vadd.s32 %v2646, 127
        %v2648 = vshll.u32 %v2647, 23
        %v2649 = vor.u32 4788187, %v2648
        %v2650 = vand.u32 2147483647, %v2649
        %v2652 = vcvt.s32.f32 %v2645
        %v2653 = vmul.f32 %v2652, %v2650
        %v2654 = vxor.u32 %v2653, 2147483648
        %v2655 = vsel %vm2572, %v2654, %v2653
        %v2656 = vsub.s32 4, %v2632
        %v2657 = vsel %vm2572, %v2656, %v2632
        %v2658 = vsel %vm2571, %v787, %v2655
        %v2659 = vsel %vm2571, 0, %v2657
        %v2660 = vcosq.f32.pop %v2658
        %v2661 = vsinq.f32.pop %v2658
        %vm2662 = vweird.f32 %v787
        %v2663 = vadd.s32 %v2659, 3
        %v2664 = vand.u32 %v2663, 3
        %vm2665 = vcmp.lt.s32.totalorder %v2664, 2
        %vm2666 = vcmp.eq.s32.totalorder %v2664, 0
        %v2667 = vxor.u32 %v2661, 2147483648
        %v2668 = vsel %vm2666, %v2660, %v2667
        %vm2669 = vcmp.eq.s32.totalorder %v2664, 2
        %v2670 = vxor.u32 %v2660, 2147483648
        %v2671 = vsel %vm2669, %v2670, %v2661
        %v2672 = vsel %vm2665, %v2668, %v2671
        %v2673 = vsel %vm2662, nan, %v2672
        %v2674 = vand.u32 2147483647, %v788
        %vm2675 = vcmp.le.f32.partialorder %v2674, 0.7853982
        %vm2676 = vcmp.lt.s32.totalorder %v788, 0
        %v2677 = vand.u32 %v788, 2139095040
        %v2678 = vshrl.u32 %v2677, 23
        %v2679 = vsub.s32 %v2678, 127
        %v2680 = vand.u32 2147483647, %v788
        %v2681 = vand.u32 %v2680, 8388607
        %v2682 = vor.u32 %v2681, 8388608
        %v2683 = vsub.s32 0, %v2682
        %v2684 = vadd.s32 %v2679, 1
        %vm2685 = vcmp.gt.s32.totalorder %v2684, 0
        %v2686 = vsel %vm2685, %v2684, 0
        %v2687 = vshrl.u32 %v2686, 5
        %v2688 = vand.u32 %v2686, 31
        %v2689 = vsub.s32 32, %v2688
        %v2690 = vshrl.u32 683565275, %v2689
        %v2691 = vshll.u32 683565275, %v2688
        %v2692 = vshrl.u32 2475754826, %v2689
        %v2693 = vor.u32 %v2691, %v2692
        %v2694 = vshll.u32 2475754826, %v2688
        %v2695 = vshrl.u32 2131351028, %v2689
        %v2696 = vor.u32 %v2694, %v2695
        %v2697 = vshll.u32 2131351028, %v2688
        %v2698 = vshrl.u32 2102212464, %v2689
        %v2699 = vor.u32 %v2697, %v2698
        %v2700 = vshll.u32 2102212464, %v2688
        %v2701 = vshrl.u32 920167782, %v2689
        %v2702 = vor.u32 %v2700, %v2701
        %v2703 = vshll.u32 920167782, %v2688
        %v2704 = vshrl.u32 1326507024, %v2689
        %v2705 = vor.u32 %v2703, %v2704
        %vm2706 = vcmp.lt.s32.totalorder %v2687, 1
        %vm2707 = vcmp.lt.s32.totalorder %v2687, 2
        %vm2708 = vcmp.lt.s32.totalorder %v2687, 3
        %vm2709 = vcmp.lt.s32.totalorder %v2687, 4
        %v2710 = vsel %vm2706, %v2690, %v2693
        %v2711 = vsel %vm2709, %v2699, 2102212464
        %v2712 = vsel %vm2708, %v2696, %v2711
        %v2713 = vsel %vm2707, %v2710, %v2712
        %v2714 = vsel %vm2706, %v2693, %v2696
        %v2715 = vsel %vm2709, %v2702, 920167782
        %v2716 = vsel %vm2708, %v2699, %v2715
        %v2717 = vsel %vm2707, %v2714, %v2716
        %v2718 = vsel %vm2706, %v2696, %v2699
        %v2719 = vsel %vm2709, %v2705, 1326507024
        %v2720 = vsel %vm2708, %v2702, %v2719
        %v2721 = vsel %vm2707, %v2718, %v2720
        %v2722 = vshll.u32 %v2682, 8
        %v2723 = vmul.u32.u64.compose %v2722, %v2721
        %v2724 = vextract.low.u32 %v2723
        %v2725 = vextract.high.u32 %v2723
        %v2726 = vmul.u32.u64.compose %v2722, %v2717
        %v2727 = vextract.low.u32 %v2726
        %v2728 = vextract.high.u32 %v2726
        %v2729 = vmul.u32 %v2722, %v2713
        %v2730 = vadd.s32 %v2725, %v2727
        %vm2731 = vc.u32 %v2725, %v2727
        %v2732 = vadd.s32 %v2728, 1
        %v2733 = vsel %vm2731, %v2732, %v2728
        %v2734 = vadd.s32 %v2729, %v2733
        %v2735 = vadd.s32 %v2734, 536870912
        %v2736 = vshrl.u32 %v2735, 30
        %v2737 = vshll.u32 %v2736, 30
        %v2738 = vsub.s32 %v2734, %v2737
        %vm2739 = vcmp.lt.s32.totalorder %v2738, 0
        %v2740 = vsub.s32 0, %v2738
        %v2741 = vsel %vm2739, %v2740, %v2738
        %v2742 = vclz %v2741
        %v2743 = vsub.s32 %v2742, 2
        %vm2744 = vcmp.gt.s32.totalorder 0, %v2743
        %v2745 = vsel %vm2744, 0, %v2743
        %v2746 = vsub.s32 32, %v2745
        %v2747 = vshll.u32 %v2738, %v2745
        %v2748 = vshrl.u32 %v2730, %v2746
        %v2749 = vor.u32 %v2747, %v2748
        %v2750 = vsub.s32 4294967266, %v2745
        %v2751 = vadd.s32 %v2750, 127
        %v2752 = vshll.u32 %v2751, 23
        %v2753 = vor.u32 4788187, %v2752
        %v2754 = vand.u32 2147483647, %v2753
        %v2756 = vcvt.s32.f32 %v2749
        %v2757 = vmul.f32 %v2756, %v2754
        %v2758 = vxor.u32 %v2757, 2147483648
        %v2759 = vsel %vm2676, %v2758, %v2757
        %v2760 = vsub.s32 4, %v2736
        %v2761 = vsel %vm2676, %v2760, %v2736
        %v2762 = vsel %vm2675, %v788, %v2759
        %v2763 = vsel %vm2675, 0, %v2761
        %v2764 = vcosq.f32.pop %v2762
        %v2765 = vsinq.f32.pop %v2762
        %vm2766 = vweird.f32 %v788
        %v2767 = vadd.s32 %v2763, 3
        %v2768 = vand.u32 %v2767, 3
        %vm2769 = vcmp.lt.s32.totalorder %v2768, 2
        %vm2770 = vcmp.eq.s32.totalorder %v2768, 0
        %v2771 = vxor.u32 %v2765, 2147483648
        %v2772 = vsel %vm2770, %v2764, %v2771
        %vm2773 = vcmp.eq.s32.totalorder %v2768, 2
        %v2774 = vxor.u32 %v2764, 2147483648
        %v2775 = vsel %vm2773, %v2774, %v2765
        %v2776 = vsel %vm2769, %v2772, %v2775
        %v2777 = vsel %vm2766, nan, %v2776
        %v2778 = vand.u32 2147483647, %v789
        %vm2779 = vcmp.le.f32.partialorder %v2778, 0.7853982
        %vm2780 = vcmp.lt.s32.totalorder %v789, 0
        %v2781 = vand.u32 %v789, 2139095040
        %v2782 = vshrl.u32 %v2781, 23
        %v2783 = vsub.s32 %v2782, 127
        %v2784 = vand.u32 2147483647, %v789
        %v2785 = vand.u32 %v2784, 8388607
        %v2786 = vor.u32 %v2785, 8388608
        %v2787 = vsub.s32 0, %v2786
        %v2788 = vadd.s32 %v2783, 1
        %vm2789 = vcmp.gt.s32.totalorder %v2788, 0
        %v2790 = vsel %vm2789, %v2788, 0
        %v2791 = vshrl.u32 %v2790, 5
        %v2792 = vand.u32 %v2790, 31
        %v2793 = vsub.s32 32, %v2792
        %v2794 = vshrl.u32 683565275, %v2793
        %v2795 = vshll.u32 683565275, %v2792
        %v2796 = vshrl.u32 2475754826, %v2793
        %v2797 = vor.u32 %v2795, %v2796
        %v2798 = vshll.u32 2475754826, %v2792
        %v2799 = vshrl.u32 2131351028, %v2793
        %v2800 = vor.u32 %v2798, %v2799
        %v2801 = vshll.u32 2131351028, %v2792
        %v2802 = vshrl.u32 2102212464, %v2793
        %v2803 = vor.u32 %v2801, %v2802
        %v2804 = vshll.u32 2102212464, %v2792
        %v2805 = vshrl.u32 920167782, %v2793
        %v2806 = vor.u32 %v2804, %v2805
        %v2807 = vshll.u32 920167782, %v2792
        %v2808 = vshrl.u32 1326507024, %v2793
        %v2809 = vor.u32 %v2807, %v2808
        %vm2810 = vcmp.lt.s32.totalorder %v2791, 1
        %vm2811 = vcmp.lt.s32.totalorder %v2791, 2
        %vm2812 = vcmp.lt.s32.totalorder %v2791, 3
        %vm2813 = vcmp.lt.s32.totalorder %v2791, 4
        %v2814 = vsel %vm2810, %v2794, %v2797
        %v2815 = vsel %vm2813, %v2803, 2102212464
        %v2816 = vsel %vm2812, %v2800, %v2815
        %v2817 = vsel %vm2811, %v2814, %v2816
        %v2818 = vsel %vm2810, %v2797, %v2800
        %v2819 = vsel %vm2813, %v2806, 920167782
        %v2820 = vsel %vm2812, %v2803, %v2819
        %v2821 = vsel %vm2811, %v2818, %v2820
        %v2822 = vsel %vm2810, %v2800, %v2803
        %v2823 = vsel %vm2813, %v2809, 1326507024
        %v2824 = vsel %vm2812, %v2806, %v2823
        %v2825 = vsel %vm2811, %v2822, %v2824
        %v2826 = vshll.u32 %v2786, 8
        %v2827 = vmul.u32.u64.compose %v2826, %v2825
        %v2828 = vextract.low.u32 %v2827
        %v2829 = vextract.high.u32 %v2827
        %v2830 = vmul.u32.u64.compose %v2826, %v2821
        %v2831 = vextract.low.u32 %v2830
        %v2832 = vextract.high.u32 %v2830
        %v2833 = vmul.u32 %v2826, %v2817
        %v2834 = vadd.s32 %v2829, %v2831
        %vm2835 = vc.u32 %v2829, %v2831
        %v2836 = vadd.s32 %v2832, 1
        %v2837 = vsel %vm2835, %v2836, %v2832
        %v2838 = vadd.s32 %v2833, %v2837
        %v2839 = vadd.s32 %v2838, 536870912
        %v2840 = vshrl.u32 %v2839, 30
        %v2841 = vshll.u32 %v2840, 30
        %v2842 = vsub.s32 %v2838, %v2841
        %vm2843 = vcmp.lt.s32.totalorder %v2842, 0
        %v2844 = vsub.s32 0, %v2842
        %v2845 = vsel %vm2843, %v2844, %v2842
        %v2846 = vclz %v2845
        %v2847 = vsub.s32 %v2846, 2
        %vm2848 = vcmp.gt.s32.totalorder 0, %v2847
        %v2849 = vsel %vm2848, 0, %v2847
        %v2850 = vsub.s32 32, %v2849
        %v2851 = vshll.u32 %v2842, %v2849
        %v2852 = vshrl.u32 %v2834, %v2850
        %v2853 = vor.u32 %v2851, %v2852
        %v2854 = vsub.s32 4294967266, %v2849
        %v2855 = vadd.s32 %v2854, 127
        %v2856 = vshll.u32 %v2855, 23
        %v2857 = vor.u32 4788187, %v2856
        %v2858 = vand.u32 2147483647, %v2857
        %v2860 = vcvt.s32.f32 %v2853
        %v2861 = vmul.f32 %v2860, %v2858
        %v2862 = vxor.u32 %v2861, 2147483648
        %v2863 = vsel %vm2780, %v2862, %v2861
        %v2864 = vsub.s32 4, %v2840
        %v2865 = vsel %vm2780, %v2864, %v2840
        %v2866 = vsel %vm2779, %v789, %v2863
        %v2867 = vsel %vm2779, 0, %v2865
        %v2868 = vcosq.f32.pop %v2866
        %v2869 = vsinq.f32.pop %v2866
        %vm2870 = vweird.f32 %v789
        %v2871 = vadd.s32 %v2867, 3
        %v2872 = vand.u32 %v2871, 3
        %vm2873 = vcmp.lt.s32.totalorder %v2872, 2
        %vm2874 = vcmp.eq.s32.totalorder %v2872, 0
        %v2875 = vxor.u32 %v2869, 2147483648
        %v2876 = vsel %vm2874, %v2868, %v2875
        %vm2877 = vcmp.eq.s32.totalorder %v2872, 2
        %v2878 = vxor.u32 %v2868, 2147483648
        %v2879 = vsel %vm2877, %v2878, %v2869
        %v2880 = vsel %vm2873, %v2876, %v2879
        %v2881 = vsel %vm2870, nan, %v2880
        %v2882 = vand.u32 2147483647, %v790
        %vm2883 = vcmp.le.f32.partialorder %v2882, 0.7853982
        %vm2884 = vcmp.lt.s32.totalorder %v790, 0
        %v2885 = vand.u32 %v790, 2139095040
        %v2886 = vshrl.u32 %v2885, 23
        %v2887 = vsub.s32 %v2886, 127
        %v2888 = vand.u32 2147483647, %v790
        %v2889 = vand.u32 %v2888, 8388607
        %v2890 = vor.u32 %v2889, 8388608
        %v2891 = vsub.s32 0, %v2890
        %v2892 = vadd.s32 %v2887, 1
        %vm2893 = vcmp.gt.s32.totalorder %v2892, 0
        %v2894 = vsel %vm2893, %v2892, 0
        %v2895 = vshrl.u32 %v2894, 5
        %v2896 = vand.u32 %v2894, 31
        %v2897 = vsub.s32 32, %v2896
        %v2898 = vshrl.u32 683565275, %v2897
        %v2899 = vshll.u32 683565275, %v2896
        %v2900 = vshrl.u32 2475754826, %v2897
        %v2901 = vor.u32 %v2899, %v2900
        %v2902 = vshll.u32 2475754826, %v2896
        %v2903 = vshrl.u32 2131351028, %v2897
        %v2904 = vor.u32 %v2902, %v2903
        %v2905 = vshll.u32 2131351028, %v2896
        %v2906 = vshrl.u32 2102212464, %v2897
        %v2907 = vor.u32 %v2905, %v2906
        %v2908 = vshll.u32 2102212464, %v2896
        %v2909 = vshrl.u32 920167782, %v2897
        %v2910 = vor.u32 %v2908, %v2909
        %v2911 = vshll.u32 920167782, %v2896
        %v2912 = vshrl.u32 1326507024, %v2897
        %v2913 = vor.u32 %v2911, %v2912
        %vm2914 = vcmp.lt.s32.totalorder %v2895, 1
        %vm2915 = vcmp.lt.s32.totalorder %v2895, 2
        %vm2916 = vcmp.lt.s32.totalorder %v2895, 3
        %vm2917 = vcmp.lt.s32.totalorder %v2895, 4
        %v2918 = vsel %vm2914, %v2898, %v2901
        %v2919 = vsel %vm2917, %v2907, 2102212464
        %v2920 = vsel %vm2916, %v2904, %v2919
        %v2921 = vsel %vm2915, %v2918, %v2920
        %v2922 = vsel %vm2914, %v2901, %v2904
        %v2923 = vsel %vm2917, %v2910, 920167782
        %v2924 = vsel %vm2916, %v2907, %v2923
        %v2925 = vsel %vm2915, %v2922, %v2924
        %v2926 = vsel %vm2914, %v2904, %v2907
        %v2927 = vsel %vm2917, %v2913, 1326507024
        %v2928 = vsel %vm2916, %v2910, %v2927
        %v2929 = vsel %vm2915, %v2926, %v2928
        %v2930 = vshll.u32 %v2890, 8
        %v2931 = vmul.u32.u64.compose %v2930, %v2929
        %v2932 = vextract.low.u32 %v2931
        %v2933 = vextract.high.u32 %v2931
        %v2934 = vmul.u32.u64.compose %v2930, %v2925
        %v2935 = vextract.low.u32 %v2934
        %v2936 = vextract.high.u32 %v2934
        %v2937 = vmul.u32 %v2930, %v2921
        %v2938 = vadd.s32 %v2933, %v2935
        %vm2939 = vc.u32 %v2933, %v2935
        %v2940 = vadd.s32 %v2936, 1
        %v2941 = vsel %vm2939, %v2940, %v2936
        %v2942 = vadd.s32 %v2937, %v2941
        %v2943 = vadd.s32 %v2942, 536870912
        %v2944 = vshrl.u32 %v2943, 30
        %v2945 = vshll.u32 %v2944, 30
        %v2946 = vsub.s32 %v2942, %v2945
        %vm2947 = vcmp.lt.s32.totalorder %v2946, 0
        %v2948 = vsub.s32 0, %v2946
        %v2949 = vsel %vm2947, %v2948, %v2946
        %v2950 = vclz %v2949
        %v2951 = vsub.s32 %v2950, 2
        %vm2952 = vcmp.gt.s32.totalorder 0, %v2951
        %v2953 = vsel %vm2952, 0, %v2951
        %v2954 = vsub.s32 32, %v2953
        %v2955 = vshll.u32 %v2946, %v2953
        %v2956 = vshrl.u32 %v2938, %v2954
        %v2957 = vor.u32 %v2955, %v2956
        %v2958 = vsub.s32 4294967266, %v2953
        %v2959 = vadd.s32 %v2958, 127
        %v2960 = vshll.u32 %v2959, 23
        %v2961 = vor.u32 4788187, %v2960
        %v2962 = vand.u32 2147483647, %v2961
        %v2964 = vcvt.s32.f32 %v2957
        %v2965 = vmul.f32 %v2964, %v2962
        %v2966 = vxor.u32 %v2965, 2147483648
        %v2967 = vsel %vm2884, %v2966, %v2965
        %v2968 = vsub.s32 4, %v2944
        %v2969 = vsel %vm2884, %v2968, %v2944
        %v2970 = vsel %vm2883, %v790, %v2967
        %v2971 = vsel %vm2883, 0, %v2969
        %v2972 = vcosq.f32.pop %v2970
        %v2973 = vsinq.f32.pop %v2970
        %vm2974 = vweird.f32 %v790
        %v2975 = vadd.s32 %v2971, 3
        %v2976 = vand.u32 %v2975, 3
        %vm2977 = vcmp.lt.s32.totalorder %v2976, 2
        %vm2978 = vcmp.eq.s32.totalorder %v2976, 0
        %v2979 = vxor.u32 %v2973, 2147483648
        %v2980 = vsel %vm2978, %v2972, %v2979
        %vm2981 = vcmp.eq.s32.totalorder %v2976, 2
        %v2982 = vxor.u32 %v2972, 2147483648
        %v2983 = vsel %vm2981, %v2982, %v2973
        %v2984 = vsel %vm2977, %v2980, %v2983
        %v2985 = vsel %vm2974, nan, %v2984
        %v2986 = vand.u32 2147483647, %v791
        %vm2987 = vcmp.le.f32.partialorder %v2986, 0.7853982
        %vm2988 = vcmp.lt.s32.totalorder %v791, 0
        %v2989 = vand.u32 %v791, 2139095040
        %v2990 = vshrl.u32 %v2989, 23
        %v2991 = vsub.s32 %v2990, 127
        %v2992 = vand.u32 2147483647, %v791
        %v2993 = vand.u32 %v2992, 8388607
        %v2994 = vor.u32 %v2993, 8388608
        %v2995 = vsub.s32 0, %v2994
        %v2996 = vadd.s32 %v2991, 1
        %vm2997 = vcmp.gt.s32.totalorder %v2996, 0
        %v2998 = vsel %vm2997, %v2996, 0
        %v2999 = vshrl.u32 %v2998, 5
        %v3000 = vand.u32 %v2998, 31
        %v3001 = vsub.s32 32, %v3000
        %v3002 = vshrl.u32 683565275, %v3001
        %v3003 = vshll.u32 683565275, %v3000
        %v3004 = vshrl.u32 2475754826, %v3001
        %v3005 = vor.u32 %v3003, %v3004
        %v3006 = vshll.u32 2475754826, %v3000
        %v3007 = vshrl.u32 2131351028, %v3001
        %v3008 = vor.u32 %v3006, %v3007
        %v3009 = vshll.u32 2131351028, %v3000
        %v3010 = vshrl.u32 2102212464, %v3001
        %v3011 = vor.u32 %v3009, %v3010
        %v3012 = vshll.u32 2102212464, %v3000
        %v3013 = vshrl.u32 920167782, %v3001
        %v3014 = vor.u32 %v3012, %v3013
        %v3015 = vshll.u32 920167782, %v3000
        %v3016 = vshrl.u32 1326507024, %v3001
        %v3017 = vor.u32 %v3015, %v3016
        %vm3018 = vcmp.lt.s32.totalorder %v2999, 1
        %vm3019 = vcmp.lt.s32.totalorder %v2999, 2
        %vm3020 = vcmp.lt.s32.totalorder %v2999, 3
        %vm3021 = vcmp.lt.s32.totalorder %v2999, 4
        %v3022 = vsel %vm3018, %v3002, %v3005
        %v3023 = vsel %vm3021, %v3011, 2102212464
        %v3024 = vsel %vm3020, %v3008, %v3023
        %v3025 = vsel %vm3019, %v3022, %v3024
        %v3026 = vsel %vm3018, %v3005, %v3008
        %v3027 = vsel %vm3021, %v3014, 920167782
        %v3028 = vsel %vm3020, %v3011, %v3027
        %v3029 = vsel %vm3019, %v3026, %v3028
        %v3030 = vsel %vm3018, %v3008, %v3011
        %v3031 = vsel %vm3021, %v3017, 1326507024
        %v3032 = vsel %vm3020, %v3014, %v3031
        %v3033 = vsel %vm3019, %v3030, %v3032
        %v3034 = vshll.u32 %v2994, 8
        %v3035 = vmul.u32.u64.compose %v3034, %v3033
        %v3036 = vextract.low.u32 %v3035
        %v3037 = vextract.high.u32 %v3035
        %v3038 = vmul.u32.u64.compose %v3034, %v3029
        %v3039 = vextract.low.u32 %v3038
        %v3040 = vextract.high.u32 %v3038
        %v3041 = vmul.u32 %v3034, %v3025
        %v3042 = vadd.s32 %v3037, %v3039
        %vm3043 = vc.u32 %v3037, %v3039
        %v3044 = vadd.s32 %v3040, 1
        %v3045 = vsel %vm3043, %v3044, %v3040
        %v3046 = vadd.s32 %v3041, %v3045
        %v3047 = vadd.s32 %v3046, 536870912
        %v3048 = vshrl.u32 %v3047, 30
        %v3049 = vshll.u32 %v3048, 30
        %v3050 = vsub.s32 %v3046, %v3049
        %vm3051 = vcmp.lt.s32.totalorder %v3050, 0
        %v3052 = vsub.s32 0, %v3050
        %v3053 = vsel %vm3051, %v3052, %v3050
        %v3054 = vclz %v3053
        %v3055 = vsub.s32 %v3054, 2
        %vm3056 = vcmp.gt.s32.totalorder 0, %v3055
        %v3057 = vsel %vm3056, 0, %v3055
        %v3058 = vsub.s32 32, %v3057
        %v3059 = vshll.u32 %v3050, %v3057
        %v3060 = vshrl.u32 %v3042, %v3058
        %v3061 = vor.u32 %v3059, %v3060
        %v3062 = vsub.s32 4294967266, %v3057
        %v3063 = vadd.s32 %v3062, 127
        %v3064 = vshll.u32 %v3063, 23
        %v3065 = vor.u32 4788187, %v3064
        %v3066 = vand.u32 2147483647, %v3065
        %v3068 = vcvt.s32.f32 %v3061
        %v3069 = vmul.f32 %v3068, %v3066
        %v3070 = vxor.u32 %v3069, 2147483648
        %v3071 = vsel %vm2988, %v3070, %v3069
        %v3072 = vsub.s32 4, %v3048
        %v3073 = vsel %vm2988, %v3072, %v3048
        %v3074 = vsel %vm2987, %v791, %v3071
        %v3075 = vsel %vm2987, 0, %v3073
        %v3076 = vcosq.f32.pop %v3074
        %v3077 = vsinq.f32.pop %v3074
        %vm3078 = vweird.f32 %v791
        %v3079 = vadd.s32 %v3075, 3
        %v3080 = vand.u32 %v3079, 3
        %vm3081 = vcmp.lt.s32.totalorder %v3080, 2
        %vm3082 = vcmp.eq.s32.totalorder %v3080, 0
        %v3083 = vxor.u32 %v3077, 2147483648
        %v3084 = vsel %vm3082, %v3076, %v3083
        %vm3085 = vcmp.eq.s32.totalorder %v3080, 2
        %v3086 = vxor.u32 %v3076, 2147483648
        %v3087 = vsel %vm3085, %v3086, %v3077
        %v3088 = vsel %vm3081, %v3084, %v3087
        %v3089 = vsel %vm3078, nan, %v3088
        %v3090 = vand.u32 2147483647, %v792
        %vm3091 = vcmp.le.f32.partialorder %v3090, 0.7853982
        %vm3092 = vcmp.lt.s32.totalorder %v792, 0
        %v3093 = vand.u32 %v792, 2139095040
        %v3094 = vshrl.u32 %v3093, 23
        %v3095 = vsub.s32 %v3094, 127
        %v3096 = vand.u32 2147483647, %v792
        %v3097 = vand.u32 %v3096, 8388607
        %v3098 = vor.u32 %v3097, 8388608
        %v3099 = vsub.s32 0, %v3098
        %v3100 = vadd.s32 %v3095, 1
        %vm3101 = vcmp.gt.s32.totalorder %v3100, 0
        %v3102 = vsel %vm3101, %v3100, 0
        %v3103 = vshrl.u32 %v3102, 5
        %v3104 = vand.u32 %v3102, 31
        %v3105 = vsub.s32 32, %v3104
        %v3106 = vshrl.u32 683565275, %v3105
        %v3107 = vshll.u32 683565275, %v3104
        %v3108 = vshrl.u32 2475754826, %v3105
        %v3109 = vor.u32 %v3107, %v3108
        %v3110 = vshll.u32 2475754826, %v3104
        %v3111 = vshrl.u32 2131351028, %v3105
        %v3112 = vor.u32 %v3110, %v3111
        %v3113 = vshll.u32 2131351028, %v3104
        %v3114 = vshrl.u32 2102212464, %v3105
        %v3115 = vor.u32 %v3113, %v3114
        %v3116 = vshll.u32 2102212464, %v3104
        %v3117 = vshrl.u32 920167782, %v3105
        %v3118 = vor.u32 %v3116, %v3117
        %v3119 = vshll.u32 920167782, %v3104
        %v3120 = vshrl.u32 1326507024, %v3105
        %v3121 = vor.u32 %v3119, %v3120
        %vm3122 = vcmp.lt.s32.totalorder %v3103, 1
        %vm3123 = vcmp.lt.s32.totalorder %v3103, 2
        %vm3124 = vcmp.lt.s32.totalorder %v3103, 3
        %vm3125 = vcmp.lt.s32.totalorder %v3103, 4
        %v3126 = vsel %vm3122, %v3106, %v3109
        %v3127 = vsel %vm3125, %v3115, 2102212464
        %v3128 = vsel %vm3124, %v3112, %v3127
        %v3129 = vsel %vm3123, %v3126, %v3128
        %v3130 = vsel %vm3122, %v3109, %v3112
        %v3131 = vsel %vm3125, %v3118, 920167782
        %v3132 = vsel %vm3124, %v3115, %v3131
        %v3133 = vsel %vm3123, %v3130, %v3132
        %v3134 = vsel %vm3122, %v3112, %v3115
        %v3135 = vsel %vm3125, %v3121, 1326507024
        %v3136 = vsel %vm3124, %v3118, %v3135
        %v3137 = vsel %vm3123, %v3134, %v3136
        %v3138 = vshll.u32 %v3098, 8
        %v3139 = vmul.u32.u64.compose %v3138, %v3137
        %v3140 = vextract.low.u32 %v3139
        %v3141 = vextract.high.u32 %v3139
        %v3142 = vmul.u32.u64.compose %v3138, %v3133
        %v3143 = vextract.low.u32 %v3142
        %v3144 = vextract.high.u32 %v3142
        %v3145 = vmul.u32 %v3138, %v3129
        %v3146 = vadd.s32 %v3141, %v3143
        %vm3147 = vc.u32 %v3141, %v3143
        %v3148 = vadd.s32 %v3144, 1
        %v3149 = vsel %vm3147, %v3148, %v3144
        %v3150 = vadd.s32 %v3145, %v3149
        %v3151 = vadd.s32 %v3150, 536870912
        %v3152 = vshrl.u32 %v3151, 30
        %v3153 = vshll.u32 %v3152, 30
        %v3154 = vsub.s32 %v3150, %v3153
        %vm3155 = vcmp.lt.s32.totalorder %v3154, 0
        %v3156 = vsub.s32 0, %v3154
        %v3157 = vsel %vm3155, %v3156, %v3154
        %v3158 = vclz %v3157
        %v3159 = vsub.s32 %v3158, 2
        %vm3160 = vcmp.gt.s32.totalorder 0, %v3159
        %v3161 = vsel %vm3160, 0, %v3159
        %v3162 = vsub.s32 32, %v3161
        %v3163 = vshll.u32 %v3154, %v3161
        %v3164 = vshrl.u32 %v3146, %v3162
        %v3165 = vor.u32 %v3163, %v3164
        %v3166 = vsub.s32 4294967266, %v3161
        %v3167 = vadd.s32 %v3166, 127
        %v3168 = vshll.u32 %v3167, 23
        %v3169 = vor.u32 4788187, %v3168
        %v3170 = vand.u32 2147483647, %v3169
        %v3172 = vcvt.s32.f32 %v3165
        %v3173 = vmul.f32 %v3172, %v3170
        %v3174 = vxor.u32 %v3173, 2147483648
        %v3175 = vsel %vm3092, %v3174, %v3173
        %v3176 = vsub.s32 4, %v3152
        %v3177 = vsel %vm3092, %v3176, %v3152
        %v3178 = vsel %vm3091, %v792, %v3175
        %v3179 = vsel %vm3091, 0, %v3177
        %v3180 = vcosq.f32.pop %v3178
        %v3181 = vsinq.f32.pop %v3178
        %vm3182 = vweird.f32 %v792
        %v3183 = vadd.s32 %v3179, 3
        %v3184 = vand.u32 %v3183, 3
        %vm3185 = vcmp.lt.s32.totalorder %v3184, 2
        %vm3186 = vcmp.eq.s32.totalorder %v3184, 0
        %v3187 = vxor.u32 %v3181, 2147483648
        %v3188 = vsel %vm3186, %v3180, %v3187
        %vm3189 = vcmp.eq.s32.totalorder %v3184, 2
        %v3190 = vxor.u32 %v3180, 2147483648
        %v3191 = vsel %vm3189, %v3190, %v3181
        %v3192 = vsel %vm3185, %v3188, %v3191
        %v3193 = vsel %vm3182, nan, %v3192
        %v3194 = vand.u32 2147483647, %v793
        %vm3195 = vcmp.le.f32.partialorder %v3194, 0.7853982
        %vm3196 = vcmp.lt.s32.totalorder %v793, 0
        %v3197 = vand.u32 %v793, 2139095040
        %v3198 = vshrl.u32 %v3197, 23
        %v3199 = vsub.s32 %v3198, 127
        %v3200 = vand.u32 2147483647, %v793
        %v3201 = vand.u32 %v3200, 8388607
        %v3202 = vor.u32 %v3201, 8388608
        %v3203 = vsub.s32 0, %v3202
        %v3204 = vadd.s32 %v3199, 1
        %vm3205 = vcmp.gt.s32.totalorder %v3204, 0
        %v3206 = vsel %vm3205, %v3204, 0
        %v3207 = vshrl.u32 %v3206, 5
        %v3208 = vand.u32 %v3206, 31
        %v3209 = vsub.s32 32, %v3208
        %v3210 = vshrl.u32 683565275, %v3209
        %v3211 = vshll.u32 683565275, %v3208
        %v3212 = vshrl.u32 2475754826, %v3209
        %v3213 = vor.u32 %v3211, %v3212
        %v3214 = vshll.u32 2475754826, %v3208
        %v3215 = vshrl.u32 2131351028, %v3209
        %v3216 = vor.u32 %v3214, %v3215
        %v3217 = vshll.u32 2131351028, %v3208
        %v3218 = vshrl.u32 2102212464, %v3209
        %v3219 = vor.u32 %v3217, %v3218
        %v3220 = vshll.u32 2102212464, %v3208
        %v3221 = vshrl.u32 920167782, %v3209
        %v3222 = vor.u32 %v3220, %v3221
        %v3223 = vshll.u32 920167782, %v3208
        %v3224 = vshrl.u32 1326507024, %v3209
        %v3225 = vor.u32 %v3223, %v3224
        %vm3226 = vcmp.lt.s32.totalorder %v3207, 1
        %vm3227 = vcmp.lt.s32.totalorder %v3207, 2
        %vm3228 = vcmp.lt.s32.totalorder %v3207, 3
        %vm3229 = vcmp.lt.s32.totalorder %v3207, 4
        %v3230 = vsel %vm3226, %v3210, %v3213
        %v3231 = vsel %vm3229, %v3219, 2102212464
        %v3232 = vsel %vm3228, %v3216, %v3231
        %v3233 = vsel %vm3227, %v3230, %v3232
        %v3234 = vsel %vm3226, %v3213, %v3216
        %v3235 = vsel %vm3229, %v3222, 920167782
        %v3236 = vsel %vm3228, %v3219, %v3235
        %v3237 = vsel %vm3227, %v3234, %v3236
        %v3238 = vsel %vm3226, %v3216, %v3219
        %v3239 = vsel %vm3229, %v3225, 1326507024
        %v3240 = vsel %vm3228, %v3222, %v3239
        %v3241 = vsel %vm3227, %v3238, %v3240
        %v3242 = vshll.u32 %v3202, 8
        %v3243 = vmul.u32.u64.compose %v3242, %v3241
        %v3244 = vextract.low.u32 %v3243
        %v3245 = vextract.high.u32 %v3243
        %v3246 = vmul.u32.u64.compose %v3242, %v3237
        %v3247 = vextract.low.u32 %v3246
        %v3248 = vextract.high.u32 %v3246
        %v3249 = vmul.u32 %v3242, %v3233
        %v3250 = vadd.s32 %v3245, %v3247
        %vm3251 = vc.u32 %v3245, %v3247
        %v3252 = vadd.s32 %v3248, 1
        %v3253 = vsel %vm3251, %v3252, %v3248
        %v3254 = vadd.s32 %v3249, %v3253
        %v3255 = vadd.s32 %v3254, 536870912
        %v3256 = vshrl.u32 %v3255, 30
        %v3257 = vshll.u32 %v3256, 30
        %v3258 = vsub.s32 %v3254, %v3257
        %vm3259 = vcmp.lt.s32.totalorder %v3258, 0
        %v3260 = vsub.s32 0, %v3258
        %v3261 = vsel %vm3259, %v3260, %v3258
        %v3262 = vclz %v3261
        %v3263 = vsub.s32 %v3262, 2
        %vm3264 = vcmp.gt.s32.totalorder 0, %v3263
        %v3265 = vsel %vm3264, 0, %v3263
        %v3266 = vsub.s32 32, %v3265
        %v3267 = vshll.u32 %v3258, %v3265
        %v3268 = vshrl.u32 %v3250, %v3266
        %v3269 = vor.u32 %v3267, %v3268
        %v3270 = vsub.s32 4294967266, %v3265
        %v3271 = vadd.s32 %v3270, 127
        %v3272 = vshll.u32 %v3271, 23
        %v3273 = vor.u32 4788187, %v3272
        %v3274 = vand.u32 2147483647, %v3273
        %v3276 = vcvt.s32.f32 %v3269
        %v3277 = vmul.f32 %v3276, %v3274
        %v3278 = vxor.u32 %v3277, 2147483648
        %v3279 = vsel %vm3196, %v3278, %v3277
        %v3280 = vsub.s32 4, %v3256
        %v3281 = vsel %vm3196, %v3280, %v3256
        %v3282 = vsel %vm3195, %v793, %v3279
        %v3283 = vsel %vm3195, 0, %v3281
        %v3284 = vcosq.f32.pop %v3282
        %v3285 = vsinq.f32.pop %v3282
        %vm3286 = vweird.f32 %v793
        %v3287 = vadd.s32 %v3283, 3
        %v3288 = vand.u32 %v3287, 3
        %vm3289 = vcmp.lt.s32.totalorder %v3288, 2
        %vm3290 = vcmp.eq.s32.totalorder %v3288, 0
        %v3291 = vxor.u32 %v3285, 2147483648
        %v3292 = vsel %vm3290, %v3284, %v3291
        %vm3293 = vcmp.eq.s32.totalorder %v3288, 2
        %v3294 = vxor.u32 %v3284, 2147483648
        %v3295 = vsel %vm3293, %v3294, %v3285
        %v3296 = vsel %vm3289, %v3292, %v3295
        %v3297 = vsel %vm3286, nan, %v3296
        %v3298 = vand.u32 2147483647, %v794
        %vm3299 = vcmp.le.f32.partialorder %v3298, 0.7853982
        %vm3300 = vcmp.lt.s32.totalorder %v794, 0
        %v3301 = vand.u32 %v794, 2139095040
        %v3302 = vshrl.u32 %v3301, 23
        %v3303 = vsub.s32 %v3302, 127
        %v3304 = vand.u32 2147483647, %v794
        %v3305 = vand.u32 %v3304, 8388607
        %v3306 = vor.u32 %v3305, 8388608
        %v3307 = vsub.s32 0, %v3306
        %v3308 = vadd.s32 %v3303, 1
        %vm3309 = vcmp.gt.s32.totalorder %v3308, 0
        %v3310 = vsel %vm3309, %v3308, 0
        %v3311 = vshrl.u32 %v3310, 5
        %v3312 = vand.u32 %v3310, 31
        %v3313 = vsub.s32 32, %v3312
        %v3314 = vshrl.u32 683565275, %v3313
        %v3315 = vshll.u32 683565275, %v3312
        %v3316 = vshrl.u32 2475754826, %v3313
        %v3317 = vor.u32 %v3315, %v3316
        %v3318 = vshll.u32 2475754826, %v3312
        %v3319 = vshrl.u32 2131351028, %v3313
        %v3320 = vor.u32 %v3318, %v3319
        %v3321 = vshll.u32 2131351028, %v3312
        %v3322 = vshrl.u32 2102212464, %v3313
        %v3323 = vor.u32 %v3321, %v3322
        %v3324 = vshll.u32 2102212464, %v3312
        %v3325 = vshrl.u32 920167782, %v3313
        %v3326 = vor.u32 %v3324, %v3325
        %v3327 = vshll.u32 920167782, %v3312
        %v3328 = vshrl.u32 1326507024, %v3313
        %v3329 = vor.u32 %v3327, %v3328
        %vm3330 = vcmp.lt.s32.totalorder %v3311, 1
        %vm3331 = vcmp.lt.s32.totalorder %v3311, 2
        %vm3332 = vcmp.lt.s32.totalorder %v3311, 3
        %vm3333 = vcmp.lt.s32.totalorder %v3311, 4
        %v3334 = vsel %vm3330, %v3314, %v3317
        %v3335 = vsel %vm3333, %v3323, 2102212464
        %v3336 = vsel %vm3332, %v3320, %v3335
        %v3337 = vsel %vm3331, %v3334, %v3336
        %v3338 = vsel %vm3330, %v3317, %v3320
        %v3339 = vsel %vm3333, %v3326, 920167782
        %v3340 = vsel %vm3332, %v3323, %v3339
        %v3341 = vsel %vm3331, %v3338, %v3340
        %v3342 = vsel %vm3330, %v3320, %v3323
        %v3343 = vsel %vm3333, %v3329, 1326507024
        %v3344 = vsel %vm3332, %v3326, %v3343
        %v3345 = vsel %vm3331, %v3342, %v3344
        %v3346 = vshll.u32 %v3306, 8
        %v3347 = vmul.u32.u64.compose %v3346, %v3345
        %v3348 = vextract.low.u32 %v3347
        %v3349 = vextract.high.u32 %v3347
        %v3350 = vmul.u32.u64.compose %v3346, %v3341
        %v3351 = vextract.low.u32 %v3350
        %v3352 = vextract.high.u32 %v3350
        %v3353 = vmul.u32 %v3346, %v3337
        %v3354 = vadd.s32 %v3349, %v3351
        %vm3355 = vc.u32 %v3349, %v3351
        %v3356 = vadd.s32 %v3352, 1
        %v3357 = vsel %vm3355, %v3356, %v3352
        %v3358 = vadd.s32 %v3353, %v3357
        %v3359 = vadd.s32 %v3358, 536870912
        %v3360 = vshrl.u32 %v3359, 30
        %v3361 = vshll.u32 %v3360, 30
        %v3362 = vsub.s32 %v3358, %v3361
        %vm3363 = vcmp.lt.s32.totalorder %v3362, 0
        %v3364 = vsub.s32 0, %v3362
        %v3365 = vsel %vm3363, %v3364, %v3362
        %v3366 = vclz %v3365
        %v3367 = vsub.s32 %v3366, 2
        %vm3368 = vcmp.gt.s32.totalorder 0, %v3367
        %v3369 = vsel %vm3368, 0, %v3367
        %v3370 = vsub.s32 32, %v3369
        %v3371 = vshll.u32 %v3362, %v3369
        %v3372 = vshrl.u32 %v3354, %v3370
        %v3373 = vor.u32 %v3371, %v3372
        %v3374 = vsub.s32 4294967266, %v3369
        %v3375 = vadd.s32 %v3374, 127
        %v3376 = vshll.u32 %v3375, 23
        %v3377 = vor.u32 4788187, %v3376
        %v3378 = vand.u32 2147483647, %v3377
        %v3380 = vcvt.s32.f32 %v3373
        %v3381 = vmul.f32 %v3380, %v3378
        %v3382 = vxor.u32 %v3381, 2147483648
        %v3383 = vsel %vm3300, %v3382, %v3381
        %v3384 = vsub.s32 4, %v3360
        %v3385 = vsel %vm3300, %v3384, %v3360
        %v3386 = vsel %vm3299, %v794, %v3383
        %v3387 = vsel %vm3299, 0, %v3385
        %v3388 = vcosq.f32.pop %v3386
        %v3389 = vsinq.f32.pop %v3386
        %vm3390 = vweird.f32 %v794
        %v3391 = vadd.s32 %v3387, 3
        %v3392 = vand.u32 %v3391, 3
        %vm3393 = vcmp.lt.s32.totalorder %v3392, 2
        %vm3394 = vcmp.eq.s32.totalorder %v3392, 0
        %v3395 = vxor.u32 %v3389, 2147483648
        %v3396 = vsel %vm3394, %v3388, %v3395
        %vm3397 = vcmp.eq.s32.totalorder %v3392, 2
        %v3398 = vxor.u32 %v3388, 2147483648
        %v3399 = vsel %vm3397, %v3398, %v3389
        %v3400 = vsel %vm3393, %v3396, %v3399
        %v3401 = vsel %vm3390, nan, %v3400
        %v3402 = vand.u32 2147483647, %v795
        %vm3403 = vcmp.le.f32.partialorder %v3402, 0.7853982
        %vm3404 = vcmp.lt.s32.totalorder %v795, 0
        %v3405 = vand.u32 %v795, 2139095040
        %v3406 = vshrl.u32 %v3405, 23
        %v3407 = vsub.s32 %v3406, 127
        %v3408 = vand.u32 2147483647, %v795
        %v3409 = vand.u32 %v3408, 8388607
        %v3410 = vor.u32 %v3409, 8388608
        %v3411 = vsub.s32 0, %v3410
        %v3412 = vadd.s32 %v3407, 1
        %vm3413 = vcmp.gt.s32.totalorder %v3412, 0
        %v3414 = vsel %vm3413, %v3412, 0
        %v3415 = vshrl.u32 %v3414, 5
        %v3416 = vand.u32 %v3414, 31
        %v3417 = vsub.s32 32, %v3416
        %v3418 = vshrl.u32 683565275, %v3417
        %v3419 = vshll.u32 683565275, %v3416
        %v3420 = vshrl.u32 2475754826, %v3417
        %v3421 = vor.u32 %v3419, %v3420
        %v3422 = vshll.u32 2475754826, %v3416
        %v3423 = vshrl.u32 2131351028, %v3417
        %v3424 = vor.u32 %v3422, %v3423
        %v3425 = vshll.u32 2131351028, %v3416
        %v3426 = vshrl.u32 2102212464, %v3417
        %v3427 = vor.u32 %v3425, %v3426
        %v3428 = vshll.u32 2102212464, %v3416
        %v3429 = vshrl.u32 920167782, %v3417
        %v3430 = vor.u32 %v3428, %v3429
        %v3431 = vshll.u32 920167782, %v3416
        %v3432 = vshrl.u32 1326507024, %v3417
        %v3433 = vor.u32 %v3431, %v3432
        %vm3434 = vcmp.lt.s32.totalorder %v3415, 1
        %vm3435 = vcmp.lt.s32.totalorder %v3415, 2
        %vm3436 = vcmp.lt.s32.totalorder %v3415, 3
        %vm3437 = vcmp.lt.s32.totalorder %v3415, 4
        %v3438 = vsel %vm3434, %v3418, %v3421
        %v3439 = vsel %vm3437, %v3427, 2102212464
        %v3440 = vsel %vm3436, %v3424, %v3439
        %v3441 = vsel %vm3435, %v3438, %v3440
        %v3442 = vsel %vm3434, %v3421, %v3424
        %v3443 = vsel %vm3437, %v3430, 920167782
        %v3444 = vsel %vm3436, %v3427, %v3443
        %v3445 = vsel %vm3435, %v3442, %v3444
        %v3446 = vsel %vm3434, %v3424, %v3427
        %v3447 = vsel %vm3437, %v3433, 1326507024
        %v3448 = vsel %vm3436, %v3430, %v3447
        %v3449 = vsel %vm3435, %v3446, %v3448
        %v3450 = vshll.u32 %v3410, 8
        %v3451 = vmul.u32.u64.compose %v3450, %v3449
        %v3452 = vextract.low.u32 %v3451
        %v3453 = vextract.high.u32 %v3451
        %v3454 = vmul.u32.u64.compose %v3450, %v3445
        %v3455 = vextract.low.u32 %v3454
        %v3456 = vextract.high.u32 %v3454
        %v3457 = vmul.u32 %v3450, %v3441
        %v3458 = vadd.s32 %v3453, %v3455
        %vm3459 = vc.u32 %v3453, %v3455
        %v3460 = vadd.s32 %v3456, 1
        %v3461 = vsel %vm3459, %v3460, %v3456
        %v3462 = vadd.s32 %v3457, %v3461
        %v3463 = vadd.s32 %v3462, 536870912
        %v3464 = vshrl.u32 %v3463, 30
        %v3465 = vshll.u32 %v3464, 30
        %v3466 = vsub.s32 %v3462, %v3465
        %vm3467 = vcmp.lt.s32.totalorder %v3466, 0
        %v3468 = vsub.s32 0, %v3466
        %v3469 = vsel %vm3467, %v3468, %v3466
        %v3470 = vclz %v3469
        %v3471 = vsub.s32 %v3470, 2
        %vm3472 = vcmp.gt.s32.totalorder 0, %v3471
        %v3473 = vsel %vm3472, 0, %v3471
        %v3474 = vsub.s32 32, %v3473
        %v3475 = vshll.u32 %v3466, %v3473
        %v3476 = vshrl.u32 %v3458, %v3474
        %v3477 = vor.u32 %v3475, %v3476
        %v3478 = vsub.s32 4294967266, %v3473
        %v3479 = vadd.s32 %v3478, 127
        %v3480 = vshll.u32 %v3479, 23
        %v3481 = vor.u32 4788187, %v3480
        %v3482 = vand.u32 2147483647, %v3481
        %v3484 = vcvt.s32.f32 %v3477
        %v3485 = vmul.f32 %v3484, %v3482
        %v3486 = vxor.u32 %v3485, 2147483648
        %v3487 = vsel %vm3404, %v3486, %v3485
        %v3488 = vsub.s32 4, %v3464
        %v3489 = vsel %vm3404, %v3488, %v3464
        %v3490 = vsel %vm3403, %v795, %v3487
        %v3491 = vsel %vm3403, 0, %v3489
        %v3492 = vcosq.f32.pop %v3490
        %v3493 = vsinq.f32.pop %v3490
        %vm3494 = vweird.f32 %v795
        %v3495 = vadd.s32 %v3491, 3
        %v3496 = vand.u32 %v3495, 3
        %vm3497 = vcmp.lt.s32.totalorder %v3496, 2
        %vm3498 = vcmp.eq.s32.totalorder %v3496, 0
        %v3499 = vxor.u32 %v3493, 2147483648
        %v3500 = vsel %vm3498, %v3492, %v3499
        %vm3501 = vcmp.eq.s32.totalorder %v3496, 2
        %v3502 = vxor.u32 %v3492, 2147483648
        %v3503 = vsel %vm3501, %v3502, %v3493
        %v3504 = vsel %vm3497, %v3500, %v3503
        %v3505 = vsel %vm3494, nan, %v3504
        %v3506 = vand.u32 2147483647, %v796
        %vm3507 = vcmp.le.f32.partialorder %v3506, 0.7853982
        %vm3508 = vcmp.lt.s32.totalorder %v796, 0
        %v3509 = vand.u32 %v796, 2139095040
        %v3510 = vshrl.u32 %v3509, 23
        %v3511 = vsub.s32 %v3510, 127
        %v3512 = vand.u32 2147483647, %v796
        %v3513 = vand.u32 %v3512, 8388607
        %v3514 = vor.u32 %v3513, 8388608
        %v3515 = vsub.s32 0, %v3514
        %v3516 = vadd.s32 %v3511, 1
        %vm3517 = vcmp.gt.s32.totalorder %v3516, 0
        %v3518 = vsel %vm3517, %v3516, 0
        %v3519 = vshrl.u32 %v3518, 5
        %v3520 = vand.u32 %v3518, 31
        %v3521 = vsub.s32 32, %v3520
        %v3522 = vshrl.u32 683565275, %v3521
        %v3523 = vshll.u32 683565275, %v3520
        %v3524 = vshrl.u32 2475754826, %v3521
        %v3525 = vor.u32 %v3523, %v3524
        %v3526 = vshll.u32 2475754826, %v3520
        %v3527 = vshrl.u32 2131351028, %v3521
        %v3528 = vor.u32 %v3526, %v3527
        %v3529 = vshll.u32 2131351028, %v3520
        %v3530 = vshrl.u32 2102212464, %v3521
        %v3531 = vor.u32 %v3529, %v3530
        %v3532 = vshll.u32 2102212464, %v3520
        %v3533 = vshrl.u32 920167782, %v3521
        %v3534 = vor.u32 %v3532, %v3533
        %v3535 = vshll.u32 920167782, %v3520
        %v3536 = vshrl.u32 1326507024, %v3521
        %v3537 = vor.u32 %v3535, %v3536
        %vm3538 = vcmp.lt.s32.totalorder %v3519, 1
        %vm3539 = vcmp.lt.s32.totalorder %v3519, 2
        %vm3540 = vcmp.lt.s32.totalorder %v3519, 3
        %vm3541 = vcmp.lt.s32.totalorder %v3519, 4
        %v3542 = vsel %vm3538, %v3522, %v3525
        %v3543 = vsel %vm3541, %v3531, 2102212464
        %v3544 = vsel %vm3540, %v3528, %v3543
        %v3545 = vsel %vm3539, %v3542, %v3544
        %v3546 = vsel %vm3538, %v3525, %v3528
        %v3547 = vsel %vm3541, %v3534, 920167782
        %v3548 = vsel %vm3540, %v3531, %v3547
        %v3549 = vsel %vm3539, %v3546, %v3548
        %v3550 = vsel %vm3538, %v3528, %v3531
        %v3551 = vsel %vm3541, %v3537, 1326507024
        %v3552 = vsel %vm3540, %v3534, %v3551
        %v3553 = vsel %vm3539, %v3550, %v3552
        %v3554 = vshll.u32 %v3514, 8
        %v3555 = vmul.u32.u64.compose %v3554, %v3553
        %v3556 = vextract.low.u32 %v3555
        %v3557 = vextract.high.u32 %v3555
        %v3558 = vmul.u32.u64.compose %v3554, %v3549
        %v3559 = vextract.low.u32 %v3558
        %v3560 = vextract.high.u32 %v3558
        %v3561 = vmul.u32 %v3554, %v3545
        %v3562 = vadd.s32 %v3557, %v3559
        %vm3563 = vc.u32 %v3557, %v3559
        %v3564 = vadd.s32 %v3560, 1
        %v3565 = vsel %vm3563, %v3564, %v3560
        %v3566 = vadd.s32 %v3561, %v3565
        %v3567 = vadd.s32 %v3566, 536870912
        %v3568 = vshrl.u32 %v3567, 30
        %v3569 = vshll.u32 %v3568, 30
        %v3570 = vsub.s32 %v3566, %v3569
        %vm3571 = vcmp.lt.s32.totalorder %v3570, 0
        %v3572 = vsub.s32 0, %v3570
        %v3573 = vsel %vm3571, %v3572, %v3570
        %v3574 = vclz %v3573
        %v3575 = vsub.s32 %v3574, 2
        %vm3576 = vcmp.gt.s32.totalorder 0, %v3575
        %v3577 = vsel %vm3576, 0, %v3575
        %v3578 = vsub.s32 32, %v3577
        %v3579 = vshll.u32 %v3570, %v3577
        %v3580 = vshrl.u32 %v3562, %v3578
        %v3581 = vor.u32 %v3579, %v3580
        %v3582 = vsub.s32 4294967266, %v3577
        %v3583 = vadd.s32 %v3582, 127
        %v3584 = vshll.u32 %v3583, 23
        %v3585 = vor.u32 4788187, %v3584
        %v3586 = vand.u32 2147483647, %v3585
        %v3588 = vcvt.s32.f32 %v3581
        %v3589 = vmul.f32 %v3588, %v3586
        %v3590 = vxor.u32 %v3589, 2147483648
        %v3591 = vsel %vm3508, %v3590, %v3589
        %v3592 = vsub.s32 4, %v3568
        %v3593 = vsel %vm3508, %v3592, %v3568
        %v3594 = vsel %vm3507, %v796, %v3591
        %v3595 = vsel %vm3507, 0, %v3593
        %v3596 = vcosq.f32.pop %v3594
        %v3597 = vsinq.f32.pop %v3594
        %vm3598 = vweird.f32 %v796
        %v3599 = vadd.s32 %v3595, 3
        %v3600 = vand.u32 %v3599, 3
        %vm3601 = vcmp.lt.s32.totalorder %v3600, 2
        %vm3602 = vcmp.eq.s32.totalorder %v3600, 0
        %v3603 = vxor.u32 %v3597, 2147483648
        %v3604 = vsel %vm3602, %v3596, %v3603
        %vm3605 = vcmp.eq.s32.totalorder %v3600, 2
        %v3606 = vxor.u32 %v3596, 2147483648
        %v3607 = vsel %vm3605, %v3606, %v3597
        %v3608 = vsel %vm3601, %v3604, %v3607
        %v3609 = vsel %vm3598, nan, %v3608
        %v3610 = vand.u32 2147483647, %v797
        %vm3611 = vcmp.le.f32.partialorder %v3610, 0.7853982
        %vm3612 = vcmp.lt.s32.totalorder %v797, 0
        %v3613 = vand.u32 %v797, 2139095040
        %v3614 = vshrl.u32 %v3613, 23
        %v3615 = vsub.s32 %v3614, 127
        %v3616 = vand.u32 2147483647, %v797
        %v3617 = vand.u32 %v3616, 8388607
        %v3618 = vor.u32 %v3617, 8388608
        %v3619 = vsub.s32 0, %v3618
        %v3620 = vadd.s32 %v3615, 1
        %vm3621 = vcmp.gt.s32.totalorder %v3620, 0
        %v3622 = vsel %vm3621, %v3620, 0
        %v3623 = vshrl.u32 %v3622, 5
        %v3624 = vand.u32 %v3622, 31
        %v3625 = vsub.s32 32, %v3624
        %v3626 = vshrl.u32 683565275, %v3625
        %v3627 = vshll.u32 683565275, %v3624
        %v3628 = vshrl.u32 2475754826, %v3625
        %v3629 = vor.u32 %v3627, %v3628
        %v3630 = vshll.u32 2475754826, %v3624
        %v3631 = vshrl.u32 2131351028, %v3625
        %v3632 = vor.u32 %v3630, %v3631
        %v3633 = vshll.u32 2131351028, %v3624
        %v3634 = vshrl.u32 2102212464, %v3625
        %v3635 = vor.u32 %v3633, %v3634
        %v3636 = vshll.u32 2102212464, %v3624
        %v3637 = vshrl.u32 920167782, %v3625
        %v3638 = vor.u32 %v3636, %v3637
        %v3639 = vshll.u32 920167782, %v3624
        %v3640 = vshrl.u32 1326507024, %v3625
        %v3641 = vor.u32 %v3639, %v3640
        %vm3642 = vcmp.lt.s32.totalorder %v3623, 1
        %vm3643 = vcmp.lt.s32.totalorder %v3623, 2
        %vm3644 = vcmp.lt.s32.totalorder %v3623, 3
        %vm3645 = vcmp.lt.s32.totalorder %v3623, 4
        %v3646 = vsel %vm3642, %v3626, %v3629
        %v3647 = vsel %vm3645, %v3635, 2102212464
        %v3648 = vsel %vm3644, %v3632, %v3647
        %v3649 = vsel %vm3643, %v3646, %v3648
        %v3650 = vsel %vm3642, %v3629, %v3632
        %v3651 = vsel %vm3645, %v3638, 920167782
        %v3652 = vsel %vm3644, %v3635, %v3651
        %v3653 = vsel %vm3643, %v3650, %v3652
        %v3654 = vsel %vm3642, %v3632, %v3635
        %v3655 = vsel %vm3645, %v3641, 1326507024
        %v3656 = vsel %vm3644, %v3638, %v3655
        %v3657 = vsel %vm3643, %v3654, %v3656
        %v3658 = vshll.u32 %v3618, 8
        %v3659 = vmul.u32.u64.compose %v3658, %v3657
        %v3660 = vextract.low.u32 %v3659
        %v3661 = vextract.high.u32 %v3659
        %v3662 = vmul.u32.u64.compose %v3658, %v3653
        %v3663 = vextract.low.u32 %v3662
        %v3664 = vextract.high.u32 %v3662
        %v3665 = vmul.u32 %v3658, %v3649
        %v3666 = vadd.s32 %v3661, %v3663
        %vm3667 = vc.u32 %v3661, %v3663
        %v3668 = vadd.s32 %v3664, 1
        %v3669 = vsel %vm3667, %v3668, %v3664
        %v3670 = vadd.s32 %v3665, %v3669
        %v3671 = vadd.s32 %v3670, 536870912
        %v3672 = vshrl.u32 %v3671, 30
        %v3673 = vshll.u32 %v3672, 30
        %v3674 = vsub.s32 %v3670, %v3673
        %vm3675 = vcmp.lt.s32.totalorder %v3674, 0
        %v3676 = vsub.s32 0, %v3674
        %v3677 = vsel %vm3675, %v3676, %v3674
        %v3678 = vclz %v3677
        %v3679 = vsub.s32 %v3678, 2
        %vm3680 = vcmp.gt.s32.totalorder 0, %v3679
        %v3681 = vsel %vm3680, 0, %v3679
        %v3682 = vsub.s32 32, %v3681
        %v3683 = vshll.u32 %v3674, %v3681
        %v3684 = vshrl.u32 %v3666, %v3682
        %v3685 = vor.u32 %v3683, %v3684
        %v3686 = vsub.s32 4294967266, %v3681
        %v3687 = vadd.s32 %v3686, 127
        %v3688 = vshll.u32 %v3687, 23
        %v3689 = vor.u32 4788187, %v3688
        %v3690 = vand.u32 2147483647, %v3689
        %v3692 = vcvt.s32.f32 %v3685
        %v3693 = vmul.f32 %v3692, %v3690
        %v3694 = vxor.u32 %v3693, 2147483648
        %v3695 = vsel %vm3612, %v3694, %v3693
        %v3696 = vsub.s32 4, %v3672
        %v3697 = vsel %vm3612, %v3696, %v3672
        %v3698 = vsel %vm3611, %v797, %v3695
        %v3699 = vsel %vm3611, 0, %v3697
        %v3700 = vcosq.f32.pop %v3698
        %v3701 = vsinq.f32.pop %v3698
        %vm3702 = vweird.f32 %v797
        %v3703 = vadd.s32 %v3699, 3
        %v3704 = vand.u32 %v3703, 3
        %vm3705 = vcmp.lt.s32.totalorder %v3704, 2
        %vm3706 = vcmp.eq.s32.totalorder %v3704, 0
        %v3707 = vxor.u32 %v3701, 2147483648
        %v3708 = vsel %vm3706, %v3700, %v3707
        %vm3709 = vcmp.eq.s32.totalorder %v3704, 2
        %v3710 = vxor.u32 %v3700, 2147483648
        %v3711 = vsel %vm3709, %v3710, %v3701
        %v3712 = vsel %vm3705, %v3708, %v3711
        %v3713 = vsel %vm3702, nan, %v3712
        %v3714 = vand.u32 2147483647, %v798
        %vm3715 = vcmp.le.f32.partialorder %v3714, 0.7853982
        %vm3716 = vcmp.lt.s32.totalorder %v798, 0
        %v3717 = vand.u32 %v798, 2139095040
        %v3718 = vshrl.u32 %v3717, 23
        %v3719 = vsub.s32 %v3718, 127
        %v3720 = vand.u32 2147483647, %v798
        %v3721 = vand.u32 %v3720, 8388607
        %v3722 = vor.u32 %v3721, 8388608
        %v3723 = vsub.s32 0, %v3722
        %v3724 = vadd.s32 %v3719, 1
        %vm3725 = vcmp.gt.s32.totalorder %v3724, 0
        %v3726 = vsel %vm3725, %v3724, 0
        %v3727 = vshrl.u32 %v3726, 5
        %v3728 = vand.u32 %v3726, 31
        %v3729 = vsub.s32 32, %v3728
        %v3730 = vshrl.u32 683565275, %v3729
        %v3731 = vshll.u32 683565275, %v3728
        %v3732 = vshrl.u32 2475754826, %v3729
        %v3733 = vor.u32 %v3731, %v3732
        %v3734 = vshll.u32 2475754826, %v3728
        %v3735 = vshrl.u32 2131351028, %v3729
        %v3736 = vor.u32 %v3734, %v3735
        %v3737 = vshll.u32 2131351028, %v3728
        %v3738 = vshrl.u32 2102212464, %v3729
        %v3739 = vor.u32 %v3737, %v3738
        %v3740 = vshll.u32 2102212464, %v3728
        %v3741 = vshrl.u32 920167782, %v3729
        %v3742 = vor.u32 %v3740, %v3741
        %v3743 = vshll.u32 920167782, %v3728
        %v3744 = vshrl.u32 1326507024, %v3729
        %v3745 = vor.u32 %v3743, %v3744
        %vm3746 = vcmp.lt.s32.totalorder %v3727, 1
        %vm3747 = vcmp.lt.s32.totalorder %v3727, 2
        %vm3748 = vcmp.lt.s32.totalorder %v3727, 3
        %vm3749 = vcmp.lt.s32.totalorder %v3727, 4
        %v3750 = vsel %vm3746, %v3730, %v3733
        %v3751 = vsel %vm3749, %v3739, 2102212464
        %v3752 = vsel %vm3748, %v3736, %v3751
        %v3753 = vsel %vm3747, %v3750, %v3752
        %v3754 = vsel %vm3746, %v3733, %v3736
        %v3755 = vsel %vm3749, %v3742, 920167782
        %v3756 = vsel %vm3748, %v3739, %v3755
        %v3757 = vsel %vm3747, %v3754, %v3756
        %v3758 = vsel %vm3746, %v3736, %v3739
        %v3759 = vsel %vm3749, %v3745, 1326507024
        %v3760 = vsel %vm3748, %v3742, %v3759
        %v3761 = vsel %vm3747, %v3758, %v3760
        %v3762 = vshll.u32 %v3722, 8
        %v3763 = vmul.u32.u64.compose %v3762, %v3761
        %v3764 = vextract.low.u32 %v3763
        %v3765 = vextract.high.u32 %v3763
        %v3766 = vmul.u32.u64.compose %v3762, %v3757
        %v3767 = vextract.low.u32 %v3766
        %v3768 = vextract.high.u32 %v3766
        %v3769 = vmul.u32 %v3762, %v3753
        %v3770 = vadd.s32 %v3765, %v3767
        %vm3771 = vc.u32 %v3765, %v3767
        %v3772 = vadd.s32 %v3768, 1
        %v3773 = vsel %vm3771, %v3772, %v3768
        %v3774 = vadd.s32 %v3769, %v3773
        %v3775 = vadd.s32 %v3774, 536870912
        %v3776 = vshrl.u32 %v3775, 30
        %v3777 = vshll.u32 %v3776, 30
        %v3778 = vsub.s32 %v3774, %v3777
        %vm3779 = vcmp.lt.s32.totalorder %v3778, 0
        %v3780 = vsub.s32 0, %v3778
        %v3781 = vsel %vm3779, %v3780, %v3778
        %v3782 = vclz %v3781
        %v3783 = vsub.s32 %v3782, 2
        %vm3784 = vcmp.gt.s32.totalorder 0, %v3783
        %v3785 = vsel %vm3784, 0, %v3783
        %v3786 = vsub.s32 32, %v3785
        %v3787 = vshll.u32 %v3778, %v3785
        %v3788 = vshrl.u32 %v3770, %v3786
        %v3789 = vor.u32 %v3787, %v3788
        %v3790 = vsub.s32 4294967266, %v3785
        %v3791 = vadd.s32 %v3790, 127
        %v3792 = vshll.u32 %v3791, 23
        %v3793 = vor.u32 4788187, %v3792
        %v3794 = vand.u32 2147483647, %v3793
        %v3796 = vcvt.s32.f32 %v3789
        %v3797 = vmul.f32 %v3796, %v3794
        %v3798 = vxor.u32 %v3797, 2147483648
        %v3799 = vsel %vm3716, %v3798, %v3797
        %v3800 = vsub.s32 4, %v3776
        %v3801 = vsel %vm3716, %v3800, %v3776
        %v3802 = vsel %vm3715, %v798, %v3799
        %v3803 = vsel %vm3715, 0, %v3801
        %v3804 = vcosq.f32.pop %v3802
        %v3805 = vsinq.f32.pop %v3802
        %vm3806 = vweird.f32 %v798
        %v3807 = vadd.s32 %v3803, 3
        %v3808 = vand.u32 %v3807, 3
        %vm3809 = vcmp.lt.s32.totalorder %v3808, 2
        %vm3810 = vcmp.eq.s32.totalorder %v3808, 0
        %v3811 = vxor.u32 %v3805, 2147483648
        %v3812 = vsel %vm3810, %v3804, %v3811
        %vm3813 = vcmp.eq.s32.totalorder %v3808, 2
        %v3814 = vxor.u32 %v3804, 2147483648
        %v3815 = vsel %vm3813, %v3814, %v3805
        %v3816 = vsel %vm3809, %v3812, %v3815
        %v3817 = vsel %vm3806, nan, %v3816
        %v3818 = vand.u32 2147483647, %v799
        %vm3819 = vcmp.le.f32.partialorder %v3818, 0.7853982
        %vm3820 = vcmp.lt.s32.totalorder %v799, 0
        %v3821 = vand.u32 %v799, 2139095040
        %v3822 = vshrl.u32 %v3821, 23
        %v3823 = vsub.s32 %v3822, 127
        %v3824 = vand.u32 2147483647, %v799
        %v3825 = vand.u32 %v3824, 8388607
        %v3826 = vor.u32 %v3825, 8388608
        %v3827 = vsub.s32 0, %v3826
        %v3828 = vadd.s32 %v3823, 1
        %vm3829 = vcmp.gt.s32.totalorder %v3828, 0
        %v3830 = vsel %vm3829, %v3828, 0
        %v3831 = vshrl.u32 %v3830, 5
        %v3832 = vand.u32 %v3830, 31
        %v3833 = vsub.s32 32, %v3832
        %v3834 = vshrl.u32 683565275, %v3833
        %v3835 = vshll.u32 683565275, %v3832
        %v3836 = vshrl.u32 2475754826, %v3833
        %v3837 = vor.u32 %v3835, %v3836
        %v3838 = vshll.u32 2475754826, %v3832
        %v3839 = vshrl.u32 2131351028, %v3833
        %v3840 = vor.u32 %v3838, %v3839
        %v3841 = vshll.u32 2131351028, %v3832
        %v3842 = vshrl.u32 2102212464, %v3833
        %v3843 = vor.u32 %v3841, %v3842
        %v3844 = vshll.u32 2102212464, %v3832
        %v3845 = vshrl.u32 920167782, %v3833
        %v3846 = vor.u32 %v3844, %v3845
        %v3847 = vshll.u32 920167782, %v3832
        %v3848 = vshrl.u32 1326507024, %v3833
        %v3849 = vor.u32 %v3847, %v3848
        %vm3850 = vcmp.lt.s32.totalorder %v3831, 1
        %vm3851 = vcmp.lt.s32.totalorder %v3831, 2
        %vm3852 = vcmp.lt.s32.totalorder %v3831, 3
        %vm3853 = vcmp.lt.s32.totalorder %v3831, 4
        %v3854 = vsel %vm3850, %v3834, %v3837
        %v3855 = vsel %vm3853, %v3843, 2102212464
        %v3856 = vsel %vm3852, %v3840, %v3855
        %v3857 = vsel %vm3851, %v3854, %v3856
        %v3858 = vsel %vm3850, %v3837, %v3840
        %v3859 = vsel %vm3853, %v3846, 920167782
        %v3860 = vsel %vm3852, %v3843, %v3859
        %v3861 = vsel %vm3851, %v3858, %v3860
        %v3862 = vsel %vm3850, %v3840, %v3843
        %v3863 = vsel %vm3853, %v3849, 1326507024
        %v3864 = vsel %vm3852, %v3846, %v3863
        %v3865 = vsel %vm3851, %v3862, %v3864
        %v3866 = vshll.u32 %v3826, 8
        %v3867 = vmul.u32.u64.compose %v3866, %v3865
        %v3868 = vextract.low.u32 %v3867
        %v3869 = vextract.high.u32 %v3867
        %v3870 = vmul.u32.u64.compose %v3866, %v3861
        %v3871 = vextract.low.u32 %v3870
        %v3872 = vextract.high.u32 %v3870
        %v3873 = vmul.u32 %v3866, %v3857
        %v3874 = vadd.s32 %v3869, %v3871
        %vm3875 = vc.u32 %v3869, %v3871
        %v3876 = vadd.s32 %v3872, 1
        %v3877 = vsel %vm3875, %v3876, %v3872
        %v3878 = vadd.s32 %v3873, %v3877
        %v3879 = vadd.s32 %v3878, 536870912
        %v3880 = vshrl.u32 %v3879, 30
        %v3881 = vshll.u32 %v3880, 30
        %v3882 = vsub.s32 %v3878, %v3881
        %vm3883 = vcmp.lt.s32.totalorder %v3882, 0
        %v3884 = vsub.s32 0, %v3882
        %v3885 = vsel %vm3883, %v3884, %v3882
        %v3886 = vclz %v3885
        %v3887 = vsub.s32 %v3886, 2
        %vm3888 = vcmp.gt.s32.totalorder 0, %v3887
        %v3889 = vsel %vm3888, 0, %v3887
        %v3890 = vsub.s32 32, %v3889
        %v3891 = vshll.u32 %v3882, %v3889
        %v3892 = vshrl.u32 %v3874, %v3890
        %v3893 = vor.u32 %v3891, %v3892
        %v3894 = vsub.s32 4294967266, %v3889
        %v3895 = vadd.s32 %v3894, 127
        %v3896 = vshll.u32 %v3895, 23
        %v3897 = vor.u32 4788187, %v3896
        %v3898 = vand.u32 2147483647, %v3897
        %v3900 = vcvt.s32.f32 %v3893
        %v3901 = vmul.f32 %v3900, %v3898
        %v3902 = vxor.u32 %v3901, 2147483648
        %v3903 = vsel %vm3820, %v3902, %v3901
        %v3904 = vsub.s32 4, %v3880
        %v3905 = vsel %vm3820, %v3904, %v3880
        %v3906 = vsel %vm3819, %v799, %v3903
        %v3907 = vsel %vm3819, 0, %v3905
        %v3908 = vcosq.f32.pop %v3906
        %v3909 = vsinq.f32.pop %v3906
        %vm3910 = vweird.f32 %v799
        %v3911 = vadd.s32 %v3907, 3
        %v3912 = vand.u32 %v3911, 3
        %vm3913 = vcmp.lt.s32.totalorder %v3912, 2
        %vm3914 = vcmp.eq.s32.totalorder %v3912, 0
        %v3915 = vxor.u32 %v3909, 2147483648
        %v3916 = vsel %vm3914, %v3908, %v3915
        %vm3917 = vcmp.eq.s32.totalorder %v3912, 2
        %v3918 = vxor.u32 %v3908, 2147483648
        %v3919 = vsel %vm3917, %v3918, %v3909
        %v3920 = vsel %vm3913, %v3916, %v3919
        %v3921 = vsel %vm3910, nan, %v3920
        %v3922 = vand.u32 2147483647, %v800
        %vm3923 = vcmp.le.f32.partialorder %v3922, 0.7853982
        %vm3924 = vcmp.lt.s32.totalorder %v800, 0
        %v3925 = vand.u32 %v800, 2139095040
        %v3926 = vshrl.u32 %v3925, 23
        %v3927 = vsub.s32 %v3926, 127
        %v3928 = vand.u32 2147483647, %v800
        %v3929 = vand.u32 %v3928, 8388607
        %v3930 = vor.u32 %v3929, 8388608
        %v3931 = vsub.s32 0, %v3930
        %v3932 = vadd.s32 %v3927, 1
        %vm3933 = vcmp.gt.s32.totalorder %v3932, 0
        %v3934 = vsel %vm3933, %v3932, 0
        %v3935 = vshrl.u32 %v3934, 5
        %v3936 = vand.u32 %v3934, 31
        %v3937 = vsub.s32 32, %v3936
        %v3938 = vshrl.u32 683565275, %v3937
        %v3939 = vshll.u32 683565275, %v3936
        %v3940 = vshrl.u32 2475754826, %v3937
        %v3941 = vor.u32 %v3939, %v3940
        %v3942 = vshll.u32 2475754826, %v3936
        %v3943 = vshrl.u32 2131351028, %v3937
        %v3944 = vor.u32 %v3942, %v3943
        %v3945 = vshll.u32 2131351028, %v3936
        %v3946 = vshrl.u32 2102212464, %v3937
        %v3947 = vor.u32 %v3945, %v3946
        %v3948 = vshll.u32 2102212464, %v3936
        %v3949 = vshrl.u32 920167782, %v3937
        %v3950 = vor.u32 %v3948, %v3949
        %v3951 = vshll.u32 920167782, %v3936
        %v3952 = vshrl.u32 1326507024, %v3937
        %v3953 = vor.u32 %v3951, %v3952
        %vm3954 = vcmp.lt.s32.totalorder %v3935, 1
        %vm3955 = vcmp.lt.s32.totalorder %v3935, 2
        %vm3956 = vcmp.lt.s32.totalorder %v3935, 3
        %vm3957 = vcmp.lt.s32.totalorder %v3935, 4
        %v3958 = vsel %vm3954, %v3938, %v3941
        %v3959 = vsel %vm3957, %v3947, 2102212464
        %v3960 = vsel %vm3956, %v3944, %v3959
        %v3961 = vsel %vm3955, %v3958, %v3960
        %v3962 = vsel %vm3954, %v3941, %v3944
        %v3963 = vsel %vm3957, %v3950, 920167782
        %v3964 = vsel %vm3956, %v3947, %v3963
        %v3965 = vsel %vm3955, %v3962, %v3964
        %v3966 = vsel %vm3954, %v3944, %v3947
        %v3967 = vsel %vm3957, %v3953, 1326507024
        %v3968 = vsel %vm3956, %v3950, %v3967
        %v3969 = vsel %vm3955, %v3966, %v3968
        %v3970 = vshll.u32 %v3930, 8
        %v3971 = vmul.u32.u64.compose %v3970, %v3969
        %v3972 = vextract.low.u32 %v3971
        %v3973 = vextract.high.u32 %v3971
        %v3974 = vmul.u32.u64.compose %v3970, %v3965
        %v3975 = vextract.low.u32 %v3974
        %v3976 = vextract.high.u32 %v3974
        %v3977 = vmul.u32 %v3970, %v3961
        %v3978 = vadd.s32 %v3973, %v3975
        %vm3979 = vc.u32 %v3973, %v3975
        %v3980 = vadd.s32 %v3976, 1
        %v3981 = vsel %vm3979, %v3980, %v3976
        %v3982 = vadd.s32 %v3977, %v3981
        %v3983 = vadd.s32 %v3982, 536870912
        %v3984 = vshrl.u32 %v3983, 30
        %v3985 = vshll.u32 %v3984, 30
        %v3986 = vsub.s32 %v3982, %v3985
        %vm3987 = vcmp.lt.s32.totalorder %v3986, 0
        %v3988 = vsub.s32 0, %v3986
        %v3989 = vsel %vm3987, %v3988, %v3986
        %v3990 = vclz %v3989
        %v3991 = vsub.s32 %v3990, 2
        %vm3992 = vcmp.gt.s32.totalorder 0, %v3991
        %v3993 = vsel %vm3992, 0, %v3991
        %v3994 = vsub.s32 32, %v3993
        %v3995 = vshll.u32 %v3986, %v3993
        %v3996 = vshrl.u32 %v3978, %v3994
        %v3997 = vor.u32 %v3995, %v3996
        %v3998 = vsub.s32 4294967266, %v3993
        %v3999 = vadd.s32 %v3998, 127
        %v4000 = vshll.u32 %v3999, 23
        %v4001 = vor.u32 4788187, %v4000
        %v4002 = vand.u32 2147483647, %v4001
        %v4004 = vcvt.s32.f32 %v3997
        %v4005 = vmul.f32 %v4004, %v4002
        %v4006 = vxor.u32 %v4005, 2147483648
        %v4007 = vsel %vm3924, %v4006, %v4005
        %v4008 = vsub.s32 4, %v3984
        %v4009 = vsel %vm3924, %v4008, %v3984
        %v4010 = vsel %vm3923, %v800, %v4007
        %v4011 = vsel %vm3923, 0, %v4009
        %v4012 = vcosq.f32.pop %v4010
        %v4013 = vsinq.f32.pop %v4010
        %vm4014 = vweird.f32 %v800
        %v4015 = vadd.s32 %v4011, 3
        %v4016 = vand.u32 %v4015, 3
        %vm4017 = vcmp.lt.s32.totalorder %v4016, 2
        %vm4018 = vcmp.eq.s32.totalorder %v4016, 0
        %v4019 = vxor.u32 %v4013, 2147483648
        %v4020 = vsel %vm4018, %v4012, %v4019
        %vm4021 = vcmp.eq.s32.totalorder %v4016, 2
        %v4022 = vxor.u32 %v4012, 2147483648
        %v4023 = vsel %vm4021, %v4022, %v4013
        %v4024 = vsel %vm4017, %v4020, %v4023
        %v4025 = vsel %vm4014, nan, %v4024
        %v4026 = vand.u32 2147483647, %v801
        %vm4027 = vcmp.le.f32.partialorder %v4026, 0.7853982
        %vm4028 = vcmp.lt.s32.totalorder %v801, 0
        %v4029 = vand.u32 %v801, 2139095040
        %v4030 = vshrl.u32 %v4029, 23
        %v4031 = vsub.s32 %v4030, 127
        %v4032 = vand.u32 2147483647, %v801
        %v4033 = vand.u32 %v4032, 8388607
        %v4034 = vor.u32 %v4033, 8388608
        %v4035 = vsub.s32 0, %v4034
        %v4036 = vadd.s32 %v4031, 1
        %vm4037 = vcmp.gt.s32.totalorder %v4036, 0
        %v4038 = vsel %vm4037, %v4036, 0
        %v4039 = vshrl.u32 %v4038, 5
        %v4040 = vand.u32 %v4038, 31
        %v4041 = vsub.s32 32, %v4040
        %v4042 = vshrl.u32 683565275, %v4041
        %v4043 = vshll.u32 683565275, %v4040
        %v4044 = vshrl.u32 2475754826, %v4041
        %v4045 = vor.u32 %v4043, %v4044
        %v4046 = vshll.u32 2475754826, %v4040
        %v4047 = vshrl.u32 2131351028, %v4041
        %v4048 = vor.u32 %v4046, %v4047
        %v4049 = vshll.u32 2131351028, %v4040
        %v4050 = vshrl.u32 2102212464, %v4041
        %v4051 = vor.u32 %v4049, %v4050
        %v4052 = vshll.u32 2102212464, %v4040
        %v4053 = vshrl.u32 920167782, %v4041
        %v4054 = vor.u32 %v4052, %v4053
        %v4055 = vshll.u32 920167782, %v4040
        %v4056 = vshrl.u32 1326507024, %v4041
        %v4057 = vor.u32 %v4055, %v4056
        %vm4058 = vcmp.lt.s32.totalorder %v4039, 1
        %vm4059 = vcmp.lt.s32.totalorder %v4039, 2
        %vm4060 = vcmp.lt.s32.totalorder %v4039, 3
        %vm4061 = vcmp.lt.s32.totalorder %v4039, 4
        %v4062 = vsel %vm4058, %v4042, %v4045
        %v4063 = vsel %vm4061, %v4051, 2102212464
        %v4064 = vsel %vm4060, %v4048, %v4063
        %v4065 = vsel %vm4059, %v4062, %v4064
        %v4066 = vsel %vm4058, %v4045, %v4048
        %v4067 = vsel %vm4061, %v4054, 920167782
        %v4068 = vsel %vm4060, %v4051, %v4067
        %v4069 = vsel %vm4059, %v4066, %v4068
        %v4070 = vsel %vm4058, %v4048, %v4051
        %v4071 = vsel %vm4061, %v4057, 1326507024
        %v4072 = vsel %vm4060, %v4054, %v4071
        %v4073 = vsel %vm4059, %v4070, %v4072
        %v4074 = vshll.u32 %v4034, 8
        %v4075 = vmul.u32.u64.compose %v4074, %v4073
        %v4076 = vextract.low.u32 %v4075
        %v4077 = vextract.high.u32 %v4075
        %v4078 = vmul.u32.u64.compose %v4074, %v4069
        %v4079 = vextract.low.u32 %v4078
        %v4080 = vextract.high.u32 %v4078
        %v4081 = vmul.u32 %v4074, %v4065
        %v4082 = vadd.s32 %v4077, %v4079
        %vm4083 = vc.u32 %v4077, %v4079
        %v4084 = vadd.s32 %v4080, 1
        %v4085 = vsel %vm4083, %v4084, %v4080
        %v4086 = vadd.s32 %v4081, %v4085
        %v4087 = vadd.s32 %v4086, 536870912
        %v4088 = vshrl.u32 %v4087, 30
        %v4089 = vshll.u32 %v4088, 30
        %v4090 = vsub.s32 %v4086, %v4089
        %vm4091 = vcmp.lt.s32.totalorder %v4090, 0
        %v4092 = vsub.s32 0, %v4090
        %v4093 = vsel %vm4091, %v4092, %v4090
        %v4094 = vclz %v4093
        %v4095 = vsub.s32 %v4094, 2
        %vm4096 = vcmp.gt.s32.totalorder 0, %v4095
        %v4097 = vsel %vm4096, 0, %v4095
        %v4098 = vsub.s32 32, %v4097
        %v4099 = vshll.u32 %v4090, %v4097
        %v4100 = vshrl.u32 %v4082, %v4098
        %v4101 = vor.u32 %v4099, %v4100
        %v4102 = vsub.s32 4294967266, %v4097
        %v4103 = vadd.s32 %v4102, 127
        %v4104 = vshll.u32 %v4103, 23
        %v4105 = vor.u32 4788187, %v4104
        %v4106 = vand.u32 2147483647, %v4105
        %v4108 = vcvt.s32.f32 %v4101
        %v4109 = vmul.f32 %v4108, %v4106
        %v4110 = vxor.u32 %v4109, 2147483648
        %v4111 = vsel %vm4028, %v4110, %v4109
        %v4112 = vsub.s32 4, %v4088
        %v4113 = vsel %vm4028, %v4112, %v4088
        %v4114 = vsel %vm4027, %v801, %v4111
        %v4115 = vsel %vm4027, 0, %v4113
        %v4116 = vcosq.f32.pop %v4114
        %v4117 = vsinq.f32.pop %v4114
        %vm4118 = vweird.f32 %v801
        %v4119 = vadd.s32 %v4115, 3
        %v4120 = vand.u32 %v4119, 3
        %vm4121 = vcmp.lt.s32.totalorder %v4120, 2
        %vm4122 = vcmp.eq.s32.totalorder %v4120, 0
        %v4123 = vxor.u32 %v4117, 2147483648
        %v4124 = vsel %vm4122, %v4116, %v4123
        %vm4125 = vcmp.eq.s32.totalorder %v4120, 2
        %v4126 = vxor.u32 %v4116, 2147483648
        %v4127 = vsel %vm4125, %v4126, %v4117
        %v4128 = vsel %vm4121, %v4124, %v4127
        %v4129 = vsel %vm4118, nan, %v4128
        %4130 = vst [vmem:[%s137] sm:$0xff] %v905
        %4131 = vst [vmem:[%s137 + $0x8] sm:$0xff] %v1009
        %4132 = vst [vmem:[%s137 + $0x10] sm:$0xff] %v1113
        %4133 = vst [vmem:[%s137 + $0x18] sm:$0xff] %v1217
        %4134 = vst [vmem:[%s137 + $0x20] sm:$0xff] %v1321
        %4135 = vst [vmem:[%s137 + $0x28] sm:$0xff] %v1425
        %4136 = vst [vmem:[%s137 + $0x30] sm:$0xff] %v1529
        %4137 = vst [vmem:[%s137 + $0x38] sm:$0xff] %v1633
        %4138 = vst [vmem:[%s137 + $0x40] sm:$0xff] %v1737
        %4139 = vst [vmem:[%s137 + $0x48] sm:$0xff] %v1841
        %4140 = vst [vmem:[%s137 + $0x50] sm:$0xff] %v1945
        %4141 = vst [vmem:[%s137 + $0x58] sm:$0xff] %v2049
        %4142 = vst [vmem:[%s137 + $0x60] sm:$0xff] %v2153
        %4143 = vst [vmem:[%s137 + $0x68] sm:$0xff] %v2257
        %4144 = vst [vmem:[%s137 + $0x70] sm:$0xff] %v2361
        %4145 = vst [vmem:[%s137 + $0x78] sm:$0xff] %v2465
        %4146 = vst [vmem:[%s137 + $0x80] sm:$0xff] %v2569
        %4147 = vst [vmem:[%s137 + $0x88] sm:$0xff] %v2673
        %4148 = vst [vmem:[%s137 + $0x90] sm:$0xff] %v2777
        %4149 = vst [vmem:[%s137 + $0x98] sm:$0xff] %v2881
        %4150 = vst [vmem:[%s137 + $0xa0] sm:$0xff] %v2985
        %4151 = vst [vmem:[%s137 + $0xa8] sm:$0xff] %v3089
        %4152 = vst [vmem:[%s137 + $0xb0] sm:$0xff] %v3193
        %4153 = vst [vmem:[%s137 + $0xb8] sm:$0xff] %v3297
        %4154 = vst [vmem:[%s137 + $0xc0] sm:$0xff] %v3401
        %4155 = vst [vmem:[%s137 + $0xc8] sm:$0xff] %v3505
        %4156 = vst [vmem:[%s137 + $0xd0] sm:$0xff] %v3609
        %4157 = vst [vmem:[%s137 + $0xd8] sm:$0xff] %v3713
        %4158 = vst [vmem:[%s137 + $0xe0] sm:$0xff] %v3817
        %4159 = vst [vmem:[%s137 + $0xe8] sm:$0xff] %v3921
        %4160 = vst [vmem:[%s137 + $0xf0] sm:$0xff] %v4025
        %4161 = vst [vmem:[%s137 + $0xf8] sm:$0xff] %v4129
        %s4162 = sand.u32 %s71, 1
        %s4163 = scalar_lea.sflag [#allocation3], %s4162
        %s4164 = sand.u32 %s71, 1
        %s4165 = smul.addr %s4164, 256
        %s4166 = scalar_lea.vmem [#allocation2], %s4165
        // Predicated region
        $region29: #{tpu_custom_call.1} parent=27 // pred_check
          %p4167 = pneg %p81
        $region30: #{tpu_custom_call.1} parent=27 // pred_check_branch
          %4169 = sbr.rel (%p4167) target = $region32
        $region31: #{tpu_custom_call.1} parent=27 // pred_region
          %s4170 = smul.u32 32, %s16
          %s4172 = ssub.s32 4096, 4096
          %4173 = vsyncadd %s4163, %s4172
          %s4174 = smul.addr %s4170, 128
          %s4175 = scalar_lea.hbm %s2, %s4174
          %s4176 = sshll.u32 %s4166, 4
          %s4177 = int_to_ptr.vmem [resolvable:$true] %s4176
          %4182 = dma.vmem_to_hbm [thread:$0]  %s4177, 4096, %s4175, %s4163, 128, 128, 8
        $region32: #{tpu_custom_call.1} parent=27 // pred_fallthru
          _
      $region28: #{tpu_custom_call.1} parent=5 // pred_fallthru
        _
      %p4183 = scmp.le.s32.totalorder 2, %s11
      // Predicated region
      $region33: #{tpu_custom_call.1} parent=5 // pred_check
        %p4184 = pneg %p4183
      $region34: #{tpu_custom_call.1} parent=5 // pred_check_branch
        %4186 = sbr.rel (%p4184) target = $region36
      $region35: #{tpu_custom_call.1} parent=5 // pred_region
        %s4187 = ssub.s32 %s11, 2
        // Predicated region
        $region37: #{tpu_custom_call.1} parent=35 // pred_check
          %p4188 = pneg %p87
        $region38: #{tpu_custom_call.1} parent=35 // pred_check_branch
          %4190 = sbr.rel (%p4188) target = $region40
        $region39: #{tpu_custom_call.1} parent=35 // pred_region
          %s4191 = sand.u32 %s72, 1
          %s4192 = scalar_lea.sflag [#allocation3], %s4191
          %s4193 = sand.u32 %s72, 1
          %s4194 = smul.addr %s4193, 256
          %s4195 = scalar_lea.vmem [#allocation2], %s4194
          %4196 = dma.done %s4192, 4096
        $region40: #{tpu_custom_call.1} parent=35 // pred_fallthru
          _
      $region36: #{tpu_custom_call.1} parent=5 // pred_fallthru
        _
    $region6: #{tpu_custom_call.1} parent=1 // loop_footer
      %s15 = sadd.s32 1, %s11
    $region7: #{tpu_custom_call.1} parent=1 // loop_footer_branch
      %10 = sbr.rel target = $region3
    $region8: #{tpu_custom_call.1} parent=1 // loop_exit
      _
    %4197 = vsyncpa [#allocation3], 1
    %s4198 = scalar_lea.sflag [#allocation3], 1
    %4199 = vsyncpa %s4198, 1

</llo_original>
